<compile_context>
chip_gen: v7x
topology: tpu7x:2x2x1
jax: 0.10.0
libtpu: 0.0.40
codegen_flags: <defaults>
</compile_context>

<pallas_src>
import numpy as np
import jax
import jax.numpy as jnp
from jax.experimental import pallas as pl
from jax.experimental.pallas import tpu as pltpu

MESH = 778          # mesh_num
KP = 16             # keypoints_num
BASES = 10          # bases_num (shape PCA)
POSE_NUM = 6        # pose PCA coefficients
PW_DIM = (KP - 1) * 9    # 135 pose-blend features
FLAT = MESH * 3          # 2334
PARENTS = [-1, 0, 1, 2, 0, 4, 5, 0, 7, 8, 0, 10, 11, 0, 13, 14]  # MANO kintree parents


# ----------------------------------------------------------------------------- Rodrigues (glue)
def rodrigues(r):
    """r: (N, 3) axis-angle -> (N, 3, 3) rotation matrices (matches torch version)."""
    theta = jnp.sqrt(jnp.sum(r * r, axis=1))                      # (N,)

    def S(n):
        z = jnp.zeros_like(n[:, 0])
        return jnp.stack(
            [z, -n[:, 2], n[:, 1],
             n[:, 2], z, -n[:, 0],
             -n[:, 1], n[:, 0], z], axis=1).reshape(-1, 3, 3)

    theta_safe = jnp.where(theta < 1e-30, 1.0, theta)
    n = r / theta_safe[:, None]
    Sn = S(n)
    I3 = jnp.eye(3, dtype=r.dtype)[None]
    R = (I3
         + jnp.sin(theta)[:, None, None] * Sn
         + (1.0 - jnp.cos(theta))[:, None, None] * jnp.matmul(Sn, Sn))
    Sr = S(r)
    theta2 = theta * theta
    R2 = (I3
          + (1.0 - theta2[:, None, None] / 6.0) * Sr
          + (0.5 - theta2[:, None, None] / 24.0) * jnp.matmul(Sr, Sr))
    return jnp.where((theta < 1e-30)[:, None, None], R2, R)


# ----------------------------------------------------------------------------- Pallas kernels
def blend_kernel(betas_ref, pw_ref, sd_ref, mu_ref, pd_ref, jrt_ref, vp_ref, jp_ref):
    # coordinate-major blend:  everything has N = 778 lanes.
    betas = betas_ref[...]                 # (B, 10)
    pw = pw_ref[...]                       # (B, 135)
    mu = mu_ref[...]                       # (3, 778)
    jrt = jrt_ref[...]                     # (778, 16)   J_regressor^T
    vp_rows, jp_rows = [], []
    for c in range(3):                     # static 3-iteration loop over x/y/z
        # v_shaped_c = betas @ SD_c + mu_c            (B, 778)
        vs_c = jnp.dot(betas, sd_ref[c], preferred_element_type=jnp.float32) + mu[c:c + 1, :]
        # v_posed_c  = v_shaped_c + pose_feat @ PD_c  (B, 778)
        vp_c = vs_c + jnp.dot(pw, pd_ref[c], preferred_element_type=jnp.float32)
        vp_rows.append(vp_c)
        # J_posed_c  = v_shaped_c @ J_reg^T           (B, 16)
        jp_rows.append(jnp.dot(vs_c, jrt, preferred_element_type=jnp.float32))
    vp_ref[...] = jnp.stack(vp_rows, axis=1)   # (B, 3, 778)  lane-dense output
    jp_ref[...] = jnp.stack(jp_rows, axis=1)   # (B, 3, 16)   tiny


def skin_kernel(at_ref, wt_ref, rest_ref, vun_ref):
    # transposed LBS: MESH on lanes.
    A_T = at_ref[0]                        # (16, 16)   per-joint relative transforms, transposed flat
    W_T = wt_ref[...]                      # (16, 778)  skinning weights, transposed
    rest = rest_ref[0]                     # (4, 778)   homogeneous rest-shape coords [x;y;z;1]
    Tv = jnp.dot(A_T, W_T, preferred_element_type=jnp.float32)   # (16, 778)
    rows = [jnp.sum(Tv[4 * i:4 * i + 4, :] * rest, axis=0, keepdims=True) for i in range(3)]
    vun_ref[0] = jnp.concatenate(rows, axis=0)                    # (3, 778) un-rotated skinned verts


def blend_pallas(betas, pw, SD, mu, PD, JRT):
    B = betas.shape[0]
    flops = 2 * B * FLAT * (BASES + PW_DIM) + 2 * B * 3 * MESH * KP
    bytes_accessed = 4 * (int(betas.size) + int(pw.size) + int(SD.size) + int(mu.size)
                          + int(PD.size) + int(JRT.size) + B * 3 * MESH + B * 3 * KP)
    return pl.pallas_call(
        blend_kernel,
        out_shape=(jax.ShapeDtypeStruct((B, 3, MESH), jnp.float32),
                   jax.ShapeDtypeStruct((B, 3, KP), jnp.float32)),
        grid=(1,),
        in_specs=[
            pl.BlockSpec(betas.shape, lambda i: (0, 0)),
            pl.BlockSpec(pw.shape, lambda i: (0, 0)),
            pl.BlockSpec(SD.shape, lambda i: (0, 0, 0)),
            pl.BlockSpec(mu.shape, lambda i: (0, 0)),
            pl.BlockSpec(PD.shape, lambda i: (0, 0, 0)),
            pl.BlockSpec(JRT.shape, lambda i: (0, 0)),
        ],
        out_specs=(pl.BlockSpec((B, 3, MESH), lambda i: (0, 0, 0)),
                   pl.BlockSpec((B, 3, KP), lambda i: (0, 0, 0))),
        compiler_params=pltpu.CompilerParams(dimension_semantics=("arbitrary",)),
        cost_estimate=pl.CostEstimate(flops=flops, transcendentals=0,
                                      bytes_accessed=bytes_accessed),
    )(betas, pw, SD, mu, PD, JRT)


def skin_pallas(A_T, W_T, rest_hT):
    B = A_T.shape[0]
    return pl.pallas_call(
        skin_kernel,
        out_shape=jax.ShapeDtypeStruct((B, 3, MESH), jnp.float32),
        grid=(B,),
        in_specs=[
            pl.BlockSpec((1, KP, KP), lambda b: (b, 0, 0)),
            pl.BlockSpec((KP, MESH), lambda b: (0, 0)),
            pl.BlockSpec((1, 4, MESH), lambda b: (b, 0, 0)),
        ],
        out_specs=pl.BlockSpec((1, 3, MESH), lambda b: (b, 0, 0)),
        compiler_params=pltpu.CompilerParams(dimension_semantics=("parallel",)),
    )(A_T, W_T, rest_hT)


# ----------------------------------------------------------------------------- full forward
def mano_forward(P, root_angles, other_angles, betas, use_pallas=True):
    f32 = jnp.float32
    B = root_angles.shape[0]

    # full pose: root rotation [pi,0,0] + PCA pose
    pose45 = P['hands_mean'][None, :] + other_angles @ P['hands_components']      # (B, 45)
    poses = pose45.reshape(B, KP - 1, 3)
    root = jnp.tile(jnp.array([[np.pi, 0.0, 0.0]], f32), (B, 1)).reshape(B, 1, 3)
    poses = jnp.concatenate([root, poses], axis=1)                                # (B, 16, 3)

    # pose blend features (Rodrigues(joint) - I), flattened as in torch
    R15 = rodrigues(poses[:, 1:, :].reshape(-1, 3))
    pw = (R15 - jnp.eye(3, dtype=f32)[None]).reshape(B, PW_DIM)                   # (B, 135)

    # coordinate-major weight matrices (in a real module these transposes are init-time constants)
    SD = jnp.transpose(P['shapedirs'], (1, 2, 0))                                 # (3, 10, 778)
    PD = jnp.transpose(P['posedirs'], (1, 2, 0))                                  # (3, 135, 778)
    mu = P['v_template'].T                                                        # (3, 778)
    JRT = P['J_regressor'].T                                                      # (778, 16)
    W_T = P['weights'].T                                                          # (16, 778)

    if use_pallas:
        vpT, jpT = blend_pallas(betas, pw, SD, mu, PD, JRT)                       # (B,3,778),(B,3,16)
        J_posed = jnp.transpose(jpT, (0, 2, 1))                                   # (B, 16, 3)
    else:
        vs = jnp.einsum('bk,ckm->bcm', betas, SD) + mu[None]                      # (B, 3, 778)
        vpT = vs + jnp.einsum('bp,cpm->bcm', pw, PD)
        J_posed = jnp.einsum('bcm,mj->bjc', vs, JRT)                              # (B, 16, 3)

    # ------- kinematic chain (tiny sequential 4x4 algebra, kept in plain JAX) -------
    Rall = rodrigues(poses.reshape(-1, 3)).reshape(B, KP, 3, 3)
    bottom = jnp.tile(jnp.array([[[0.0, 0.0, 0.0, 1.0]]], f32), (B, 1, 1))

    def with_zeros(x34):
        return jnp.concatenate([x34, bottom], axis=1)

    results = [None] * KP
    results[0] = with_zeros(jnp.concatenate([Rall[:, 0], J_posed[:, 0][:, :, None]], axis=2))
    for i in range(1, KP):
        t = with_zeros(jnp.concatenate(
            [Rall[:, i], (J_posed[:, i] - J_posed[:, PARENTS[i]])[:, :, None]], axis=2))
        results[i] = jnp.matmul(results[PARENTS[i]], t)
    results_global = results

    zeros43 = jnp.zeros((B, 4, 3), f32)
    rel = []
    for i in range(KP):
        vec = jnp.concatenate([J_posed[:, i], jnp.zeros((B, 1), f32)], axis=1)[:, :, None]
        packed = jnp.concatenate([zeros43, jnp.matmul(results[i], vec)], axis=2)
        rel.append(results[i] - packed)
    A_flat = jnp.stack(rel, axis=1).reshape(B, KP, 16)                            # (B, 16, 16)
    A_T = jnp.transpose(A_flat, (0, 2, 1))                                        # A_T[b] = A_flat[b].T

    # homogeneous rest shape, coordinate-major (no (B,778,16) tiled tensor)
    rest_hT = jnp.concatenate([vpT, jnp.ones((B, 1, MESH), f32)], axis=1)         # (B, 4, 778)

    if use_pallas:
        v_unrotT = skin_pallas(A_T, W_T, rest_hT)                                 # (B, 3, 778)
    else:
        TvT = jnp.einsum('bkj,jm->bkm', A_T, W_T)                                 # (B, 16, 778)
        v_unrotT = (TvT.reshape(B, 4, 4, MESH)[:, :3] * rest_hT[:, None]).sum(axis=2)

    # global rotation (tiny 3x3, applied in XLA; also used to rotate the joints)
    Rots = rodrigues(root_angles)                                                 # (B, 3, 3)
    vertices = jnp.transpose(jnp.einsum('bij,bjm->bim', Rots, v_unrotT), (0, 2, 1))  # (B, 778, 3)

    # ------- 21-joint assembly (matches the torch insert order) -------
    jtr = [results_global[i][:, :3, 3] for i in range(KP)]                        # (B, 3) each
    for pos, vid in zip([4, 8, 12, 16, 20], [333, 444, 672, 555, 745]):
        jtr.insert(pos, v_unrotT[:, :, vid])
    Jtr = jnp.stack(jtr, axis=1)                                                  # (B, 21, 3)
    joint = jnp.einsum('bij,bnj->bni', Rots, Jtr)                                 # (B, 21, 3)

    return vertices, joint


# ----------------------------------------------------------------------------- main
if __name__ == "__main__":
    B = 2
    f32 = jnp.float32
    key = jax.random.PRNGKey(0)
    ks = jax.random.split(key, 12)

    # deterministic synthetic MANO parameters (shapes taken from the module's __init__)
    P = {
        'v_template': (jax.random.normal(ks[0], (MESH, 3)) * 0.01).astype(f32),
        'shapedirs': (jax.random.normal(ks[1], (MESH, 3, BASES)) * 0.01).astype(f32),
        'posedirs': (jax.random.normal(ks[2], (MESH, 3, PW_DIM)) * 0.001).astype(f32),
        'J_regressor': jax.nn.softmax(jax.random.normal(ks[3], (KP, MESH)), axis=1).astype(f32),
        'weights': jax.nn.softmax(jax.random.normal(ks[4], (MESH, KP)), axis=1).astype(f32),
        'hands_components': jax.random.normal(ks[5], (POSE_NUM, (KP - 1) * 3)).astype(f32),
        'hands_mean': (jax.random.normal(ks[6], ((KP - 1) * 3,)) * 0.1).astype(f32),
    }

    root_angles = (jax.random.normal(ks[7], (B, 3)) * 0.5).astype(f32)
    other_angles = (jax.random.normal(ks[8], (B, POSE_NUM)) * 0.5).astype(f32)
    betas = jax.random.normal(ks[9], (B, BASES)).astype(f32)

    mano_jit = jax.jit(lambda ra, oa, be: mano_forward(P, ra, oa, be, use_pallas=True))
    vertices, joint = mano_jit(root_angles, other_angles, betas)
    vertices = jax.block_until_ready(vertices)
    joint = jax.block_until_ready(joint)

    # pure-JAX reference (same math, no Pallas) for a sanity check
    v_ref, j_ref = mano_forward(P, root_angles, other_angles, betas, use_pallas=False)
    v_ref = jax.block_until_ready(v_ref)
    j_ref = jax.block_until_ready(j_ref)

    assert vertices.shape == (B, MESH, 3)
    assert joint.shape == (B, 21, 3)
    assert np.all(np.isfinite(np.asarray(vertices)))
    assert np.all(np.isfinite(np.asarray(joint)))
    assert np.allclose(np.asarray(vertices), np.asarray(v_ref), rtol=5e-2, atol=5e-3)
    assert np.allclose(np.asarray(joint), np.asarray(j_ref), rtol=5e-2, atol=5e-3)

    print("KERNEL_OK")
</pallas_src>

<mosaic_0001>
module attributes {stable_mosaic.version = 11 : i64} {
  func.func @blend_kernel(%arg0: i32, %arg1: memref<2x10xf32, #tpu.memory_space<vmem>>, %arg2: memref<2x135xf32, #tpu.memory_space<vmem>>, %arg3: memref<3x10x778xf32, #tpu.memory_space<vmem>>, %arg4: memref<3x778xf32, #tpu.memory_space<vmem>>, %arg5: memref<3x135x778xf32, #tpu.memory_space<vmem>>, %arg6: memref<778x16xf32, #tpu.memory_space<vmem>>, %arg7: memref<2x3x778xf32, #tpu.memory_space<vmem>>, %arg8: memref<2x3x16xf32, #tpu.memory_space<vmem>>) attributes {dimension_semantics = [#tpu.dimension_semantics<arbitrary>], iteration_bounds = array<i64: 1>, scalar_prefetch = 0 : i64, scratch_operands = 0 : i64, tpu.core_type = #tpu.core_type<tc>, window_params = [{pipeline_mode = #tpu.pipeline_mode<synchronous>, transform_indices = @transform_0, window_bounds = array<i64: 2, 10>}, {pipeline_mode = #tpu.pipeline_mode<synchronous>, transform_indices = @transform_1, window_bounds = array<i64: 2, 135>}, {pipeline_mode = #tpu.pipeline_mode<synchronous>, transform_indices = @transform_2, window_bounds = array<i64: 3, 10, 778>}, {pipeline_mode = #tpu.pipeline_mode<synchronous>, transform_indices = @transform_3, window_bounds = array<i64: 3, 778>}, {pipeline_mode = #tpu.pipeline_mode<synchronous>, transform_indices = @transform_4, window_bounds = array<i64: 3, 135, 778>}, {pipeline_mode = #tpu.pipeline_mode<synchronous>, transform_indices = @transform_5, window_bounds = array<i64: 778, 16>}, {pipeline_mode = #tpu.pipeline_mode<synchronous>, transform_indices = @transform_6, window_bounds = array<i64: 2, 3, 778>}, {pipeline_mode = #tpu.pipeline_mode<synchronous>, transform_indices = @transform_7, window_bounds = array<i64: 2, 3, 16>}]} {
    %c0 = arith.constant 0 : index
    %c0_0 = arith.constant 0 : index
    %0 = vector.load %arg1[%c0, %c0_0] : memref<2x10xf32, #tpu.memory_space<vmem>>, vector<2x10xf32>
    %c0_1 = arith.constant 0 : index
    %c0_2 = arith.constant 0 : index
    %1 = vector.load %arg2[%c0_1, %c0_2] : memref<2x135xf32, #tpu.memory_space<vmem>>, vector<2x135xf32>
    %c0_3 = arith.constant 0 : index
    %c0_4 = arith.constant 0 : index
    %2 = vector.load %arg4[%c0_3, %c0_4] : memref<3x778xf32, #tpu.memory_space<vmem>>, vector<3x778xf32>
    %c0_5 = arith.constant 0 : index
    %c0_6 = arith.constant 0 : index
    %3 = vector.load %arg6[%c0_5, %c0_6] : memref<778x16xf32, #tpu.memory_space<vmem>>, vector<778x16xf32>
    %c0_7 = arith.constant 0 : index
    %c0_8 = arith.constant 0 : index
    %c0_9 = arith.constant 0 : index
    %4 = vector.load %arg3[%c0_7, %c0_8, %c0_9] : memref<3x10x778xf32, #tpu.memory_space<vmem>>, vector<1x10x778xf32>
    %5 = vector.shape_cast %4 : vector<1x10x778xf32> to vector<10x778xf32>
    %cst = arith.constant dense<0.000000e+00> : vector<2x778xf32>
    %6 = tpu.matmul %0, %5, %cst {dimension_numbers = #tpu.dot_dimension_numbers<[1], [0], [0], [1], [0, 0, 1, 1], [], []>} : vector<2x10xf32>, vector<10x778xf32>, vector<2x778xf32> -> vector<2x778xf32>
    %7 = vector.extract_strided_slice %2 {offsets = [0, 0], sizes = [1, 778], strides = [1, 1]} : vector<3x778xf32> to vector<1x778xf32>
    %8 = vector.broadcast %7 : vector<1x778xf32> to vector<2x778xf32>
    %9 = arith.addf %6, %8 : vector<2x778xf32>
    %c0_10 = arith.constant 0 : index
    %c0_11 = arith.constant 0 : index
    %c0_12 = arith.constant 0 : index
    %10 = vector.load %arg5[%c0_10, %c0_11, %c0_12] : memref<3x135x778xf32, #tpu.memory_space<vmem>>, vector<1x135x778xf32>
    %11 = vector.shape_cast %10 : vector<1x135x778xf32> to vector<135x778xf32>
    %cst_13 = arith.constant dense<0.000000e+00> : vector<2x778xf32>
    %12 = tpu.matmul %1, %11, %cst_13 {dimension_numbers = #tpu.dot_dimension_numbers<[1], [0], [0], [1], [0, 0, 1, 1], [], []>} : vector<2x135xf32>, vector<135x778xf32>, vector<2x778xf32> -> vector<2x778xf32>
    %13 = arith.addf %9, %12 : vector<2x778xf32>
    %cst_14 = arith.constant dense<0.000000e+00> : vector<2x16xf32>
    %14 = tpu.matmul %9, %3, %cst_14 {dimension_numbers = #tpu.dot_dimension_numbers<[1], [0], [0], [1], [0, 0, 1, 1], [], []>} : vector<2x778xf32>, vector<778x16xf32>, vector<2x16xf32> -> vector<2x16xf32>
    %c1 = arith.constant 1 : index
    %c0_15 = arith.constant 0 : index
    %c0_16 = arith.constant 0 : index
    %15 = vector.load %arg3[%c1, %c0_15, %c0_16] : memref<3x10x778xf32, #tpu.memory_space<vmem>>, vector<1x10x778xf32>
    %16 = vector.shape_cast %15 : vector<1x10x778xf32> to vector<10x778xf32>
    %cst_17 = arith.constant dense<0.000000e+00> : vector<2x778xf32>
    %17 = tpu.matmul %0, %16, %cst_17 {dimension_numbers = #tpu.dot_dimension_numbers<[1], [0], [0], [1], [0, 0, 1, 1], [], []>} : vector<2x10xf32>, vector<10x778xf32>, vector<2x778xf32> -> vector<2x778xf32>
    %18 = vector.extract_strided_slice %2 {offsets = [1, 0], sizes = [1, 778], strides = [1, 1]} : vector<3x778xf32> to vector<1x778xf32>
    %19 = vector.broadcast %18 : vector<1x778xf32> to vector<2x778xf32>
    %20 = arith.addf %17, %19 : vector<2x778xf32>
    %c1_18 = arith.constant 1 : index
    %c0_19 = arith.constant 0 : index
    %c0_20 = arith.constant 0 : index
    %21 = vector.load %arg5[%c1_18, %c0_19, %c0_20] : memref<3x135x778xf32, #tpu.memory_space<vmem>>, vector<1x135x778xf32>
    %22 = vector.shape_cast %21 : vector<1x135x778xf32> to vector<135x778xf32>
    %cst_21 = arith.constant dense<0.000000e+00> : vector<2x778xf32>
    %23 = tpu.matmul %1, %22, %cst_21 {dimension_numbers = #tpu.dot_dimension_numbers<[1], [0], [0], [1], [0, 0, 1, 1], [], []>} : vector<2x135xf32>, vector<135x778xf32>, vector<2x778xf32> -> vector<2x778xf32>
    %24 = arith.addf %20, %23 : vector<2x778xf32>
    %cst_22 = arith.constant dense<0.000000e+00> : vector<2x16xf32>
    %25 = tpu.matmul %20, %3, %cst_22 {dimension_numbers = #tpu.dot_dimension_numbers<[1], [0], [0], [1], [0, 0, 1, 1], [], []>} : vector<2x778xf32>, vector<778x16xf32>, vector<2x16xf32> -> vector<2x16xf32>
    %c2 = arith.constant 2 : index
    %c0_23 = arith.constant 0 : index
    %c0_24 = arith.constant 0 : index
    %26 = vector.load %arg3[%c2, %c0_23, %c0_24] : memref<3x10x778xf32, #tpu.memory_space<vmem>>, vector<1x10x778xf32>
    %27 = vector.shape_cast %26 : vector<1x10x778xf32> to vector<10x778xf32>
    %cst_25 = arith.constant dense<0.000000e+00> : vector<2x778xf32>
    %28 = tpu.matmul %0, %27, %cst_25 {dimension_numbers = #tpu.dot_dimension_numbers<[1], [0], [0], [1], [0, 0, 1, 1], [], []>} : vector<2x10xf32>, vector<10x778xf32>, vector<2x778xf32> -> vector<2x778xf32>
    %29 = vector.extract_strided_slice %2 {offsets = [2, 0], sizes = [1, 778], strides = [1, 1]} : vector<3x778xf32> to vector<1x778xf32>
    %30 = vector.broadcast %29 : vector<1x778xf32> to vector<2x778xf32>
    %31 = arith.addf %28, %30 : vector<2x778xf32>
    %c2_26 = arith.constant 2 : index
    %c0_27 = arith.constant 0 : index
    %c0_28 = arith.constant 0 : index
    %32 = vector.load %arg5[%c2_26, %c0_27, %c0_28] : memref<3x135x778xf32, #tpu.memory_space<vmem>>, vector<1x135x778xf32>
    %33 = vector.shape_cast %32 : vector<1x135x778xf32> to vector<135x778xf32>
    %cst_29 = arith.constant dense<0.000000e+00> : vector<2x778xf32>
    %34 = tpu.matmul %1, %33, %cst_29 {dimension_numbers = #tpu.dot_dimension_numbers<[1], [0], [0], [1], [0, 0, 1, 1], [], []>} : vector<2x135xf32>, vector<135x778xf32>, vector<2x778xf32> -> vector<2x778xf32>
    %35 = arith.addf %31, %34 : vector<2x778xf32>
    %cst_30 = arith.constant dense<0.000000e+00> : vector<2x16xf32>
    %36 = tpu.matmul %31, %3, %cst_30 {dimension_numbers = #tpu.dot_dimension_numbers<[1], [0], [0], [1], [0, 0, 1, 1], [], []>} : vector<2x778xf32>, vector<778x16xf32>, vector<2x16xf32> -> vector<2x16xf32>
    %37 = vector.shape_cast %13 : vector<2x778xf32> to vector<2x1x778xf32>
    %38 = vector.shape_cast %24 : vector<2x778xf32> to vector<2x1x778xf32>
    %39 = vector.shape_cast %35 : vector<2x778xf32> to vector<2x1x778xf32>
    %40 = tpu.concatenate %37, %38, %39 in 1 : vector<2x1x778xf32>, vector<2x1x778xf32>, vector<2x1x778xf32> -> vector<2x3x778xf32>
    %c0_31 = arith.constant 0 : index
    %c0_32 = arith.constant 0 : index
    %c0_33 = arith.constant 0 : index
    %41 = vector.load %arg7[%c0_31, %c0_32, %c0_33] : memref<2x3x778xf32, #tpu.memory_space<vmem>>, vector<2x3x778xf32>
    tpu.vector_store %arg7[%c0_31, %c0_32, %c0_33], %40 {strides = array<i32>} : memref<2x3x778xf32, #tpu.memory_space<vmem>>, vector<2x3x778xf32>,
    %42 = vector.shape_cast %14 : vector<2x16xf32> to vector<2x1x16xf32>
    %43 = vector.shape_cast %25 : vector<2x16xf32> to vector<2x1x16xf32>
    %44 = vector.shape_cast %36 : vector<2x16xf32> to vector<2x1x16xf32>
    %45 = tpu.concatenate %42, %43, %44 in 1 : vector<2x1x16xf32>, vector<2x1x16xf32>, vector<2x1x16xf32> -> vector<2x3x16xf32>
    %c0_34 = arith.constant 0 : index
    %c0_35 = arith.constant 0 : index
    %c0_36 = arith.constant 0 : index
    %46 = vector.load %arg8[%c0_34, %c0_35, %c0_36] : memref<2x3x16xf32, #tpu.memory_space<vmem>>, vector<2x3x16xf32>
    tpu.vector_store %arg8[%c0_34, %c0_35, %c0_36], %45 {strides = array<i32>} : memref<2x3x16xf32, #tpu.memory_space<vmem>>, vector<2x3x16xf32>,
    return
  }
  func.func @transform_0(%arg0: i32) -> (i32, i32) {
    %c0_i32 = arith.constant 0 : i32
    %c0_i32_0 = arith.constant 0 : i32
    %c0_i32_1 = arith.constant 0 : i32
    return %c0_i32, %c0_i32_0 : i32, i32
  }
  func.func @transform_1(%arg0: i32) -> (i32, i32) {
    %c0_i32 = arith.constant 0 : i32
    %c0_i32_0 = arith.constant 0 : i32
    %c0_i32_1 = arith.constant 0 : i32
    return %c0_i32, %c0_i32_0 : i32, i32
  }
  func.func @transform_2(%arg0: i32) -> (i32, i32, i32) {
    %c0_i32 = arith.constant 0 : i32
    %c0_i32_0 = arith.constant 0 : i32
    %c0_i32_1 = arith.constant 0 : i32
    %c0_i32_2 = arith.constant 0 : i32
    return %c0_i32, %c0_i32_0, %c0_i32_1 : i32, i32, i32
  }
  func.func @transform_3(%arg0: i32) -> (i32, i32) {
    %c0_i32 = arith.constant 0 : i32
    %c0_i32_0 = arith.constant 0 : i32
    %c0_i32_1 = arith.constant 0 : i32
    return %c0_i32, %c0_i32_0 : i32, i32
  }
  func.func @transform_4(%arg0: i32) -> (i32, i32, i32) {
    %c0_i32 = arith.constant 0 : i32
    %c0_i32_0 = arith.constant 0 : i32
    %c0_i32_1 = arith.constant 0 : i32
    %c0_i32_2 = arith.constant 0 : i32
    return %c0_i32, %c0_i32_0, %c0_i32_1 : i32, i32, i32
  }
  func.func @transform_5(%arg0: i32) -> (i32, i32) {
    %c0_i32 = arith.constant 0 : i32
    %c0_i32_0 = arith.constant 0 : i32
    %c0_i32_1 = arith.constant 0 : i32
    return %c0_i32, %c0_i32_0 : i32, i32
  }
  func.func @transform_6(%arg0: i32) -> (i32, i32, i32) {
    %c0_i32 = arith.constant 0 : i32
    %c0_i32_0 = arith.constant 0 : i32
    %c0_i32_1 = arith.constant 0 : i32
    %c0_i32_2 = arith.constant 0 : i32
    return %c0_i32, %c0_i32_0, %c0_i32_1 : i32, i32, i32
  }
  func.func @transform_7(%arg0: i32) -> (i32, i32, i32) {
    %c0_i32 = arith.constant 0 : i32
    %c0_i32_0 = arith.constant 0 : i32
    %c0_i32_1 = arith.constant 0 : i32
    %c0_i32_2 = arith.constant 0 : i32
    return %c0_i32, %c0_i32_0, %c0_i32_1 : i32, i32, i32
  }
}

module attributes {stable_mosaic.version = 11 : i64} {
  func.func @skin_kernel(%arg0: i32, %arg1: memref<1x16x16xf32, #tpu.memory_space<vmem>>, %arg2: memref<16x778xf32, #tpu.memory_space<vmem>>, %arg3: memref<1x4x778xf32, #tpu.memory_space<vmem>>, %arg4: memref<1x3x778xf32, #tpu.memory_space<vmem>>) attributes {dimension_semantics = [#tpu.dimension_semantics<parallel>], iteration_bounds = array<i64: 2>, scalar_prefetch = 0 : i64, scratch_operands = 0 : i64, tpu.core_type = #tpu.core_type<tc>, window_params = [{transform_indices = @transform_0, window_bounds = array<i64: 1, 16, 16>}, {pipeline_mode = #tpu.pipeline_mode<synchronous>, transform_indices = @transform_1, window_bounds = array<i64: 16, 778>}, {transform_indices = @transform_2, window_bounds = array<i64: 1, 4, 778>}, {transform_indices = @transform_3, window_bounds = array<i64: 1, 3, 778>}]} {
    %c0 = arith.constant 0 : index
    %c0_0 = arith.constant 0 : index
    %c0_1 = arith.constant 0 : index
    %0 = vector.load %arg1[%c0, %c0_0, %c0_1] : memref<1x16x16xf32, #tpu.memory_space<vmem>>, vector<1x16x16xf32>
    %1 = vector.shape_cast %0 : vector<1x16x16xf32> to vector<16x16xf32>
    %c0_2 = arith.constant 0 : index
    %c0_3 = arith.constant 0 : index
    %2 = vector.load %arg2[%c0_2, %c0_3] : memref<16x778xf32, #tpu.memory_space<vmem>>, vector<16x778xf32>
    %c0_4 = arith.constant 0 : index
    %c0_5 = arith.constant 0 : index
    %c0_6 = arith.constant 0 : index
    %3 = vector.load %arg3[%c0_4, %c0_5, %c0_6] : memref<1x4x778xf32, #tpu.memory_space<vmem>>, vector<1x4x778xf32>
    %4 = vector.shape_cast %3 : vector<1x4x778xf32> to vector<4x778xf32>
    %cst = arith.constant dense<0.000000e+00> : vector<16x778xf32>
    %5 = tpu.matmul %1, %2, %cst {dimension_numbers = #tpu.dot_dimension_numbers<[1], [0], [0], [1], [0, 0, 1, 1], [], []>} : vector<16x16xf32>, vector<16x778xf32>, vector<16x778xf32> -> vector<16x778xf32>
    %6 = vector.extract_strided_slice %5 {offsets = [0, 0], sizes = [4, 778], strides = [1, 1]} : vector<16x778xf32> to vector<4x778xf32>
    %7 = arith.mulf %6, %4 : vector<4x778xf32>
    %cst_7 = arith.constant dense<0.000000e+00> : vector<778xf32>
    %8 = vector.multi_reduction <add>, %7, %cst_7 [0] : vector<4x778xf32> to vector<778xf32>
    %9 = vector.shape_cast %8 : vector<778xf32> to vector<1x778xf32>
    %10 = vector.extract_strided_slice %5 {offsets = [4, 0], sizes = [4, 778], strides = [1, 1]} : vector<16x778xf32> to vector<4x778xf32>
    %11 = arith.mulf %10, %4 : vector<4x778xf32>
    %cst_8 = arith.constant dense<0.000000e+00> : vector<778xf32>
    %12 = vector.multi_reduction <add>, %11, %cst_8 [0] : vector<4x778xf32> to vector<778xf32>
    %13 = vector.shape_cast %12 : vector<778xf32> to vector<1x778xf32>
    %14 = vector.extract_strided_slice %5 {offsets = [8, 0], sizes = [4, 778], strides = [1, 1]} : vector<16x778xf32> to vector<4x778xf32>
    %15 = arith.mulf %14, %4 : vector<4x778xf32>
    %cst_9 = arith.constant dense<0.000000e+00> : vector<778xf32>
    %16 = vector.multi_reduction <add>, %15, %cst_9 [0] : vector<4x778xf32> to vector<778xf32>
    %17 = vector.shape_cast %16 : vector<778xf32> to vector<1x778xf32>
    %18 = tpu.concatenate %9, %13, %17 in 0 : vector<1x778xf32>, vector<1x778xf32>, vector<1x778xf32> -> vector<3x778xf32>
    %c0_10 = arith.constant 0 : index
    %c0_11 = arith.constant 0 : index
    %c0_12 = arith.constant 0 : index
    %19 = vector.load %arg4[%c0_10, %c0_11, %c0_12] : memref<1x3x778xf32, #tpu.memory_space<vmem>>, vector<1x3x778xf32>
    %20 = vector.shape_cast %19 : vector<1x3x778xf32> to vector<3x778xf32>
    %21 = vector.shape_cast %18 : vector<3x778xf32> to vector<1x3x778xf32>
    tpu.vector_store %arg4[%c0_10, %c0_11, %c0_12], %21 {strides = array<i32>} : memref<1x3x778xf32, #tpu.memory_space<vmem>>, vector<1x3x778xf32>,
    return
  }
  func.func @transform_0(%arg0: i32) -> (i32, i32, i32) {
    %c0_i32 = arith.constant 0 : i32
    %c0_i32_0 = arith.constant 0 : i32
    %c0_i32_1 = arith.constant 0 : i32
    return %arg0, %c0_i32, %c0_i32_0 : i32, i32, i32
  }
  func.func @transform_1(%arg0: i32) -> (i32, i32) {
    %c0_i32 = arith.constant 0 : i32
    %c0_i32_0 = arith.constant 0 : i32
    %c0_i32_1 = arith.constant 0 : i32
    return %c0_i32, %c0_i32_0 : i32, i32
  }
  func.func @transform_2(%arg0: i32) -> (i32, i32, i32) {
    %c0_i32 = arith.constant 0 : i32
    %c0_i32_0 = arith.constant 0 : i32
    %c0_i32_1 = arith.constant 0 : i32
    return %arg0, %c0_i32, %c0_i32_0 : i32, i32, i32
  }
  func.func @transform_3(%arg0: i32) -> (i32, i32, i32) {
    %c0_i32 = arith.constant 0 : i32
    %c0_i32_0 = arith.constant 0 : i32
    %c0_i32_1 = arith.constant 0 : i32
    return %arg0, %c0_i32, %c0_i32_0 : i32, i32, i32
  }
}

</mosaic_0001>

<llo_original>
// kernel: _lambda_.3
$region0: #{_lambda_.3}
  #allocation0 [shape = 'u32[]', space=smem, size = 0x4, offset = 0x4, fixed_abs, tag = 'smem constant byte address 0x4 - core index']
  #allocation1 [shape = 'u32[144,128]{1,0:T(1,128)}', space=vmem, size = 0x12000, scoped, tag = 'internal scratch']
  %s0 = inlined_call_operand.vmem [shape: f32[2,16,16], index: 0, kind: input, shape index: {}]
  %s1 = inlined_call_operand.vmem [shape: f32[16,778], index: 1, kind: input, shape index: {}]
  %s2 = inlined_call_operand.vmem [shape: f32[2,4,778], index: 2, kind: input, shape index: {}]
  %s3 = inlined_call_operand.vmem [shape: f32[2,3,778], index: 3, kind: output, shape index: {}]
  %s4 = sld [smem:[#allocation0]]
  $region45: #{_lambda_.3} parent=0
    _
  %s6 = ssub.s32 1, %s4
  %s7 = scalar_select 0, %s6, %s4
  loop: start=0, step=1, limit=4
  $region2: #{_lambda_.3} parent=0 // loop_pre_header
    _
  $region3: #{_lambda_.3} parent=0 // loop_header
    %s9 = sphi 0, %s13
    %p10 = scmp.ge.s32.totalorder %s9, 4
    %s19 = sphi 0, %s21
    %s22 = sphi 0, %s19
    %s23 = sphi 0, %s22
    %s39 = sphi 0, %s23
    %s43 = sphi 0, %s43
    %s45 = sphi 0, %s43
    %s46 = sphi 0, %s45
    %s60 = sphi 0, %s46
    %s66 = sphi 0, %s68
    %s69 = sphi 0, %s66
    %s70 = sphi 0, %s69
    %s86 = sphi 0, %s70
    %s92 = sphi 0, %s94
    %s95 = sphi 0, %s92
    %s96 = sphi 0, %s95
    %s112 = sphi 0, %s96
  $region4: #{_lambda_.3} parent=0 // loop_header_branch
    %12 = sbr.rel (%p10) target = $region8
  $region5: #{_lambda_.3} parent=0 // loop_body
    %s14 = ssub.s32 %s9, 1
    %s15 = ssub.s32 %s9, 2
    %s16 = sadd.s32 %s9, 1
    %s17 = ssub.s32 %s9, %s16
    %p18 = scmp.eq.s32.totalorder %s17, 0
    %s20 = sadd.s32 %s19, 1
    %s21 = scalar_select %p18, %s19, %s20
    %p24 = pneg %p18
    %p25 = scmp.eq.s32.totalorder %s9, 1
    %p26 = por %p24, %p25
    %p27 = scmp.ne.s32.totalorder %s19, %s22
    %p28 = scmp.eq.s32.totalorder %s9, 0
    %p29 = por %p27, %p28
    %p30 = scmp.ne.s32.totalorder %s19, %s22
    %p31 = scmp.eq.s32.totalorder %s14, 1
    %p32 = por %p30, %p31
    %p33 = scmp.ne.s32.totalorder %s22, %s23
    %p34 = scmp.eq.s32.totalorder %s14, 0
    %p35 = por %p33, %p34
    %p36 = scmp.ne.s32.totalorder %s22, %s23
    %p37 = scmp.eq.s32.totalorder %s15, 1
    %p38 = por %p36, %p37
    %p40 = scmp.ne.s32.totalorder %s23, %s39
    %p41 = scmp.eq.s32.totalorder %s15, 0
    %p42 = por %p40, %p41
    %s44 = sadd.s32 %s43, 1
    %p47 = scmp.eq.s32.totalorder %s9, 1
    %p48 = scmp.ne.s32.totalorder %s43, %s45
    %p49 = scmp.eq.s32.totalorder %s9, 0
    %p50 = por %p48, %p49
    %p51 = scmp.ne.s32.totalorder %s43, %s45
    %p52 = scmp.eq.s32.totalorder %s14, 1
    %p53 = por %p51, %p52
    %p54 = scmp.ne.s32.totalorder %s45, %s46
    %p55 = scmp.eq.s32.totalorder %s14, 0
    %p56 = por %p54, %p55
    %p57 = scmp.ne.s32.totalorder %s45, %s46
    %p58 = scmp.eq.s32.totalorder %s15, 1
    %p59 = por %p57, %p58
    %p61 = scmp.ne.s32.totalorder %s46, %s60
    %p62 = scmp.eq.s32.totalorder %s15, 0
    %p63 = por %p61, %p62
    %s64 = ssub.s32 %s9, %s16
    %p65 = scmp.eq.s32.totalorder %s64, 0
    %s67 = sadd.s32 %s66, 1
    %s68 = scalar_select %p65, %s66, %s67
    %p71 = pneg %p65
    %p72 = scmp.eq.s32.totalorder %s9, 1
    %p73 = por %p71, %p72
    %p74 = scmp.ne.s32.totalorder %s66, %s69
    %p75 = scmp.eq.s32.totalorder %s9, 0
    %p76 = por %p74, %p75
    %p77 = scmp.ne.s32.totalorder %s66, %s69
    %p78 = scmp.eq.s32.totalorder %s14, 1
    %p79 = por %p77, %p78
    %p80 = scmp.ne.s32.totalorder %s69, %s70
    %p81 = scmp.eq.s32.totalorder %s14, 0
    %p82 = por %p80, %p81
    %p83 = scmp.ne.s32.totalorder %s69, %s70
    %p84 = scmp.eq.s32.totalorder %s15, 1
    %p85 = por %p83, %p84
    %p87 = scmp.ne.s32.totalorder %s70, %s86
    %p88 = scmp.eq.s32.totalorder %s15, 0
    %p89 = por %p87, %p88
    %s90 = ssub.s32 %s9, %s16
    %p91 = scmp.eq.s32.totalorder %s90, 0
    %s93 = sadd.s32 %s92, 1
    %s94 = scalar_select %p91, %s92, %s93
    %p97 = pneg %p91
    %p98 = scmp.eq.s32.totalorder %s9, 1
    %p99 = por %p97, %p98
    %p100 = scmp.ne.s32.totalorder %s92, %s95
    %p101 = scmp.eq.s32.totalorder %s9, 0
    %p102 = por %p100, %p101
    %p103 = scmp.ne.s32.totalorder %s92, %s95
    %p104 = scmp.eq.s32.totalorder %s14, 1
    %p105 = por %p103, %p104
    %p106 = scmp.ne.s32.totalorder %s95, %s96
    %p107 = scmp.eq.s32.totalorder %s14, 0
    %p108 = por %p106, %p107
    %p109 = scmp.ne.s32.totalorder %s95, %s96
    %p110 = scmp.eq.s32.totalorder %s15, 1
    %p111 = por %p109, %p110
    %p113 = scmp.ne.s32.totalorder %s96, %s112
    %p114 = scmp.eq.s32.totalorder %s15, 0
    %p115 = por %p113, %p114
    %p116 = scmp.le.s32.totalorder 1, %s9
    %p117 = scmp.lt.s32.totalorder %s9, 3
    %p118 = pnand %p116, %p117
    %p119 = pneg %p118
    // Predicated region
    $region9: #{_lambda_.3} parent=5 // pred_check
      _
    $region10: #{_lambda_.3} parent=5 // pred_check_branch
      %121 = sbr.rel (%p118) target = $region12
    $region11: #{_lambda_.3} parent=5 // pred_region
      %s122 = ssub.s32 %s9, 1
      // Predicated region
      $region13: #{_lambda_.3} parent=11 // pred_check
        %p123 = pneg %p56
      $region14: #{_lambda_.3} parent=11 // pred_check_branch
        %125 = sbr.rel (%p123) target = $region16
      $region15: #{_lambda_.3} parent=11 // pred_region
        _
      $region16: #{_lambda_.3} parent=11 // pred_fallthru
        _
    $region12: #{_lambda_.3} parent=5 // pred_fallthru
      _
    %p126 = scmp.lt.s32.totalorder %s9, 2
    // Predicated region
    $region17: #{_lambda_.3} parent=5 // pred_check
      %p127 = pneg %p126
    $region18: #{_lambda_.3} parent=5 // pred_check_branch
      %129 = sbr.rel (%p127) target = $region20
    $region19: #{_lambda_.3} parent=5 // pred_region
      // Predicated region
      $region21: #{_lambda_.3} parent=19 // pred_check
        %p130 = pneg %p29
      $region22: #{_lambda_.3} parent=19 // pred_check_branch
        %132 = sbr.rel (%p130) target = $region24
      $region23: #{_lambda_.3} parent=19 // pred_region
        %p133 = scmp.lt.s32.totalorder %s9, 1
        %s134 = scalar_select %p133, %s9, 1
        %s135 = smul.addr %s134, 2
        %s136 = smul.addr %s135, 8
        %s137 = scalar_lea.vmem %s0, %s136
      $region24: #{_lambda_.3} parent=19 // pred_fallthru
        _
      // Predicated region
      $region25: #{_lambda_.3} parent=19 // pred_check
        %p138 = pneg %p76
      $region26: #{_lambda_.3} parent=19 // pred_check_branch
        %140 = sbr.rel (%p138) target = $region28
      $region27: #{_lambda_.3} parent=19 // pred_region
        %p141 = scmp.lt.s32.totalorder %s9, 1
        %s142 = scalar_select %p141, %s9, 1
        %s143 = smul.addr %s142, 7
        %s144 = smul.addr %s143, 4
        %s145 = scalar_lea.vmem %s2, %s144
      $region28: #{_lambda_.3} parent=19 // pred_fallthru
        _
    $region20: #{_lambda_.3} parent=5 // pred_fallthru
      _
    %p146 = scmp.le.s32.totalorder 1, %s9
    %p147 = scmp.lt.s32.totalorder %s9, 3
    %p148 = pnand %p146, %p147
    %p149 = pneg %p148
    // Predicated region
    $region29: #{_lambda_.3} parent=5 // pred_check
      _
    $region30: #{_lambda_.3} parent=5 // pred_check_branch
      %151 = sbr.rel (%p148) target = $region32
    $region31: #{_lambda_.3} parent=5 // pred_region
      %s152 = ssub.s32 %s9, 1
      %p153 = scmp.lt.s32.totalorder %s14, 1
      %s154 = scalar_select %p153, %s14, 1
      %s155 = smul.addr %s154, 2
      %s156 = smul.addr %s155, 8
      %s157 = scalar_lea.vmem %s0, %s156
      %p158 = pneg %p35
      %p159 = pneg %p32
      %p160 = pneg %p56
      %p161 = pneg %p53
      %p162 = scmp.lt.s32.totalorder %s14, 1
      %s163 = scalar_select %p162, %s14, 1
      %s164 = smul.addr %s163, 7
      %s165 = smul.addr %s164, 4
      %s166 = scalar_lea.vmem %s2, %s165
      %p167 = pneg %p82
      %p168 = pneg %p79
      %p169 = pneg %p108
      %p170 = pneg %p105
      %p171 = scmp.lt.s32.totalorder %s14, 1
      %s172 = scalar_select %p171, %s14, 1
      %s173 = smul.addr %s172, 7
      %s174 = smul.addr %s173, 4
      %s175 = scalar_lea.vmem %s3, %s174
      %p176 = scmp.lt.s32.totalorder %s14, 1
      %s177 = scalar_select %p176, %s14, 1
      %s178 = smul.addr %s177, 2
      %s179 = smul.addr %s178, 8
      %s180 = scalar_lea.vmem %s0, %s179
      %p181 = scmp.lt.s32.totalorder %s14, 1
      %s182 = scalar_select %p181, %s14, 1
      %s183 = smul.addr %s182, 7
      %s184 = smul.addr %s183, 4
      %s185 = scalar_lea.vmem %s2, %s184
      %p186 = scmp.lt.s32.totalorder %s14, 1
      %s187 = scalar_select %p186, %s14, 1
      %s188 = smul.addr %s187, 7
      %s189 = smul.addr %s188, 4
      %s190 = scalar_lea.vmem %s3, %s189
      %v191 = vld [vmem:[%s180] sm:$0xff]
      %v192 = vld [vmem:[%s180 + $0x8] sm:$0xff]
      %v193 = vld [vmem:[%s1] sm:$0xff]
      %v194 = vld [vmem:[%s1 + $0x8] sm:$0xff]
      %v195 = vld [vmem:[%s1 + $0x10] sm:$0xff]
      %v196 = vld [vmem:[%s1 + $0x18] sm:$0xff]
      %v197 = vld [vmem:[%s1 + $0x20] sm:$0xff]
      %v198 = vld [vmem:[%s1 + $0x28] sm:$0xff]
      %v199 = vld [vmem:[%s1 + $0x30] sm:$0xff]
      %v200 = vld [vmem:[%s1 + $0x38] sm:$0xff]
      %v201 = vld [vmem:[%s1 + $0x40] sm:$0xff]
      %v202 = vld [vmem:[%s1 + $0x48] sm:$0xff]
      %v203 = vld [vmem:[%s1 + $0x50] sm:$0xff]
      %v204 = vld [vmem:[%s1 + $0x58] sm:$0xff]
      %v205 = vld [vmem:[%s1 + $0x60] sm:$0xff]
      %v206 = vld [vmem:[%s1 + $0x68] sm:$0xff]
      %v207 = vld [vmem:[%s185] sm:$0xff]
      %v208 = vld [vmem:[%s185 + $0x8] sm:$0xff]
      %v209 = vld [vmem:[%s185 + $0x10] sm:$0xff]
      %v210 = vld [vmem:[%s185 + $0x18] sm:$0xf]
      %vm211 = vcmask 130048
      %v213 = vsel %vm211, %v191, 0
      %v216 = vsel %vm211, %v192, 0
      %218 = vmatprep.subr.mxu0 %v194
      %219 = vmatpush1.msra.mxu0 %v193
      %220 = vmatprep.subr.mxu0 %v201
      %221 = vmatpush1.msra.mxu0 %v200
      %222 = vmatprep.subr.mxu0 0.0
      %223 = vmatpush1.msra.mxu0 0.0
      %224 = vmatprep.subr.mxu0 0.0
      %225 = vmatpush1.msra.mxu0 0.0
      %226 = vmatprep.subr.mxu0 0.0
      %227 = vmatpush1.msra.mxu0 0.0
      %228 = vmatprep.subr.mxu0 0.0
      %229 = vmatpush1.msra.mxu0 0.0
      %230 = vmatprep.subr.mxu0 0.0
      %231 = vmatpush1.msra.mxu0 0.0
      %232 = vmatprep.subr.mxu0 0.0
      %233 = vmatpush1.msra.mxu0 0.0
      %234 = vmatprep.subr.mxu0 0.0
      %235 = vmatpush1.msra.mxu0 0.0
      %236 = vmatprep.subr.mxu0 0.0
      %237 = vmatpush1.msra.mxu0 0.0
      %238 = vmatprep.subr.mxu0 0.0
      %239 = vmatpush1.msra.mxu0 0.0
      %240 = vmatprep.subr.mxu0 0.0
      %241 = vmatpush1.msra.mxu0 0.0
      %242 = vmatprep.subr.mxu0 0.0
      %243 = vmatpush1.msra.mxu0 0.0
      %244 = vmatprep.subr.mxu0 0.0
      %245 = vmatpush1.msra.mxu0 0.0
      %246 = vmatprep.subr.mxu0 0.0
      %247 = vmatpush1.msra.mxu0 0.0
      %248 = vmatprep.subr.mxu0 0.0
      %249 = vmatpush1.msra.mxu0 0.0
      %250 = vmatprep.subr.mxu0 0.0
      %251 = vmatpush1.msra.mxu0 0.0
      %252 = vmatprep.subr.mxu0 0.0
      %253 = vmatpush1.msra.mxu0 0.0
      %254 = vmatprep.subr.mxu0 0.0
      %255 = vmatpush1.msra.mxu0 0.0
      %256 = vmatprep.subr.mxu0 0.0
      %257 = vmatpush1.msra.mxu0 0.0
      %258 = vmatprep.subr.mxu0 0.0
      %259 = vmatpush1.msra.mxu0 0.0
      %260 = vmatprep.subr.mxu0 0.0
      %261 = vmatpush1.msra.mxu0 0.0
      %262 = vmatprep.subr.mxu0 0.0
      %263 = vmatpush1.msra.mxu0 0.0
      %264 = vmatprep.subr.mxu0 0.0
      %265 = vmatpush1.msra.mxu0 0.0
      %266 = vmatprep.subr.mxu0 0.0
      %267 = vmatpush1.msra.mxu0 0.0
      %268 = vmatprep.subr.mxu0 0.0
      %269 = vmatpush1.msra.mxu0 0.0
      %270 = vmatprep.subr.mxu0 0.0
      %271 = vmatpush1.msra.mxu0 0.0
      %272 = vmatprep.subr.mxu0 0.0
      %273 = vmatpush1.msra.mxu0 0.0
      %274 = vmatprep.subr.mxu0 0.0
      %275 = vmatpush1.msra.mxu0 0.0
      %276 = vmatprep.subr.mxu0 0.0
      %277 = vmatpush1.msra.mxu0 0.0
      %278 = vmatprep.subr.mxu0 0.0
      %279 = vmatpush1.msra.mxu0 0.0
      %280 = vmatprep.subr.mxu0 0.0
      %281 = vmatpush1.msra.mxu0 0.0
      %282 = vmatprep.mubr.f32.mxu0 0.0
      %283 = vmatmul.mubr.f32.gmra.mrb[0].mxu0 %v213
      %v284 = vpop.f32.mrb[0].mxu0
      %v285 = vadd.f32 0.0, %v284
      %v286 = vpop.f32.mrb[0].mxu0
      %v287 = vadd.f32 0.0, %v286
      %288 = vmatprep.mubr.f32.mxu0 0.0
      %289 = vmatmul.mubr.f32.gmra.mrb[0].mxu0 %v216
      %v290 = vpop.f32.mrb[0].mxu0
      %v291 = vadd.f32 0.0, %v290
      %v292 = vpop.f32.mrb[0].mxu0
      %v293 = vadd.f32 0.0, %v292
      %294 = vdwg.mxu0
      %295 = vmatprep.subr.mxu0 %v196
      %296 = vmatpush1.msra.mxu0 %v195
      %297 = vmatprep.subr.mxu0 %v203
      %298 = vmatpush1.msra.mxu0 %v202
      %299 = vmatprep.subr.mxu0 0.0
      %300 = vmatpush1.msra.mxu0 0.0
      %301 = vmatprep.subr.mxu0 0.0
      %302 = vmatpush1.msra.mxu0 0.0
      %303 = vmatprep.subr.mxu0 0.0
      %304 = vmatpush1.msra.mxu0 0.0
      %305 = vmatprep.subr.mxu0 0.0
      %306 = vmatpush1.msra.mxu0 0.0
      %307 = vmatprep.subr.mxu0 0.0
      %308 = vmatpush1.msra.mxu0 0.0
      %309 = vmatprep.subr.mxu0 0.0
      %310 = vmatpush1.msra.mxu0 0.0
      %311 = vmatprep.subr.mxu0 0.0
      %312 = vmatpush1.msra.mxu0 0.0
      %313 = vmatprep.subr.mxu0 0.0
      %314 = vmatpush1.msra.mxu0 0.0
      %315 = vmatprep.subr.mxu0 0.0
      %316 = vmatpush1.msra.mxu0 0.0
      %317 = vmatprep.subr.mxu0 0.0
      %318 = vmatpush1.msra.mxu0 0.0
      %319 = vmatprep.subr.mxu0 0.0
      %320 = vmatpush1.msra.mxu0 0.0
      %321 = vmatprep.subr.mxu0 0.0
      %322 = vmatpush1.msra.mxu0 0.0
      %323 = vmatprep.subr.mxu0 0.0
      %324 = vmatpush1.msra.mxu0 0.0
      %325 = vmatprep.subr.mxu0 0.0
      %326 = vmatpush1.msra.mxu0 0.0
      %327 = vmatprep.subr.mxu0 0.0
      %328 = vmatpush1.msra.mxu0 0.0
      %329 = vmatprep.subr.mxu0 0.0
      %330 = vmatpush1.msra.mxu0 0.0
      %331 = vmatprep.subr.mxu0 0.0
      %332 = vmatpush1.msra.mxu0 0.0
      %333 = vmatprep.subr.mxu0 0.0
      %334 = vmatpush1.msra.mxu0 0.0
      %335 = vmatprep.subr.mxu0 0.0
      %336 = vmatpush1.msra.mxu0 0.0
      %337 = vmatprep.subr.mxu0 0.0
      %338 = vmatpush1.msra.mxu0 0.0
      %339 = vmatprep.subr.mxu0 0.0
      %340 = vmatpush1.msra.mxu0 0.0
      %341 = vmatprep.subr.mxu0 0.0
      %342 = vmatpush1.msra.mxu0 0.0
      %343 = vmatprep.subr.mxu0 0.0
      %344 = vmatpush1.msra.mxu0 0.0
      %345 = vmatprep.subr.mxu0 0.0
      %346 = vmatpush1.msra.mxu0 0.0
      %347 = vmatprep.subr.mxu0 0.0
      %348 = vmatpush1.msra.mxu0 0.0
      %349 = vmatprep.subr.mxu0 0.0
      %350 = vmatpush1.msra.mxu0 0.0
      %351 = vmatprep.subr.mxu0 0.0
      %352 = vmatpush1.msra.mxu0 0.0
      %353 = vmatprep.subr.mxu0 0.0
      %354 = vmatpush1.msra.mxu0 0.0
      %355 = vmatprep.subr.mxu0 0.0
      %356 = vmatpush1.msra.mxu0 0.0
      %357 = vmatprep.subr.mxu0 0.0
      %358 = vmatpush1.msra.mxu0 0.0
      %359 = vmatprep.mubr.f32.mxu0 0.0
      %360 = vmatmul.mubr.f32.gmra.mrb[0].mxu0 %v213
      %v361 = vpop.f32.mrb[0].mxu0
      %v362 = vadd.f32 0.0, %v361
      %v363 = vpop.f32.mrb[0].mxu0
      %v364 = vadd.f32 0.0, %v363
      %365 = vmatprep.mubr.f32.mxu0 0.0
      %366 = vmatmul.mubr.f32.gmra.mrb[0].mxu0 %v216
      %v367 = vpop.f32.mrb[0].mxu0
      %v368 = vadd.f32 0.0, %v367
      %v369 = vpop.f32.mrb[0].mxu0
      %v370 = vadd.f32 0.0, %v369
      %371 = vdwg.mxu0
      %372 = vmatprep.subr.mxu0 %v198
      %373 = vmatpush1.msra.mxu0 %v197
      %374 = vmatprep.subr.mxu0 %v205
      %375 = vmatpush1.msra.mxu0 %v204
      %376 = vmatprep.subr.mxu0 0.0
      %377 = vmatpush1.msra.mxu0 0.0
      %378 = vmatprep.subr.mxu0 0.0
      %379 = vmatpush1.msra.mxu0 0.0
      %380 = vmatprep.subr.mxu0 0.0
      %381 = vmatpush1.msra.mxu0 0.0
      %382 = vmatprep.subr.mxu0 0.0
      %383 = vmatpush1.msra.mxu0 0.0
      %384 = vmatprep.subr.mxu0 0.0
      %385 = vmatpush1.msra.mxu0 0.0
      %386 = vmatprep.subr.mxu0 0.0
      %387 = vmatpush1.msra.mxu0 0.0
      %388 = vmatprep.subr.mxu0 0.0
      %389 = vmatpush1.msra.mxu0 0.0
      %390 = vmatprep.subr.mxu0 0.0
      %391 = vmatpush1.msra.mxu0 0.0
      %392 = vmatprep.subr.mxu0 0.0
      %393 = vmatpush1.msra.mxu0 0.0
      %394 = vmatprep.subr.mxu0 0.0
      %395 = vmatpush1.msra.mxu0 0.0
      %396 = vmatprep.subr.mxu0 0.0
      %397 = vmatpush1.msra.mxu0 0.0
      %398 = vmatprep.subr.mxu0 0.0
      %399 = vmatpush1.msra.mxu0 0.0
      %400 = vmatprep.subr.mxu0 0.0
      %401 = vmatpush1.msra.mxu0 0.0
      %402 = vmatprep.subr.mxu0 0.0
      %403 = vmatpush1.msra.mxu0 0.0
      %404 = vmatprep.subr.mxu0 0.0
      %405 = vmatpush1.msra.mxu0 0.0
      %406 = vmatprep.subr.mxu0 0.0
      %407 = vmatpush1.msra.mxu0 0.0
      %408 = vmatprep.subr.mxu0 0.0
      %409 = vmatpush1.msra.mxu0 0.0
      %410 = vmatprep.subr.mxu0 0.0
      %411 = vmatpush1.msra.mxu0 0.0
      %412 = vmatprep.subr.mxu0 0.0
      %413 = vmatpush1.msra.mxu0 0.0
      %414 = vmatprep.subr.mxu0 0.0
      %415 = vmatpush1.msra.mxu0 0.0
      %416 = vmatprep.subr.mxu0 0.0
      %417 = vmatpush1.msra.mxu0 0.0
      %418 = vmatprep.subr.mxu0 0.0
      %419 = vmatpush1.msra.mxu0 0.0
      %420 = vmatprep.subr.mxu0 0.0
      %421 = vmatpush1.msra.mxu0 0.0
      %422 = vmatprep.subr.mxu0 0.0
      %423 = vmatpush1.msra.mxu0 0.0
      %424 = vmatprep.subr.mxu0 0.0
      %425 = vmatpush1.msra.mxu0 0.0
      %426 = vmatprep.subr.mxu0 0.0
      %427 = vmatpush1.msra.mxu0 0.0
      %428 = vmatprep.subr.mxu0 0.0
      %429 = vmatpush1.msra.mxu0 0.0
      %430 = vmatprep.subr.mxu0 0.0
      %431 = vmatpush1.msra.mxu0 0.0
      %432 = vmatprep.subr.mxu0 0.0
      %433 = vmatpush1.msra.mxu0 0.0
      %434 = vmatprep.subr.mxu0 0.0
      %435 = vmatpush1.msra.mxu0 0.0
      %436 = vmatprep.mubr.f32.mxu0 0.0
      %437 = vmatmul.mubr.f32.gmra.mrb[0].mxu0 %v213
      %v438 = vpop.f32.mrb[0].mxu0
      %v439 = vadd.f32 0.0, %v438
      %v440 = vpop.f32.mrb[0].mxu0
      %v441 = vadd.f32 0.0, %v440
      %442 = vmatprep.mubr.f32.mxu0 0.0
      %443 = vmatmul.mubr.f32.gmra.mrb[0].mxu0 %v216
      %v444 = vpop.f32.mrb[0].mxu0
      %v445 = vadd.f32 0.0, %v444
      %v446 = vpop.f32.mrb[0].mxu0
      %v447 = vadd.f32 0.0, %v446
      %448 = vdwg.mxu0
      %449 = vmatprep.subr.mxu0 0.0
      %450 = vmatpush1.msra.mxu0 %v199
      %451 = vmatprep.subr.mxu0 0.0
      %452 = vmatpush1.msra.mxu0 %v206
      %453 = vmatprep.subr.mxu0 0.0
      %454 = vmatpush1.msra.mxu0 0.0
      %455 = vmatprep.subr.mxu0 0.0
      %456 = vmatpush1.msra.mxu0 0.0
      %457 = vmatprep.subr.mxu0 0.0
      %458 = vmatpush1.msra.mxu0 0.0
      %459 = vmatprep.subr.mxu0 0.0
      %460 = vmatpush1.msra.mxu0 0.0
      %461 = vmatprep.subr.mxu0 0.0
      %462 = vmatpush1.msra.mxu0 0.0
      %463 = vmatprep.subr.mxu0 0.0
      %464 = vmatpush1.msra.mxu0 0.0
      %465 = vmatprep.subr.mxu0 0.0
      %466 = vmatpush1.msra.mxu0 0.0
      %467 = vmatprep.subr.mxu0 0.0
      %468 = vmatpush1.msra.mxu0 0.0
      %469 = vmatprep.subr.mxu0 0.0
      %470 = vmatpush1.msra.mxu0 0.0
      %471 = vmatprep.subr.mxu0 0.0
      %472 = vmatpush1.msra.mxu0 0.0
      %473 = vmatprep.subr.mxu0 0.0
      %474 = vmatpush1.msra.mxu0 0.0
      %475 = vmatprep.subr.mxu0 0.0
      %476 = vmatpush1.msra.mxu0 0.0
      %477 = vmatprep.subr.mxu0 0.0
      %478 = vmatpush1.msra.mxu0 0.0
      %479 = vmatprep.subr.mxu0 0.0
      %480 = vmatpush1.msra.mxu0 0.0
      %481 = vmatprep.subr.mxu0 0.0
      %482 = vmatpush1.msra.mxu0 0.0
      %483 = vmatprep.subr.mxu0 0.0
      %484 = vmatpush1.msra.mxu0 0.0
      %485 = vmatprep.subr.mxu0 0.0
      %486 = vmatpush1.msra.mxu0 0.0
      %487 = vmatprep.subr.mxu0 0.0
      %488 = vmatpush1.msra.mxu0 0.0
      %489 = vmatprep.subr.mxu0 0.0
      %490 = vmatpush1.msra.mxu0 0.0
      %491 = vmatprep.subr.mxu0 0.0
      %492 = vmatpush1.msra.mxu0 0.0
      %493 = vmatprep.subr.mxu0 0.0
      %494 = vmatpush1.msra.mxu0 0.0
      %495 = vmatprep.subr.mxu0 0.0
      %496 = vmatpush1.msra.mxu0 0.0
      %497 = vmatprep.subr.mxu0 0.0
      %498 = vmatpush1.msra.mxu0 0.0
      %499 = vmatprep.subr.mxu0 0.0
      %500 = vmatpush1.msra.mxu0 0.0
      %501 = vmatprep.subr.mxu0 0.0
      %502 = vmatpush1.msra.mxu0 0.0
      %503 = vmatprep.subr.mxu0 0.0
      %504 = vmatpush1.msra.mxu0 0.0
      %505 = vmatprep.subr.mxu0 0.0
      %506 = vmatpush1.msra.mxu0 0.0
      %507 = vmatprep.subr.mxu0 0.0
      %508 = vmatpush1.msra.mxu0 0.0
      %509 = vmatprep.subr.mxu0 0.0
      %510 = vmatpush1.msra.mxu0 0.0
      %511 = vmatprep.subr.mxu0 0.0
      %512 = vmatpush1.msra.mxu0 0.0
      %513 = vmatprep.mubr.f32.mxu0 0.0
      %514 = vmatmul.mubr.f32.gmra.mrb[0].mxu0 %v213
      %v515 = vpop.f32.mrb[0].mxu0
      %v516 = vadd.f32 0.0, %v515
      %v517 = vpop.f32.mrb[0].mxu0
      %518 = vmatprep.mubr.f32.mxu0 0.0
      %519 = vmatmul.mubr.f32.gmra.mrb[0].mxu0 %v216
      %v520 = vpop.f32.mrb[0].mxu0
      %v521 = vadd.f32 0.0, %v520
      %v522 = vpop.f32.mrb[0].mxu0
      %523 = vdwg.mxu0
      %v528 = vcombine.high %v207, %v207
      %v529 = vcombine.high %v208, %v208
      %v530 = vcombine.high %v209, %v209
      %v534 = vmul.f32 %v285, %v207
      %v535 = vmul.f32 %v287, %v528
      %v536 = vmul.f32 %v362, %v208
      %v537 = vmul.f32 %v364, %v529
      %v538 = vmul.f32 %v439, %v209
      %v539 = vmul.f32 %v441, %v530
      %v540 = vmul.f32 %v516, %v210
      %vm541 = vcmask 1043456
      %v542 = vsel %vm541, %v534, 0.0
      %v543 = vrot.slane %v542, 4
      %v544 = vadd.f32 %v542, %v543
      %v545 = vrot.slane %v544, 2
      %v546 = vadd.f32 %v544, %v545
      %v547 = vrot.slane %v546, 1
      %v548 = vadd.f32 %v546, %v547
      %v549 = vsel %vm541, %v535, 0.0
      %v550 = vrot.slane %v549, 4
      %v551 = vadd.f32 %v549, %v550
      %v552 = vrot.slane %v551, 2
      %v553 = vadd.f32 %v551, %v552
      %v554 = vrot.slane %v553, 1
      %v555 = vadd.f32 %v553, %v554
      %v556 = vsel %vm541, %v536, 0.0
      %v557 = vrot.slane %v556, 4
      %v558 = vadd.f32 %v556, %v557
      %v559 = vrot.slane %v558, 2
      %v560 = vadd.f32 %v558, %v559
      %v561 = vrot.slane %v560, 1
      %v562 = vadd.f32 %v560, %v561
      %v563 = vsel %vm541, %v537, 0.0
      %v564 = vrot.slane %v563, 4
      %v565 = vadd.f32 %v563, %v564
      %v566 = vrot.slane %v565, 2
      %v567 = vadd.f32 %v565, %v566
      %v568 = vrot.slane %v567, 1
      %v569 = vadd.f32 %v567, %v568
      %v570 = vsel %vm541, %v538, 0.0
      %v571 = vrot.slane %v570, 4
      %v572 = vadd.f32 %v570, %v571
      %v573 = vrot.slane %v572, 2
      %v574 = vadd.f32 %v572, %v573
      %v575 = vrot.slane %v574, 1
      %v576 = vadd.f32 %v574, %v575
      %v577 = vsel %vm541, %v539, 0.0
      %v578 = vrot.slane %v577, 4
      %v579 = vadd.f32 %v577, %v578
      %v580 = vrot.slane %v579, 2
      %v581 = vadd.f32 %v579, %v580
      %v582 = vrot.slane %v581, 1
      %v583 = vadd.f32 %v581, %v582
      %vm584 = vcmask 76800
      %v585 = vsel %vm584, %v540, 0.0
      %v586 = vrot.slane %v585, 4
      %v587 = vadd.f32 %v585, %v586
      %v588 = vrot.slane %v587, 2
      %v589 = vadd.f32 %v587, %v588
      %v590 = vrot.slane %v589, 1
      %v591 = vadd.f32 %v589, %v590
      %v592 = vcombine.low %v207, %v207
      %v593 = vcombine.low %v208, %v208
      %v594 = vcombine.low %v209, %v209
      %v595 = vcombine.low %v210, %v210
      %v600 = vmul.f32 %v285, %v592
      %v601 = vmul.f32 %v287, %v207
      %v602 = vmul.f32 %v362, %v593
      %v603 = vmul.f32 %v364, %v208
      %v604 = vmul.f32 %v439, %v594
      %v605 = vmul.f32 %v441, %v209
      %v606 = vmul.f32 %v516, %v595
      %v614 = vrot.slane %v600, 4
      %v615 = vrot.slane %v601, 4
      %v616 = vrot.slane %v602, 4
      %v617 = vrot.slane %v603, 4
      %v618 = vrot.slane %v604, 4
      %v619 = vrot.slane %v605, 4
      %v620 = vrot.slane %v606, 4
      %v628 = vsel %vm541, %v614, 0.0
      %v629 = vrot.slane %v628, 4
      %v630 = vadd.f32 %v628, %v629
      %v631 = vrot.slane %v630, 2
      %v632 = vadd.f32 %v630, %v631
      %v633 = vrot.slane %v632, 1
      %v634 = vadd.f32 %v632, %v633
      %v635 = vsel %vm541, %v615, 0.0
      %v636 = vrot.slane %v635, 4
      %v637 = vadd.f32 %v635, %v636
      %v638 = vrot.slane %v637, 2
      %v639 = vadd.f32 %v637, %v638
      %v640 = vrot.slane %v639, 1
      %v641 = vadd.f32 %v639, %v640
      %v642 = vsel %vm541, %v616, 0.0
      %v643 = vrot.slane %v642, 4
      %v644 = vadd.f32 %v642, %v643
      %v645 = vrot.slane %v644, 2
      %v646 = vadd.f32 %v644, %v645
      %v647 = vrot.slane %v646, 1
      %v648 = vadd.f32 %v646, %v647
      %v649 = vsel %vm541, %v617, 0.0
      %v650 = vrot.slane %v649, 4
      %v651 = vadd.f32 %v649, %v650
      %v652 = vrot.slane %v651, 2
      %v653 = vadd.f32 %v651, %v652
      %v654 = vrot.slane %v653, 1
      %v655 = vadd.f32 %v653, %v654
      %v656 = vsel %vm541, %v618, 0.0
      %v657 = vrot.slane %v656, 4
      %v658 = vadd.f32 %v656, %v657
      %v659 = vrot.slane %v658, 2
      %v660 = vadd.f32 %v658, %v659
      %v661 = vrot.slane %v660, 1
      %v662 = vadd.f32 %v660, %v661
      %v663 = vsel %vm541, %v619, 0.0
      %v664 = vrot.slane %v663, 4
      %v665 = vadd.f32 %v663, %v664
      %v666 = vrot.slane %v665, 2
      %v667 = vadd.f32 %v665, %v666
      %v668 = vrot.slane %v667, 1
      %v669 = vadd.f32 %v667, %v668
      %v670 = vsel %vm584, %v620, 0.0
      %v671 = vrot.slane %v670, 4
      %v672 = vadd.f32 %v670, %v671
      %v673 = vrot.slane %v672, 2
      %v674 = vadd.f32 %v672, %v673
      %v675 = vrot.slane %v674, 1
      %v676 = vadd.f32 %v674, %v675
      %v677 = vmul.f32 %v291, %v207
      %v678 = vmul.f32 %v293, %v528
      %v679 = vmul.f32 %v368, %v208
      %v680 = vmul.f32 %v370, %v529
      %v681 = vmul.f32 %v445, %v209
      %v682 = vmul.f32 %v447, %v530
      %v683 = vmul.f32 %v521, %v210
      %v684 = vsel %vm541, %v677, 0.0
      %v685 = vrot.slane %v684, 4
      %v686 = vadd.f32 %v684, %v685
      %v687 = vrot.slane %v686, 2
      %v688 = vadd.f32 %v686, %v687
      %v689 = vrot.slane %v688, 1
      %v690 = vadd.f32 %v688, %v689
      %v691 = vsel %vm541, %v678, 0.0
      %v692 = vrot.slane %v691, 4
      %v693 = vadd.f32 %v691, %v692
      %v694 = vrot.slane %v693, 2
      %v695 = vadd.f32 %v693, %v694
      %v696 = vrot.slane %v695, 1
      %v697 = vadd.f32 %v695, %v696
      %v698 = vsel %vm541, %v679, 0.0
      %v699 = vrot.slane %v698, 4
      %v700 = vadd.f32 %v698, %v699
      %v701 = vrot.slane %v700, 2
      %v702 = vadd.f32 %v700, %v701
      %v703 = vrot.slane %v702, 1
      %v704 = vadd.f32 %v702, %v703
      %v705 = vsel %vm541, %v680, 0.0
      %v706 = vrot.slane %v705, 4
      %v707 = vadd.f32 %v705, %v706
      %v708 = vrot.slane %v707, 2
      %v709 = vadd.f32 %v707, %v708
      %v710 = vrot.slane %v709, 1
      %v711 = vadd.f32 %v709, %v710
      %v712 = vsel %vm541, %v681, 0.0
      %v713 = vrot.slane %v712, 4
      %v714 = vadd.f32 %v712, %v713
      %v715 = vrot.slane %v714, 2
      %v716 = vadd.f32 %v714, %v715
      %v717 = vrot.slane %v716, 1
      %v718 = vadd.f32 %v716, %v717
      %v719 = vsel %vm541, %v682, 0.0
      %v720 = vrot.slane %v719, 4
      %v721 = vadd.f32 %v719, %v720
      %v722 = vrot.slane %v721, 2
      %v723 = vadd.f32 %v721, %v722
      %v724 = vrot.slane %v723, 1
      %v725 = vadd.f32 %v723, %v724
      %v726 = vsel %vm584, %v683, 0.0
      %v727 = vrot.slane %v726, 4
      %v728 = vadd.f32 %v726, %v727
      %v729 = vrot.slane %v728, 2
      %v730 = vadd.f32 %v728, %v729
      %v731 = vrot.slane %v730, 1
      %v732 = vadd.f32 %v730, %v731
      %vm733 = vcmask 1040384
      %v734 = vsel %vm733, %v548, %v634
      %v735 = vsel %vm733, %v555, %v641
      %v736 = vsel %vm733, %v562, %v648
      %v737 = vsel %vm733, %v569, %v655
      %v738 = vsel %vm733, %v576, %v662
      %v739 = vsel %vm733, %v583, %v669
      %v740 = vsel %vm733, %v591, %v676
      %vm741 = vcmask 1041408
      %v742 = vsel %vm741, %v734, %v690
      %v743 = vsel %vm741, %v735, %v697
      %v744 = vsel %vm741, %v736, %v704
      %v745 = vsel %vm741, %v737, %v711
      %v746 = vsel %vm741, %v738, %v718
      %v747 = vsel %vm741, %v739, %v725
      %v748 = vsel %vm741, %v740, %v732
      %v755 = vcombine.low %v742, %v743
      %v756 = vcombine.low %v744, %v745
      %v757 = vcombine.low %v746, %v747
      %761 = vst [vmem:[%s190] sm:$0x77] %v755
      %762 = vst [vmem:[%s190 + $0x8] sm:$0x77] %v756
      %763 = vst [vmem:[%s190 + $0x10] sm:$0x77] %v757
      %vm764 = vcmask 75776
      %765 = vst.msk [vmem:[%s190 + $0x18] sm:$0x7] %vm764, %v748
      %p766 = scmp.lt.s32.totalorder %s14, 1
      %s767 = scalar_select %p766, %s14, 1
      %s768 = smul.addr %s767, 7
      %s769 = smul.addr %s768, 4
      %s770 = scalar_lea.vmem %s3, %s769
      // Predicated region
      $region33: #{_lambda_.3} parent=31 // pred_check
        %p771 = pneg %p105
      $region34: #{_lambda_.3} parent=31 // pred_check_branch
        %773 = sbr.rel (%p771) target = $region36
      $region35: #{_lambda_.3} parent=31 // pred_region
        _
      $region36: #{_lambda_.3} parent=31 // pred_fallthru
        _
    $region32: #{_lambda_.3} parent=5 // pred_fallthru
      _
    %p774 = scmp.le.s32.totalorder 2, %s9
    // Predicated region
    $region37: #{_lambda_.3} parent=5 // pred_check
      %p775 = pneg %p774
    $region38: #{_lambda_.3} parent=5 // pred_check_branch
      %777 = sbr.rel (%p775) target = $region40
    $region39: #{_lambda_.3} parent=5 // pred_region
      %s778 = ssub.s32 %s9, 2
      // Predicated region
      $region41: #{_lambda_.3} parent=39 // pred_check
        %p779 = pneg %p111
      $region42: #{_lambda_.3} parent=39 // pred_check_branch
        %781 = sbr.rel (%p779) target = $region44
      $region43: #{_lambda_.3} parent=39 // pred_region
        %p782 = scmp.lt.s32.totalorder %s15, 1
        %s783 = scalar_select %p782, %s15, 1
        %s784 = smul.addr %s783, 7
        %s785 = smul.addr %s784, 4
        %s786 = scalar_lea.vmem %s3, %s785
      $region44: #{_lambda_.3} parent=39 // pred_fallthru
        _
    $region40: #{_lambda_.3} parent=5 // pred_fallthru
      _
  $region6: #{_lambda_.3} parent=0 // loop_footer
    %s13 = sadd.s32 1, %s9
  $region7: #{_lambda_.3} parent=0 // loop_footer_branch
    %8 = sbr.rel target = $region3
  $region8: #{_lambda_.3} parent=0 // loop_exit
    _

// kernel: _lambda_.2
$region0: #{_lambda_.2}
  #allocation0 [shape = 'u32[]', space=smem, size = 0x4, offset = 0x4, fixed_abs, tag = 'smem constant byte address 0x4 - core index']
  #allocation1 [shape = 'u32[144,128]{1,0:T(1,128)}', space=vmem, size = 0x12000, scoped, tag = 'internal scratch']
  %s0 = inlined_call_operand.vmem [shape: f32[2,10], index: 0, kind: input, shape index: {}]
  %s1 = inlined_call_operand.vmem [shape: f32[2,135], index: 1, kind: input, shape index: {}]
  %s2 = inlined_call_operand.vmem [shape: f32[3,10,778], index: 2, kind: input, shape index: {}]
  %s3 = inlined_call_operand.vmem [shape: f32[3,778], index: 3, kind: input, shape index: {}]
  %s4 = inlined_call_operand.vmem [shape: f32[3,135,778], index: 4, kind: input, shape index: {}]
  %s5 = inlined_call_operand.hbm [shape: f32[778,16], index: 5, kind: input, shape index: {}]
  %s6 = inlined_call_operand.vmem [shape: f32[2,3,778], index: 6, kind: output, shape index: {0}]
  %s7 = inlined_call_operand.vmem [shape: f32[2,3,16], index: 7, kind: output, shape index: {1}]
  %8 = xla_tuple %s6, %s7
  %s9 = sld [smem:[#allocation0]]
  $region46: #{_lambda_.2} parent=0
    _
  %s11 = ssub.s32 1, %s9
  %s12 = scalar_select 0, %s11, %s9
  $region1: #{_lambda_.2} parent=0
    #allocation2 [shape = 'u8[401408]{0}', space=vmem, size = 0x62000, scoped, tag = 'input window, operand 5, single buffered']
    #allocation3 [shape = 's32[1]{0}', space=sflag, size = 0x4, scoped, tag = 'scoped memory for _lambda_.2']
    %13 = vsyncpa [#allocation3], 0
    // Predicated region
    $region2: #{_lambda_.2} parent=1 // pred_check
      _
    $region3: #{_lambda_.2} parent=1 // pred_check_branch
      %15 = sbr.rel (0) target = $region5
    $region4: #{_lambda_.2} parent=1 // pred_region
      _
    $region5: #{_lambda_.2} parent=1 // pred_fallthru
      _
    // Predicated region
    $region6: #{_lambda_.2} parent=1 // pred_check
      _
    $region7: #{_lambda_.2} parent=1 // pred_check_branch
      %17 = sbr.rel (0) target = $region9
    $region8: #{_lambda_.2} parent=1 // pred_region
      _
    $region9: #{_lambda_.2} parent=1 // pred_fallthru
      _
    // Predicated region
    $region10: #{_lambda_.2} parent=1 // pred_check
      _
    $region11: #{_lambda_.2} parent=1 // pred_check_branch
      %19 = sbr.rel (0) target = $region13
    $region12: #{_lambda_.2} parent=1 // pred_region
      _
    $region13: #{_lambda_.2} parent=1 // pred_fallthru
      _
    // Predicated region
    $region14: #{_lambda_.2} parent=1 // pred_check
      _
    $region15: #{_lambda_.2} parent=1 // pred_check_branch
      %21 = sbr.rel (0) target = $region17
    $region16: #{_lambda_.2} parent=1 // pred_region
      _
    $region17: #{_lambda_.2} parent=1 // pred_fallthru
      _
    // Predicated region
    $region18: #{_lambda_.2} parent=1 // pred_check
      _
    $region19: #{_lambda_.2} parent=1 // pred_check_branch
      %23 = sbr.rel (0) target = $region21
    $region20: #{_lambda_.2} parent=1 // pred_region
      _
    $region21: #{_lambda_.2} parent=1 // pred_fallthru
      _
    // Predicated region
    $region22: #{_lambda_.2} parent=1 // pred_check
      _
    $region23: #{_lambda_.2} parent=1 // pred_check_branch
      %25 = sbr.rel (0) target = $region25
    $region24: #{_lambda_.2} parent=1 // pred_region
      %s27 = ssub.s32 12544, 12544
      %28 = vsyncadd [#allocation3], %s27
      %s29 = sshll.u32 [#allocation2], 4
      %s30 = int_to_ptr.vmem [resolvable:$true] %s29
      %35 = dma.hbm_to_vmem [thread:$0]  %s5, 12544, %s30, [#allocation3], 128, 128, 8
    $region25: #{_lambda_.2} parent=1 // pred_fallthru
      _
    // Predicated region
    $region26: #{_lambda_.2} parent=1 // pred_check
      _
    $region27: #{_lambda_.2} parent=1 // pred_check_branch
      %37 = sbr.rel (0) target = $region29
    $region28: #{_lambda_.2} parent=1 // pred_region
      %38 = dma.done [#allocation3], 12544
    $region29: #{_lambda_.2} parent=1 // pred_fallthru
      _
    %v39 = vld [vmem:[%s0] sm:$0x3]
    %v40 = vld [vmem:[%s1] sm:$0xf]
    %v41 = vld [vmem:[%s3] sm:$0x77]
    %v42 = vld [vmem:[%s3 + $0x8] sm:$0x77]
    %v43 = vld [vmem:[%s3 + $0x10] sm:$0x77]
    %v44 = vld [vmem:[%s3 + $0x18] sm:$0x7]
    %v45 = vld [vmem:[#allocation2] sm:$0xff]
    %v46 = vld [vmem:[#allocation2 + $0x8] sm:$0xff]
    %v47 = vld [vmem:[#allocation2 + $0x10] sm:$0xff]
    %v48 = vld [vmem:[#allocation2 + $0x18] sm:$0xff]
    %v49 = vld [vmem:[#allocation2 + $0x20] sm:$0xff]
    %v50 = vld [vmem:[#allocation2 + $0x28] sm:$0xff]
    %v51 = vld [vmem:[#allocation2 + $0x30] sm:$0xff]
    %v52 = vld [vmem:[#allocation2 + $0x38] sm:$0xff]
    %v53 = vld [vmem:[#allocation2 + $0x40] sm:$0xff]
    %v54 = vld [vmem:[#allocation2 + $0x48] sm:$0xff]
    %v55 = vld [vmem:[#allocation2 + $0x50] sm:$0xff]
    %v56 = vld [vmem:[#allocation2 + $0x58] sm:$0xff]
    %v57 = vld [vmem:[#allocation2 + $0x60] sm:$0xff]
    %v58 = vld [vmem:[#allocation2 + $0x68] sm:$0xff]
    %v59 = vld [vmem:[#allocation2 + $0x70] sm:$0xff]
    %v60 = vld [vmem:[#allocation2 + $0x78] sm:$0xff]
    %v61 = vld [vmem:[#allocation2 + $0x80] sm:$0xff]
    %v62 = vld [vmem:[#allocation2 + $0x88] sm:$0xff]
    %v63 = vld [vmem:[#allocation2 + $0x90] sm:$0xff]
    %v64 = vld [vmem:[#allocation2 + $0x98] sm:$0xff]
    %v65 = vld [vmem:[#allocation2 + $0xa0] sm:$0xff]
    %v66 = vld [vmem:[#allocation2 + $0xa8] sm:$0xff]
    %v67 = vld [vmem:[#allocation2 + $0xb0] sm:$0xff]
    %v68 = vld [vmem:[#allocation2 + $0xb8] sm:$0xff]
    %v69 = vld [vmem:[#allocation2 + $0xc0] sm:$0xff]
    %v70 = vld [vmem:[#allocation2 + $0xc8] sm:$0xff]
    %v71 = vld [vmem:[#allocation2 + $0xd0] sm:$0xff]
    %v72 = vld [vmem:[#allocation2 + $0xd8] sm:$0xff]
    %v73 = vld [vmem:[#allocation2 + $0xe0] sm:$0xff]
    %v74 = vld [vmem:[#allocation2 + $0xe8] sm:$0xff]
    %v75 = vld [vmem:[#allocation2 + $0xf0] sm:$0xff]
    %v76 = vld [vmem:[#allocation2 + $0xf8] sm:$0xff]
    %v77 = vld [vmem:[#allocation2 + $0x100] sm:$0xff]
    %v78 = vld [vmem:[#allocation2 + $0x108] sm:$0xff]
    %v79 = vld [vmem:[#allocation2 + $0x110] sm:$0xff]
    %v80 = vld [vmem:[#allocation2 + $0x118] sm:$0xff]
    %v81 = vld [vmem:[#allocation2 + $0x120] sm:$0xff]
    %v82 = vld [vmem:[#allocation2 + $0x128] sm:$0xff]
    %v83 = vld [vmem:[#allocation2 + $0x130] sm:$0xff]
    %v84 = vld [vmem:[#allocation2 + $0x138] sm:$0xff]
    %v85 = vld [vmem:[#allocation2 + $0x140] sm:$0xff]
    %v86 = vld [vmem:[#allocation2 + $0x148] sm:$0xff]
    %v87 = vld [vmem:[#allocation2 + $0x150] sm:$0xff]
    %v88 = vld [vmem:[#allocation2 + $0x158] sm:$0xff]
    %v89 = vld [vmem:[#allocation2 + $0x160] sm:$0xff]
    %v90 = vld [vmem:[#allocation2 + $0x168] sm:$0xff]
    %v91 = vld [vmem:[#allocation2 + $0x170] sm:$0xff]
    %v92 = vld [vmem:[#allocation2 + $0x178] sm:$0xff]
    %v93 = vld [vmem:[#allocation2 + $0x180] sm:$0xff]
    %v94 = vld [vmem:[#allocation2 + $0x188] sm:$0xff]
    %v95 = vld [vmem:[#allocation2 + $0x190] sm:$0xff]
    %v96 = vld [vmem:[#allocation2 + $0x198] sm:$0xff]
    %v97 = vld [vmem:[#allocation2 + $0x1a0] sm:$0xff]
    %v98 = vld [vmem:[#allocation2 + $0x1a8] sm:$0xff]
    %v99 = vld [vmem:[#allocation2 + $0x1b0] sm:$0xff]
    %v100 = vld [vmem:[#allocation2 + $0x1b8] sm:$0xff]
    %v101 = vld [vmem:[#allocation2 + $0x1c0] sm:$0xff]
    %v102 = vld [vmem:[#allocation2 + $0x1c8] sm:$0xff]
    %v103 = vld [vmem:[#allocation2 + $0x1d0] sm:$0xff]
    %v104 = vld [vmem:[#allocation2 + $0x1d8] sm:$0xff]
    %v105 = vld [vmem:[#allocation2 + $0x1e0] sm:$0xff]
    %v106 = vld [vmem:[#allocation2 + $0x1e8] sm:$0xff]
    %v107 = vld [vmem:[#allocation2 + $0x1f0] sm:$0xff]
    %v108 = vld [vmem:[#allocation2 + $0x1f8] sm:$0xff]
    %v109 = vld [vmem:[#allocation2 + $0x200] sm:$0xff]
    %v110 = vld [vmem:[#allocation2 + $0x208] sm:$0xff]
    %v111 = vld [vmem:[#allocation2 + $0x210] sm:$0xff]
    %v112 = vld [vmem:[#allocation2 + $0x218] sm:$0xff]
    %v113 = vld [vmem:[#allocation2 + $0x220] sm:$0xff]
    %v114 = vld [vmem:[#allocation2 + $0x228] sm:$0xff]
    %v115 = vld [vmem:[#allocation2 + $0x230] sm:$0xff]
    %v116 = vld [vmem:[#allocation2 + $0x238] sm:$0xff]
    %v117 = vld [vmem:[#allocation2 + $0x240] sm:$0xff]
    %v118 = vld [vmem:[#allocation2 + $0x248] sm:$0xff]
    %v119 = vld [vmem:[#allocation2 + $0x250] sm:$0xff]
    %v120 = vld [vmem:[#allocation2 + $0x258] sm:$0xff]
    %v121 = vld [vmem:[#allocation2 + $0x260] sm:$0xff]
    %v122 = vld [vmem:[#allocation2 + $0x268] sm:$0xff]
    %v123 = vld [vmem:[#allocation2 + $0x270] sm:$0xff]
    %v124 = vld [vmem:[#allocation2 + $0x278] sm:$0xff]
    %v125 = vld [vmem:[#allocation2 + $0x280] sm:$0xff]
    %v126 = vld [vmem:[#allocation2 + $0x288] sm:$0xff]
    %v127 = vld [vmem:[#allocation2 + $0x290] sm:$0xff]
    %v128 = vld [vmem:[#allocation2 + $0x298] sm:$0xff]
    %v129 = vld [vmem:[#allocation2 + $0x2a0] sm:$0xff]
    %v130 = vld [vmem:[#allocation2 + $0x2a8] sm:$0xff]
    %v131 = vld [vmem:[#allocation2 + $0x2b0] sm:$0xff]
    %v132 = vld [vmem:[#allocation2 + $0x2b8] sm:$0xff]
    %v133 = vld [vmem:[#allocation2 + $0x2c0] sm:$0xff]
    %v134 = vld [vmem:[#allocation2 + $0x2c8] sm:$0xff]
    %v135 = vld [vmem:[#allocation2 + $0x2d0] sm:$0xff]
    %v136 = vld [vmem:[#allocation2 + $0x2d8] sm:$0xff]
    %v137 = vld [vmem:[#allocation2 + $0x2e0] sm:$0xff]
    %v138 = vld [vmem:[#allocation2 + $0x2e8] sm:$0xff]
    %v139 = vld [vmem:[#allocation2 + $0x2f0] sm:$0xff]
    %v140 = vld [vmem:[#allocation2 + $0x2f8] sm:$0xff]
    %v141 = vld [vmem:[#allocation2 + $0x300] sm:$0xff]
    %v142 = vld [vmem:[#allocation2 + $0x308] sm:$0x3]
    %v143 = vld [vmem:[%s2] sm:$0xff]
    %v144 = vld [vmem:[%s2 + $0x8] sm:$0xff]
    %v145 = vld [vmem:[%s2 + $0x10] sm:$0xff]
    %v146 = vld [vmem:[%s2 + $0x18] sm:$0xff]
    %v147 = vld [vmem:[%s2 + $0x20] sm:$0xff]
    %v148 = vld [vmem:[%s2 + $0x28] sm:$0xff]
    %v149 = vld [vmem:[%s2 + $0x30] sm:$0xff]
    %v150 = vld [vmem:[%s2 + $0x38] sm:$0x3]
    %v151 = vld [vmem:[%s2 + $0x40] sm:$0x3]
    %v152 = vld [vmem:[%s2 + $0x48] sm:$0x3]
    %v153 = vld [vmem:[%s2 + $0x50] sm:$0x3]
    %v154 = vld [vmem:[%s2 + $0x58] sm:$0x3]
    %v155 = vld [vmem:[%s2 + $0x60] sm:$0x3]
    %v156 = vld [vmem:[%s2 + $0x68] sm:$0x3]
    %v161 = vlaneseq
    %v162 = vshrl.u32 %v161, 7
    %v163 = vsub.s32 0, %v162
    %v164 = vrot.slane %v41, %v163
    %v165 = vlaneseq
    %v166 = vshrl.u32 %v165, 7
    %v167 = vsub.s32 4, %v166
    %v168 = vrot.slane %v41, %v167
    %v169 = vlaneseq
    %v170 = vshrl.u32 %v169, 7
    %v171 = vsub.s32 0, %v170
    %v172 = vrot.slane %v42, %v171
    %v173 = vlaneseq
    %v174 = vshrl.u32 %v173, 7
    %v175 = vsub.s32 4, %v174
    %v176 = vrot.slane %v42, %v175
    %v177 = vlaneseq
    %v178 = vshrl.u32 %v177, 7
    %v179 = vsub.s32 0, %v178
    %v180 = vrot.slane %v43, %v179
    %v181 = vlaneseq
    %v182 = vshrl.u32 %v181, 7
    %v183 = vsub.s32 4, %v182
    %v184 = vrot.slane %v43, %v183
    %v185 = vlaneseq
    %v186 = vshrl.u32 %v185, 7
    %v187 = vsub.s32 0, %v186
    %v188 = vrot.slane %v44, %v187
    %v196 = vlaneseq
    %v197 = vshrl.u32 %v196, 7
    %v198 = vsub.s32 0, %v197
    %v199 = vrot.slane %v164, %v198
    %v200 = vlaneseq
    %v201 = vshrl.u32 %v200, 7
    %v202 = vsub.s32 0, %v201
    %v203 = vrot.slane %v168, %v202
    %v204 = vlaneseq
    %v205 = vshrl.u32 %v204, 7
    %v206 = vsub.s32 0, %v205
    %v207 = vrot.slane %v172, %v206
    %v208 = vlaneseq
    %v209 = vshrl.u32 %v208, 7
    %v210 = vsub.s32 0, %v209
    %v211 = vrot.slane %v176, %v210
    %v212 = vlaneseq
    %v213 = vshrl.u32 %v212, 7
    %v214 = vsub.s32 0, %v213
    %v215 = vrot.slane %v180, %v214
    %v216 = vlaneseq
    %v217 = vshrl.u32 %v216, 7
    %v218 = vsub.s32 0, %v217
    %v219 = vrot.slane %v184, %v218
    %v220 = vlaneseq
    %v221 = vshrl.u32 %v220, 7
    %v222 = vsub.s32 0, %v221
    %v223 = vrot.slane %v188, %v222
    %vm224 = vcmask 80896
    %v226 = vsel %vm224, %v39, 0
    %vm228 = vcmask 1041408
    %v230 = vsel %vm228, %v150, 0
    %v233 = vsel %vm228, %v151, 0
    %v236 = vsel %vm228, %v152, 0
    %v239 = vsel %vm228, %v153, 0
    %v242 = vsel %vm228, %v154, 0
    %v245 = vsel %vm228, %v155, 0
    %v248 = vsel %vm228, %v156, 0
    %250 = vmatprep.subr.mxu0 %v144
    %251 = vmatpush1.msra.mxu0 %v143
    %252 = vmatprep.subr.mxu0 %v233
    %253 = vmatpush1.msra.mxu0 %v230
    %254 = vmatprep.subr.mxu0 0.0
    %255 = vmatpush1.msra.mxu0 0.0
    %256 = vmatprep.subr.mxu0 0.0
    %257 = vmatpush1.msra.mxu0 0.0
    %258 = vmatprep.subr.mxu0 0.0
    %259 = vmatpush1.msra.mxu0 0.0
    %260 = vmatprep.subr.mxu0 0.0
    %261 = vmatpush1.msra.mxu0 0.0
    %262 = vmatprep.subr.mxu0 0.0
    %263 = vmatpush1.msra.mxu0 0.0
    %264 = vmatprep.subr.mxu0 0.0
    %265 = vmatpush1.msra.mxu0 0.0
    %266 = vmatprep.subr.mxu0 0.0
    %267 = vmatpush1.msra.mxu0 0.0
    %268 = vmatprep.subr.mxu0 0.0
    %269 = vmatpush1.msra.mxu0 0.0
    %270 = vmatprep.subr.mxu0 0.0
    %271 = vmatpush1.msra.mxu0 0.0
    %272 = vmatprep.subr.mxu0 0.0
    %273 = vmatpush1.msra.mxu0 0.0
    %274 = vmatprep.subr.mxu0 0.0
    %275 = vmatpush1.msra.mxu0 0.0
    %276 = vmatprep.subr.mxu0 0.0
    %277 = vmatpush1.msra.mxu0 0.0
    %278 = vmatprep.subr.mxu0 0.0
    %279 = vmatpush1.msra.mxu0 0.0
    %280 = vmatprep.subr.mxu0 0.0
    %281 = vmatpush1.msra.mxu0 0.0
    %282 = vmatprep.subr.mxu0 0.0
    %283 = vmatpush1.msra.mxu0 0.0
    %284 = vmatprep.subr.mxu0 0.0
    %285 = vmatpush1.msra.mxu0 0.0
    %286 = vmatprep.subr.mxu0 0.0
    %287 = vmatpush1.msra.mxu0 0.0
    %288 = vmatprep.subr.mxu0 0.0
    %289 = vmatpush1.msra.mxu0 0.0
    %290 = vmatprep.subr.mxu0 0.0
    %291 = vmatpush1.msra.mxu0 0.0
    %292 = vmatprep.subr.mxu0 0.0
    %293 = vmatpush1.msra.mxu0 0.0
    %294 = vmatprep.subr.mxu0 0.0
    %295 = vmatpush1.msra.mxu0 0.0
    %296 = vmatprep.subr.mxu0 0.0
    %297 = vmatpush1.msra.mxu0 0.0
    %298 = vmatprep.subr.mxu0 0.0
    %299 = vmatpush1.msra.mxu0 0.0
    %300 = vmatprep.subr.mxu0 0.0
    %301 = vmatpush1.msra.mxu0 0.0
    %302 = vmatprep.subr.mxu0 0.0
    %303 = vmatpush1.msra.mxu0 0.0
    %304 = vmatprep.subr.mxu0 0.0
    %305 = vmatpush1.msra.mxu0 0.0
    %306 = vmatprep.subr.mxu0 0.0
    %307 = vmatpush1.msra.mxu0 0.0
    %308 = vmatprep.subr.mxu0 0.0
    %309 = vmatpush1.msra.mxu0 0.0
    %310 = vmatprep.subr.mxu0 0.0
    %311 = vmatpush1.msra.mxu0 0.0
    %312 = vmatprep.subr.mxu0 0.0
    %313 = vmatpush1.msra.mxu0 0.0
    %314 = vmatprep.mubr.f32.mxu0 0.0
    %315 = vmatmul.mubr.f32.gmra.mrb[0].mxu0 %v226
    %v316 = vpop.f32.mrb[0].mxu0
    %v317 = vadd.f32 %v199, %v316
    %v318 = vpop.f32.mrb[0].mxu0
    %v319 = vadd.f32 %v203, %v318
    %320 = vdwg.mxu0
    %321 = vmatprep.subr.mxu0 %v146
    %322 = vmatpush1.msra.mxu0 %v145
    %323 = vmatprep.subr.mxu0 %v239
    %324 = vmatpush1.msra.mxu0 %v236
    %325 = vmatprep.subr.mxu0 0.0
    %326 = vmatpush1.msra.mxu0 0.0
    %327 = vmatprep.subr.mxu0 0.0
    %328 = vmatpush1.msra.mxu0 0.0
    %329 = vmatprep.subr.mxu0 0.0
    %330 = vmatpush1.msra.mxu0 0.0
    %331 = vmatprep.subr.mxu0 0.0
    %332 = vmatpush1.msra.mxu0 0.0
    %333 = vmatprep.subr.mxu0 0.0
    %334 = vmatpush1.msra.mxu0 0.0
    %335 = vmatprep.subr.mxu0 0.0
    %336 = vmatpush1.msra.mxu0 0.0
    %337 = vmatprep.subr.mxu0 0.0
    %338 = vmatpush1.msra.mxu0 0.0
    %339 = vmatprep.subr.mxu0 0.0
    %340 = vmatpush1.msra.mxu0 0.0
    %341 = vmatprep.subr.mxu0 0.0
    %342 = vmatpush1.msra.mxu0 0.0
    %343 = vmatprep.subr.mxu0 0.0
    %344 = vmatpush1.msra.mxu0 0.0
    %345 = vmatprep.subr.mxu0 0.0
    %346 = vmatpush1.msra.mxu0 0.0
    %347 = vmatprep.subr.mxu0 0.0
    %348 = vmatpush1.msra.mxu0 0.0
    %349 = vmatprep.subr.mxu0 0.0
    %350 = vmatpush1.msra.mxu0 0.0
    %351 = vmatprep.subr.mxu0 0.0
    %352 = vmatpush1.msra.mxu0 0.0
    %353 = vmatprep.subr.mxu0 0.0
    %354 = vmatpush1.msra.mxu0 0.0
    %355 = vmatprep.subr.mxu0 0.0
    %356 = vmatpush1.msra.mxu0 0.0
    %357 = vmatprep.subr.mxu0 0.0
    %358 = vmatpush1.msra.mxu0 0.0
    %359 = vmatprep.subr.mxu0 0.0
    %360 = vmatpush1.msra.mxu0 0.0
    %361 = vmatprep.subr.mxu0 0.0
    %362 = vmatpush1.msra.mxu0 0.0
    %363 = vmatprep.subr.mxu0 0.0
    %364 = vmatpush1.msra.mxu0 0.0
    %365 = vmatprep.subr.mxu0 0.0
    %366 = vmatpush1.msra.mxu0 0.0
    %367 = vmatprep.subr.mxu0 0.0
    %368 = vmatpush1.msra.mxu0 0.0
    %369 = vmatprep.subr.mxu0 0.0
    %370 = vmatpush1.msra.mxu0 0.0
    %371 = vmatprep.subr.mxu0 0.0
    %372 = vmatpush1.msra.mxu0 0.0
    %373 = vmatprep.subr.mxu0 0.0
    %374 = vmatpush1.msra.mxu0 0.0
    %375 = vmatprep.subr.mxu0 0.0
    %376 = vmatpush1.msra.mxu0 0.0
    %377 = vmatprep.subr.mxu0 0.0
    %378 = vmatpush1.msra.mxu0 0.0
    %379 = vmatprep.subr.mxu0 0.0
    %380 = vmatpush1.msra.mxu0 0.0
    %381 = vmatprep.subr.mxu0 0.0
    %382 = vmatpush1.msra.mxu0 0.0
    %383 = vmatprep.subr.mxu0 0.0
    %384 = vmatpush1.msra.mxu0 0.0
    %385 = vmatprep.mubr.f32.mxu0 0.0
    %386 = vmatmul.mubr.f32.gmra.mrb[0].mxu0 %v226
    %v387 = vpop.f32.mrb[0].mxu0
    %v388 = vadd.f32 %v207, %v387
    %v389 = vpop.f32.mrb[0].mxu0
    %v390 = vadd.f32 %v211, %v389
    %391 = vdwg.mxu0
    %392 = vmatprep.subr.mxu0 %v148
    %393 = vmatpush1.msra.mxu0 %v147
    %394 = vmatprep.subr.mxu0 %v245
    %395 = vmatpush1.msra.mxu0 %v242
    %396 = vmatprep.subr.mxu0 0.0
    %397 = vmatpush1.msra.mxu0 0.0
    %398 = vmatprep.subr.mxu0 0.0
    %399 = vmatpush1.msra.mxu0 0.0
    %400 = vmatprep.subr.mxu0 0.0
    %401 = vmatpush1.msra.mxu0 0.0
    %402 = vmatprep.subr.mxu0 0.0
    %403 = vmatpush1.msra.mxu0 0.0
    %404 = vmatprep.subr.mxu0 0.0
    %405 = vmatpush1.msra.mxu0 0.0
    %406 = vmatprep.subr.mxu0 0.0
    %407 = vmatpush1.msra.mxu0 0.0
    %408 = vmatprep.subr.mxu0 0.0
    %409 = vmatpush1.msra.mxu0 0.0
    %410 = vmatprep.subr.mxu0 0.0
    %411 = vmatpush1.msra.mxu0 0.0
    %412 = vmatprep.subr.mxu0 0.0
    %413 = vmatpush1.msra.mxu0 0.0
    %414 = vmatprep.subr.mxu0 0.0
    %415 = vmatpush1.msra.mxu0 0.0
    %416 = vmatprep.subr.mxu0 0.0
    %417 = vmatpush1.msra.mxu0 0.0
    %418 = vmatprep.subr.mxu0 0.0
    %419 = vmatpush1.msra.mxu0 0.0
    %420 = vmatprep.subr.mxu0 0.0
    %421 = vmatpush1.msra.mxu0 0.0
    %422 = vmatprep.subr.mxu0 0.0
    %423 = vmatpush1.msra.mxu0 0.0
    %424 = vmatprep.subr.mxu0 0.0
    %425 = vmatpush1.msra.mxu0 0.0
    %426 = vmatprep.subr.mxu0 0.0
    %427 = vmatpush1.msra.mxu0 0.0
    %428 = vmatprep.subr.mxu0 0.0
    %429 = vmatpush1.msra.mxu0 0.0
    %430 = vmatprep.subr.mxu0 0.0
    %431 = vmatpush1.msra.mxu0 0.0
    %432 = vmatprep.subr.mxu0 0.0
    %433 = vmatpush1.msra.mxu0 0.0
    %434 = vmatprep.subr.mxu0 0.0
    %435 = vmatpush1.msra.mxu0 0.0
    %436 = vmatprep.subr.mxu0 0.0
    %437 = vmatpush1.msra.mxu0 0.0
    %438 = vmatprep.subr.mxu0 0.0
    %439 = vmatpush1.msra.mxu0 0.0
    %440 = vmatprep.subr.mxu0 0.0
    %441 = vmatpush1.msra.mxu0 0.0
    %442 = vmatprep.subr.mxu0 0.0
    %443 = vmatpush1.msra.mxu0 0.0
    %444 = vmatprep.subr.mxu0 0.0
    %445 = vmatpush1.msra.mxu0 0.0
    %446 = vmatprep.subr.mxu0 0.0
    %447 = vmatpush1.msra.mxu0 0.0
    %448 = vmatprep.subr.mxu0 0.0
    %449 = vmatpush1.msra.mxu0 0.0
    %450 = vmatprep.subr.mxu0 0.0
    %451 = vmatpush1.msra.mxu0 0.0
    %452 = vmatprep.subr.mxu0 0.0
    %453 = vmatpush1.msra.mxu0 0.0
    %454 = vmatprep.subr.mxu0 0.0
    %455 = vmatpush1.msra.mxu0 0.0
    %456 = vmatprep.mubr.f32.mxu0 0.0
    %457 = vmatmul.mubr.f32.gmra.mrb[0].mxu0 %v226
    %v458 = vpop.f32.mrb[0].mxu0
    %v459 = vadd.f32 %v215, %v458
    %v460 = vpop.f32.mrb[0].mxu0
    %v461 = vadd.f32 %v219, %v460
    %462 = vdwg.mxu0
    %463 = vmatprep.subr.mxu0 0.0
    %464 = vmatpush1.msra.mxu0 %v149
    %465 = vmatprep.subr.mxu0 0.0
    %466 = vmatpush1.msra.mxu0 %v248
    %467 = vmatprep.subr.mxu0 0.0
    %468 = vmatpush1.msra.mxu0 0.0
    %469 = vmatprep.subr.mxu0 0.0
    %470 = vmatpush1.msra.mxu0 0.0
    %471 = vmatprep.subr.mxu0 0.0
    %472 = vmatpush1.msra.mxu0 0.0
    %473 = vmatprep.subr.mxu0 0.0
    %474 = vmatpush1.msra.mxu0 0.0
    %475 = vmatprep.subr.mxu0 0.0
    %476 = vmatpush1.msra.mxu0 0.0
    %477 = vmatprep.subr.mxu0 0.0
    %478 = vmatpush1.msra.mxu0 0.0
    %479 = vmatprep.subr.mxu0 0.0
    %480 = vmatpush1.msra.mxu0 0.0
    %481 = vmatprep.subr.mxu0 0.0
    %482 = vmatpush1.msra.mxu0 0.0
    %483 = vmatprep.subr.mxu0 0.0
    %484 = vmatpush1.msra.mxu0 0.0
    %485 = vmatprep.subr.mxu0 0.0
    %486 = vmatpush1.msra.mxu0 0.0
    %487 = vmatprep.subr.mxu0 0.0
    %488 = vmatpush1.msra.mxu0 0.0
    %489 = vmatprep.subr.mxu0 0.0
    %490 = vmatpush1.msra.mxu0 0.0
    %491 = vmatprep.subr.mxu0 0.0
    %492 = vmatpush1.msra.mxu0 0.0
    %493 = vmatprep.subr.mxu0 0.0
    %494 = vmatpush1.msra.mxu0 0.0
    %495 = vmatprep.subr.mxu0 0.0
    %496 = vmatpush1.msra.mxu0 0.0
    %497 = vmatprep.subr.mxu0 0.0
    %498 = vmatpush1.msra.mxu0 0.0
    %499 = vmatprep.subr.mxu0 0.0
    %500 = vmatpush1.msra.mxu0 0.0
    %501 = vmatprep.subr.mxu0 0.0
    %502 = vmatpush1.msra.mxu0 0.0
    %503 = vmatprep.subr.mxu0 0.0
    %504 = vmatpush1.msra.mxu0 0.0
    %505 = vmatprep.subr.mxu0 0.0
    %506 = vmatpush1.msra.mxu0 0.0
    %507 = vmatprep.subr.mxu0 0.0
    %508 = vmatpush1.msra.mxu0 0.0
    %509 = vmatprep.subr.mxu0 0.0
    %510 = vmatpush1.msra.mxu0 0.0
    %511 = vmatprep.subr.mxu0 0.0
    %512 = vmatpush1.msra.mxu0 0.0
    %513 = vmatprep.subr.mxu0 0.0
    %514 = vmatpush1.msra.mxu0 0.0
    %515 = vmatprep.subr.mxu0 0.0
    %516 = vmatpush1.msra.mxu0 0.0
    %517 = vmatprep.subr.mxu0 0.0
    %518 = vmatpush1.msra.mxu0 0.0
    %519 = vmatprep.subr.mxu0 0.0
    %520 = vmatpush1.msra.mxu0 0.0
    %521 = vmatprep.subr.mxu0 0.0
    %522 = vmatpush1.msra.mxu0 0.0
    %523 = vmatprep.subr.mxu0 0.0
    %524 = vmatpush1.msra.mxu0 0.0
    %525 = vmatprep.subr.mxu0 0.0
    %526 = vmatpush1.msra.mxu0 0.0
    %527 = vmatprep.mubr.f32.mxu0 0.0
    %528 = vmatmul.mubr.f32.gmra.mrb[0].mxu0 %v226
    %v529 = vpop.f32.mrb[0].mxu0
    %v530 = vadd.f32 %v223, %v529
    %v531 = vpop.f32.mrb[0].mxu0
    %532 = vdwg.mxu0
    %v533 = vld [vmem:[%s4] sm:$0xff]
    %v534 = vld [vmem:[%s4 + $0x8] sm:$0xff]
    %v535 = vld [vmem:[%s4 + $0x10] sm:$0xff]
    %v536 = vld [vmem:[%s4 + $0x18] sm:$0xff]
    %v537 = vld [vmem:[%s4 + $0x20] sm:$0xff]
    %v538 = vld [vmem:[%s4 + $0x28] sm:$0xff]
    %v539 = vld [vmem:[%s4 + $0x30] sm:$0xff]
    %v540 = vld [vmem:[%s4 + $0x38] sm:$0xff]
    %v541 = vld [vmem:[%s4 + $0x40] sm:$0xff]
    %v542 = vld [vmem:[%s4 + $0x48] sm:$0xff]
    %v543 = vld [vmem:[%s4 + $0x50] sm:$0xff]
    %v544 = vld [vmem:[%s4 + $0x58] sm:$0xff]
    %v545 = vld [vmem:[%s4 + $0x60] sm:$0xff]
    %v546 = vld [vmem:[%s4 + $0x68] sm:$0xff]
    %v547 = vld [vmem:[%s4 + $0x70] sm:$0xff]
    %v548 = vld [vmem:[%s4 + $0x78] sm:$0xff]
    %v549 = vld [vmem:[%s4 + $0x80] sm:$0xff]
    %v550 = vld [vmem:[%s4 + $0x88] sm:$0xff]
    %v551 = vld [vmem:[%s4 + $0x90] sm:$0xff]
    %v552 = vld [vmem:[%s4 + $0x98] sm:$0xff]
    %v553 = vld [vmem:[%s4 + $0xa0] sm:$0xff]
    %v554 = vld [vmem:[%s4 + $0xa8] sm:$0xff]
    %v555 = vld [vmem:[%s4 + $0xb0] sm:$0xff]
    %v556 = vld [vmem:[%s4 + $0xb8] sm:$0xff]
    %v557 = vld [vmem:[%s4 + $0xc0] sm:$0xff]
    %v558 = vld [vmem:[%s4 + $0xc8] sm:$0xff]
    %v559 = vld [vmem:[%s4 + $0xd0] sm:$0xff]
    %v560 = vld [vmem:[%s4 + $0xd8] sm:$0xff]
    %v561 = vld [vmem:[%s4 + $0xe0] sm:$0xff]
    %v562 = vld [vmem:[%s4 + $0xe8] sm:$0xff]
    %v563 = vld [vmem:[%s4 + $0xf0] sm:$0xff]
    %v564 = vld [vmem:[%s4 + $0xf8] sm:$0xff]
    %v565 = vld [vmem:[%s4 + $0x100] sm:$0xff]
    %v566 = vld [vmem:[%s4 + $0x108] sm:$0xff]
    %v567 = vld [vmem:[%s4 + $0x110] sm:$0xff]
    %v568 = vld [vmem:[%s4 + $0x118] sm:$0xff]
    %v569 = vld [vmem:[%s4 + $0x120] sm:$0xff]
    %v570 = vld [vmem:[%s4 + $0x128] sm:$0xff]
    %v571 = vld [vmem:[%s4 + $0x130] sm:$0xff]
    %v572 = vld [vmem:[%s4 + $0x138] sm:$0xff]
    %v573 = vld [vmem:[%s4 + $0x140] sm:$0xff]
    %v574 = vld [vmem:[%s4 + $0x148] sm:$0xff]
    %v575 = vld [vmem:[%s4 + $0x150] sm:$0xff]
    %v576 = vld [vmem:[%s4 + $0x158] sm:$0xff]
    %v577 = vld [vmem:[%s4 + $0x160] sm:$0xff]
    %v578 = vld [vmem:[%s4 + $0x168] sm:$0xff]
    %v579 = vld [vmem:[%s4 + $0x170] sm:$0xff]
    %v580 = vld [vmem:[%s4 + $0x178] sm:$0xff]
    %v581 = vld [vmem:[%s4 + $0x180] sm:$0xff]
    %v582 = vld [vmem:[%s4 + $0x188] sm:$0xff]
    %v583 = vld [vmem:[%s4 + $0x190] sm:$0xff]
    %v584 = vld [vmem:[%s4 + $0x198] sm:$0xff]
    %v585 = vld [vmem:[%s4 + $0x1a0] sm:$0xff]
    %v586 = vld [vmem:[%s4 + $0x1a8] sm:$0xff]
    %v587 = vld [vmem:[%s4 + $0x1b0] sm:$0xff]
    %v588 = vld [vmem:[%s4 + $0x1b8] sm:$0xff]
    %v589 = vld [vmem:[%s4 + $0x1c0] sm:$0xff]
    %v590 = vld [vmem:[%s4 + $0x1c8] sm:$0xff]
    %v591 = vld [vmem:[%s4 + $0x1d0] sm:$0xff]
    %v592 = vld [vmem:[%s4 + $0x1d8] sm:$0xff]
    %v593 = vld [vmem:[%s4 + $0x1e0] sm:$0xff]
    %v594 = vld [vmem:[%s4 + $0x1e8] sm:$0xff]
    %v595 = vld [vmem:[%s4 + $0x1f0] sm:$0xff]
    %v596 = vld [vmem:[%s4 + $0x1f8] sm:$0xff]
    %v597 = vld [vmem:[%s4 + $0x200] sm:$0xff]
    %v598 = vld [vmem:[%s4 + $0x208] sm:$0xff]
    %v599 = vld [vmem:[%s4 + $0x210] sm:$0xff]
    %v600 = vld [vmem:[%s4 + $0x218] sm:$0xff]
    %v601 = vld [vmem:[%s4 + $0x220] sm:$0xff]
    %v602 = vld [vmem:[%s4 + $0x228] sm:$0xff]
    %v603 = vld [vmem:[%s4 + $0x230] sm:$0xff]
    %v604 = vld [vmem:[%s4 + $0x238] sm:$0xff]
    %v605 = vld [vmem:[%s4 + $0x240] sm:$0xff]
    %v606 = vld [vmem:[%s4 + $0x248] sm:$0xff]
    %v607 = vld [vmem:[%s4 + $0x250] sm:$0xff]
    %v608 = vld [vmem:[%s4 + $0x258] sm:$0xff]
    %v609 = vld [vmem:[%s4 + $0x260] sm:$0xff]
    %v610 = vld [vmem:[%s4 + $0x268] sm:$0xff]
    %v611 = vld [vmem:[%s4 + $0x270] sm:$0xff]
    %v612 = vld [vmem:[%s4 + $0x278] sm:$0xff]
    %v613 = vld [vmem:[%s4 + $0x280] sm:$0xff]
    %v614 = vld [vmem:[%s4 + $0x288] sm:$0xff]
    %v615 = vld [vmem:[%s4 + $0x290] sm:$0xff]
    %v616 = vld [vmem:[%s4 + $0x298] sm:$0xff]
    %v617 = vld [vmem:[%s4 + $0x2a0] sm:$0xff]
    %v618 = vld [vmem:[%s4 + $0x2a8] sm:$0xff]
    %v619 = vld [vmem:[%s4 + $0x2b0] sm:$0xff]
    %v620 = vld [vmem:[%s4 + $0x2b8] sm:$0xff]
    %v621 = vld [vmem:[%s4 + $0x2c0] sm:$0xff]
    %v622 = vld [vmem:[%s4 + $0x2c8] sm:$0xff]
    %v623 = vld [vmem:[%s4 + $0x2d0] sm:$0xff]
    %v624 = vld [vmem:[%s4 + $0x2d8] sm:$0xff]
    %v625 = vld [vmem:[%s4 + $0x2e0] sm:$0xff]
    %v626 = vld [vmem:[%s4 + $0x2e8] sm:$0xff]
    %v627 = vld [vmem:[%s4 + $0x2f0] sm:$0xff]
    %v628 = vld [vmem:[%s4 + $0x2f8] sm:$0xff]
    %v629 = vld [vmem:[%s4 + $0x300] sm:$0xff]
    %v630 = vld [vmem:[%s4 + $0x308] sm:$0xff]
    %v631 = vld [vmem:[%s4 + $0x310] sm:$0xff]
    %v632 = vld [vmem:[%s4 + $0x318] sm:$0xff]
    %v633 = vld [vmem:[%s4 + $0x320] sm:$0xff]
    %v634 = vld [vmem:[%s4 + $0x328] sm:$0xff]
    %v635 = vld [vmem:[%s4 + $0x330] sm:$0xff]
    %v636 = vld [vmem:[%s4 + $0x338] sm:$0xff]
    %v637 = vld [vmem:[%s4 + $0x340] sm:$0xff]
    %v638 = vld [vmem:[%s4 + $0x348] sm:$0xff]
    %v639 = vld [vmem:[%s4 + $0x350] sm:$0xff]
    %v640 = vld [vmem:[%s4 + $0x358] sm:$0xff]
    %v641 = vld [vmem:[%s4 + $0x360] sm:$0xff]
    %v642 = vld [vmem:[%s4 + $0x368] sm:$0xff]
    %v643 = vld [vmem:[%s4 + $0x370] sm:$0xff]
    %v644 = vld [vmem:[%s4 + $0x378] sm:$0xff]
    %v645 = vld [vmem:[%s4 + $0x380] sm:$0x7f]
    %v646 = vld [vmem:[%s4 + $0x388] sm:$0x7f]
    %v647 = vld [vmem:[%s4 + $0x390] sm:$0x7f]
    %v648 = vld [vmem:[%s4 + $0x398] sm:$0x7f]
    %v649 = vld [vmem:[%s4 + $0x3a0] sm:$0x7f]
    %v650 = vld [vmem:[%s4 + $0x3a8] sm:$0x7f]
    %v651 = vld [vmem:[%s4 + $0x3b0] sm:$0x7f]
    %v654 = vunpack.c.l.s4 1983009808
    %v655 = vunpack.c.0.s8 %v654
    %v656 = vlaneseq
    %v657 = vshrl.u32 %v656, 7
    %v658 = vsub.s32 %v655, %v657
    %v659 = vrot.slane %v40, %v658
    %v660 = vcombine.high %v659, %v659
    %vm662 = vcmask 56320
    %v663 = vsel %vm662, %v660, 0
    %vm665 = vcmask 1046528
    %v667 = vsel %vm665, %v645, 0
    %v670 = vsel %vm665, %v646, 0
    %v673 = vsel %vm665, %v647, 0
    %v676 = vsel %vm665, %v648, 0
    %v679 = vsel %vm665, %v649, 0
    %v682 = vsel %vm665, %v650, 0
    %v685 = vsel %vm665, %v651, 0
    %687 = vmatprep.subr.mxu0 %v534
    %688 = vmatpush1.msra.mxu0 %v533
    %689 = vmatprep.subr.mxu0 %v541
    %690 = vmatpush1.msra.mxu0 %v540
    %691 = vmatprep.subr.mxu0 %v548
    %692 = vmatpush1.msra.mxu0 %v547
    %693 = vmatprep.subr.mxu0 %v555
    %694 = vmatpush1.msra.mxu0 %v554
    %695 = vmatprep.subr.mxu0 %v562
    %696 = vmatpush1.msra.mxu0 %v561
    %697 = vmatprep.subr.mxu0 %v569
    %698 = vmatpush1.msra.mxu0 %v568
    %699 = vmatprep.subr.mxu0 %v576
    %700 = vmatpush1.msra.mxu0 %v575
    %701 = vmatprep.subr.mxu0 %v583
    %702 = vmatpush1.msra.mxu0 %v582
    %703 = vmatprep.subr.mxu0 %v590
    %704 = vmatpush1.msra.mxu0 %v589
    %705 = vmatprep.subr.mxu0 %v597
    %706 = vmatpush1.msra.mxu0 %v596
    %707 = vmatprep.subr.mxu0 %v604
    %708 = vmatpush1.msra.mxu0 %v603
    %709 = vmatprep.subr.mxu0 %v611
    %710 = vmatpush1.msra.mxu0 %v610
    %711 = vmatprep.subr.mxu0 %v618
    %712 = vmatpush1.msra.mxu0 %v617
    %713 = vmatprep.subr.mxu0 %v625
    %714 = vmatpush1.msra.mxu0 %v624
    %715 = vmatprep.subr.mxu0 %v632
    %716 = vmatpush1.msra.mxu0 %v631
    %717 = vmatprep.subr.mxu0 %v639
    %718 = vmatpush1.msra.mxu0 %v638
    %719 = vmatprep.subr.mxu0 %v670
    %720 = vmatpush1.msra.mxu0 %v667
    %721 = vmatprep.subr.mxu0 0.0
    %722 = vmatpush1.msra.mxu0 0.0
    %723 = vmatprep.subr.mxu0 0.0
    %724 = vmatpush1.msra.mxu0 0.0
    %725 = vmatprep.subr.mxu0 0.0
    %726 = vmatpush1.msra.mxu0 0.0
    %727 = vmatprep.subr.mxu0 0.0
    %728 = vmatpush1.msra.mxu0 0.0
    %729 = vmatprep.subr.mxu0 0.0
    %730 = vmatpush1.msra.mxu0 0.0
    %731 = vmatprep.subr.mxu0 0.0
    %732 = vmatpush1.msra.mxu0 0.0
    %733 = vmatprep.subr.mxu0 0.0
    %734 = vmatpush1.msra.mxu0 0.0
    %735 = vmatprep.subr.mxu0 0.0
    %736 = vmatpush1.msra.mxu0 0.0
    %737 = vmatprep.subr.mxu0 0.0
    %738 = vmatpush1.msra.mxu0 0.0
    %739 = vmatprep.subr.mxu0 0.0
    %740 = vmatpush1.msra.mxu0 0.0
    %741 = vmatprep.subr.mxu0 0.0
    %742 = vmatpush1.msra.mxu0 0.0
    %743 = vmatprep.subr.mxu0 0.0
    %744 = vmatpush1.msra.mxu0 0.0
    %745 = vmatprep.subr.mxu0 0.0
    %746 = vmatpush1.msra.mxu0 0.0
    %747 = vmatprep.subr.mxu0 0.0
    %748 = vmatpush1.msra.mxu0 0.0
    %749 = vmatprep.subr.mxu0 0.0
    %750 = vmatpush1.msra.mxu0 0.0
    %751 = vmatprep.mubr.f32.mxu0 %v663
    %752 = vmatmul.mubr.f32.gmra.mrb[0].mxu0 %v659
    %v753 = vpop.f32.mrb[0].mxu0
    %v754 = vadd.f32 0.0, %v753
    %v755 = vpop.f32.mrb[0].mxu0
    %v756 = vadd.f32 0.0, %v755
    %757 = vdwg.mxu0
    %758 = vmatprep.subr.mxu0 %v536
    %759 = vmatpush1.msra.mxu0 %v535
    %760 = vmatprep.subr.mxu0 %v543
    %761 = vmatpush1.msra.mxu0 %v542
    %762 = vmatprep.subr.mxu0 %v550
    %763 = vmatpush1.msra.mxu0 %v549
    %764 = vmatprep.subr.mxu0 %v557
    %765 = vmatpush1.msra.mxu0 %v556
    %766 = vmatprep.subr.mxu0 %v564
    %767 = vmatpush1.msra.mxu0 %v563
    %768 = vmatprep.subr.mxu0 %v571
    %769 = vmatpush1.msra.mxu0 %v570
    %770 = vmatprep.subr.mxu0 %v578
    %771 = vmatpush1.msra.mxu0 %v577
    %772 = vmatprep.subr.mxu0 %v585
    %773 = vmatpush1.msra.mxu0 %v584
    %774 = vmatprep.subr.mxu0 %v592
    %775 = vmatpush1.msra.mxu0 %v591
    %776 = vmatprep.subr.mxu0 %v599
    %777 = vmatpush1.msra.mxu0 %v598
    %778 = vmatprep.subr.mxu0 %v606
    %779 = vmatpush1.msra.mxu0 %v605
    %780 = vmatprep.subr.mxu0 %v613
    %781 = vmatpush1.msra.mxu0 %v612
    %782 = vmatprep.subr.mxu0 %v620
    %783 = vmatpush1.msra.mxu0 %v619
    %784 = vmatprep.subr.mxu0 %v627
    %785 = vmatpush1.msra.mxu0 %v626
    %786 = vmatprep.subr.mxu0 %v634
    %787 = vmatpush1.msra.mxu0 %v633
    %788 = vmatprep.subr.mxu0 %v641
    %789 = vmatpush1.msra.mxu0 %v640
    %790 = vmatprep.subr.mxu0 %v676
    %791 = vmatpush1.msra.mxu0 %v673
    %792 = vmatprep.subr.mxu0 0.0
    %793 = vmatpush1.msra.mxu0 0.0
    %794 = vmatprep.subr.mxu0 0.0
    %795 = vmatpush1.msra.mxu0 0.0
    %796 = vmatprep.subr.mxu0 0.0
    %797 = vmatpush1.msra.mxu0 0.0
    %798 = vmatprep.subr.mxu0 0.0
    %799 = vmatpush1.msra.mxu0 0.0
    %800 = vmatprep.subr.mxu0 0.0
    %801 = vmatpush1.msra.mxu0 0.0
    %802 = vmatprep.subr.mxu0 0.0
    %803 = vmatpush1.msra.mxu0 0.0
    %804 = vmatprep.subr.mxu0 0.0
    %805 = vmatpush1.msra.mxu0 0.0
    %806 = vmatprep.subr.mxu0 0.0
    %807 = vmatpush1.msra.mxu0 0.0
    %808 = vmatprep.subr.mxu0 0.0
    %809 = vmatpush1.msra.mxu0 0.0
    %810 = vmatprep.subr.mxu0 0.0
    %811 = vmatpush1.msra.mxu0 0.0
    %812 = vmatprep.subr.mxu0 0.0
    %813 = vmatpush1.msra.mxu0 0.0
    %814 = vmatprep.subr.mxu0 0.0
    %815 = vmatpush1.msra.mxu0 0.0
    %816 = vmatprep.subr.mxu0 0.0
    %817 = vmatpush1.msra.mxu0 0.0
    %818 = vmatprep.subr.mxu0 0.0
    %819 = vmatpush1.msra.mxu0 0.0
    %820 = vmatprep.subr.mxu0 0.0
    %821 = vmatpush1.msra.mxu0 0.0
    %822 = vmatprep.mubr.f32.mxu0 %v663
    %823 = vmatmul.mubr.f32.gmra.mrb[0].mxu0 %v659
    %v824 = vpop.f32.mrb[0].mxu0
    %v825 = vadd.f32 0.0, %v824
    %v826 = vpop.f32.mrb[0].mxu0
    %v827 = vadd.f32 0.0, %v826
    %828 = vdwg.mxu0
    %829 = vmatprep.subr.mxu0 %v538
    %830 = vmatpush1.msra.mxu0 %v537
    %831 = vmatprep.subr.mxu0 %v545
    %832 = vmatpush1.msra.mxu0 %v544
    %833 = vmatprep.subr.mxu0 %v552
    %834 = vmatpush1.msra.mxu0 %v551
    %835 = vmatprep.subr.mxu0 %v559
    %836 = vmatpush1.msra.mxu0 %v558
    %837 = vmatprep.subr.mxu0 %v566
    %838 = vmatpush1.msra.mxu0 %v565
    %839 = vmatprep.subr.mxu0 %v573
    %840 = vmatpush1.msra.mxu0 %v572
    %841 = vmatprep.subr.mxu0 %v580
    %842 = vmatpush1.msra.mxu0 %v579
    %843 = vmatprep.subr.mxu0 %v587
    %844 = vmatpush1.msra.mxu0 %v586
    %845 = vmatprep.subr.mxu0 %v594
    %846 = vmatpush1.msra.mxu0 %v593
    %847 = vmatprep.subr.mxu0 %v601
    %848 = vmatpush1.msra.mxu0 %v600
    %849 = vmatprep.subr.mxu0 %v608
    %850 = vmatpush1.msra.mxu0 %v607
    %851 = vmatprep.subr.mxu0 %v615
    %852 = vmatpush1.msra.mxu0 %v614
    %853 = vmatprep.subr.mxu0 %v622
    %854 = vmatpush1.msra.mxu0 %v621
    %855 = vmatprep.subr.mxu0 %v629
    %856 = vmatpush1.msra.mxu0 %v628
    %857 = vmatprep.subr.mxu0 %v636
    %858 = vmatpush1.msra.mxu0 %v635
    %859 = vmatprep.subr.mxu0 %v643
    %860 = vmatpush1.msra.mxu0 %v642
    %861 = vmatprep.subr.mxu0 %v682
    %862 = vmatpush1.msra.mxu0 %v679
    %863 = vmatprep.subr.mxu0 0.0
    %864 = vmatpush1.msra.mxu0 0.0
    %865 = vmatprep.subr.mxu0 0.0
    %866 = vmatpush1.msra.mxu0 0.0
    %867 = vmatprep.subr.mxu0 0.0
    %868 = vmatpush1.msra.mxu0 0.0
    %869 = vmatprep.subr.mxu0 0.0
    %870 = vmatpush1.msra.mxu0 0.0
    %871 = vmatprep.subr.mxu0 0.0
    %872 = vmatpush1.msra.mxu0 0.0
    %873 = vmatprep.subr.mxu0 0.0
    %874 = vmatpush1.msra.mxu0 0.0
    %875 = vmatprep.subr.mxu0 0.0
    %876 = vmatpush1.msra.mxu0 0.0
    %877 = vmatprep.subr.mxu0 0.0
    %878 = vmatpush1.msra.mxu0 0.0
    %879 = vmatprep.subr.mxu0 0.0
    %880 = vmatpush1.msra.mxu0 0.0
    %881 = vmatprep.subr.mxu0 0.0
    %882 = vmatpush1.msra.mxu0 0.0
    %883 = vmatprep.subr.mxu0 0.0
    %884 = vmatpush1.msra.mxu0 0.0
    %885 = vmatprep.subr.mxu0 0.0
    %886 = vmatpush1.msra.mxu0 0.0
    %887 = vmatprep.subr.mxu0 0.0
    %888 = vmatpush1.msra.mxu0 0.0
    %889 = vmatprep.subr.mxu0 0.0
    %890 = vmatpush1.msra.mxu0 0.0
    %891 = vmatprep.subr.mxu0 0.0
    %892 = vmatpush1.msra.mxu0 0.0
    %893 = vmatprep.mubr.f32.mxu0 %v663
    %894 = vmatmul.mubr.f32.gmra.mrb[0].mxu0 %v659
    %v895 = vpop.f32.mrb[0].mxu0
    %v896 = vadd.f32 0.0, %v895
    %v897 = vpop.f32.mrb[0].mxu0
    %v898 = vadd.f32 0.0, %v897
    %899 = vdwg.mxu0
    %900 = vmatprep.subr.mxu0 0.0
    %901 = vmatpush1.msra.mxu0 %v539
    %902 = vmatprep.subr.mxu0 0.0
    %903 = vmatpush1.msra.mxu0 %v546
    %904 = vmatprep.subr.mxu0 0.0
    %905 = vmatpush1.msra.mxu0 %v553
    %906 = vmatprep.subr.mxu0 0.0
    %907 = vmatpush1.msra.mxu0 %v560
    %908 = vmatprep.subr.mxu0 0.0
    %909 = vmatpush1.msra.mxu0 %v567
    %910 = vmatprep.subr.mxu0 0.0
    %911 = vmatpush1.msra.mxu0 %v574
    %912 = vmatprep.subr.mxu0 0.0
    %913 = vmatpush1.msra.mxu0 %v581
    %914 = vmatprep.subr.mxu0 0.0
    %915 = vmatpush1.msra.mxu0 %v588
    %916 = vmatprep.subr.mxu0 0.0
    %917 = vmatpush1.msra.mxu0 %v595
    %918 = vmatprep.subr.mxu0 0.0
    %919 = vmatpush1.msra.mxu0 %v602
    %920 = vmatprep.subr.mxu0 0.0
    %921 = vmatpush1.msra.mxu0 %v609
    %922 = vmatprep.subr.mxu0 0.0
    %923 = vmatpush1.msra.mxu0 %v616
    %924 = vmatprep.subr.mxu0 0.0
    %925 = vmatpush1.msra.mxu0 %v623
    %926 = vmatprep.subr.mxu0 0.0
    %927 = vmatpush1.msra.mxu0 %v630
    %928 = vmatprep.subr.mxu0 0.0
    %929 = vmatpush1.msra.mxu0 %v637
    %930 = vmatprep.subr.mxu0 0.0
    %931 = vmatpush1.msra.mxu0 %v644
    %932 = vmatprep.subr.mxu0 0.0
    %933 = vmatpush1.msra.mxu0 %v685
    %934 = vmatprep.subr.mxu0 0.0
    %935 = vmatpush1.msra.mxu0 0.0
    %936 = vmatprep.subr.mxu0 0.0
    %937 = vmatpush1.msra.mxu0 0.0
    %938 = vmatprep.subr.mxu0 0.0
    %939 = vmatpush1.msra.mxu0 0.0
    %940 = vmatprep.subr.mxu0 0.0
    %941 = vmatpush1.msra.mxu0 0.0
    %942 = vmatprep.subr.mxu0 0.0
    %943 = vmatpush1.msra.mxu0 0.0
    %944 = vmatprep.subr.mxu0 0.0
    %945 = vmatpush1.msra.mxu0 0.0
    %946 = vmatprep.subr.mxu0 0.0
    %947 = vmatpush1.msra.mxu0 0.0
    %948 = vmatprep.subr.mxu0 0.0
    %949 = vmatpush1.msra.mxu0 0.0
    %950 = vmatprep.subr.mxu0 0.0
    %951 = vmatpush1.msra.mxu0 0.0
    %952 = vmatprep.subr.mxu0 0.0
    %953 = vmatpush1.msra.mxu0 0.0
    %954 = vmatprep.subr.mxu0 0.0
    %955 = vmatpush1.msra.mxu0 0.0
    %956 = vmatprep.subr.mxu0 0.0
    %957 = vmatpush1.msra.mxu0 0.0
    %958 = vmatprep.subr.mxu0 0.0
    %959 = vmatpush1.msra.mxu0 0.0
    %960 = vmatprep.subr.mxu0 0.0
    %961 = vmatpush1.msra.mxu0 0.0
    %962 = vmatprep.subr.mxu0 0.0
    %963 = vmatpush1.msra.mxu0 0.0
    %964 = vmatprep.mubr.f32.mxu0 %v663
    %965 = vmatmul.mubr.f32.gmra.mrb[0].mxu0 %v659
    %v966 = vpop.f32.mrb[0].mxu0
    %v967 = vadd.f32 0.0, %v966
    %v968 = vpop.f32.mrb[0].mxu0
    %969 = vdwg.mxu0
    %v970 = vadd.f32 %v317, %v754
    %v971 = vadd.f32 %v319, %v756
    %v972 = vadd.f32 %v388, %v825
    %v973 = vadd.f32 %v390, %v827
    %v974 = vadd.f32 %v459, %v896
    %v975 = vadd.f32 %v461, %v898
    %v976 = vadd.f32 %v530, %v967
    %v978 = vsel %vm224, %v530, 0
    %v981 = vsel %vm228, %v142, 0
    %983 = vmatprep.subr.mxu0 0.0
    %984 = vmatpush1.msra.mxu0 %v45
    %985 = vmatprep.subr.mxu0 0.0
    %986 = vmatpush1.msra.mxu0 %v46
    %987 = vmatprep.subr.mxu0 0.0
    %988 = vmatpush1.msra.mxu0 %v47
    %989 = vmatprep.subr.mxu0 0.0
    %990 = vmatpush1.msra.mxu0 %v48
    %991 = vmatprep.subr.mxu0 0.0
    %992 = vmatpush1.msra.mxu0 %v49
    %993 = vmatprep.subr.mxu0 0.0
    %994 = vmatpush1.msra.mxu0 %v50
    %995 = vmatprep.subr.mxu0 0.0
    %996 = vmatpush1.msra.mxu0 %v51
    %997 = vmatprep.subr.mxu0 0.0
    %998 = vmatpush1.msra.mxu0 %v52
    %999 = vmatprep.subr.mxu0 0.0
    %1000 = vmatpush1.msra.mxu0 %v53
    %1001 = vmatprep.subr.mxu0 0.0
    %1002 = vmatpush1.msra.mxu0 %v54
    %1003 = vmatprep.subr.mxu0 0.0
    %1004 = vmatpush1.msra.mxu0 %v55
    %1005 = vmatprep.subr.mxu0 0.0
    %1006 = vmatpush1.msra.mxu0 %v56
    %1007 = vmatprep.subr.mxu0 0.0
    %1008 = vmatpush1.msra.mxu0 %v57
    %1009 = vmatprep.subr.mxu0 0.0
    %1010 = vmatpush1.msra.mxu0 %v58
    %1011 = vmatprep.subr.mxu0 0.0
    %1012 = vmatpush1.msra.mxu0 %v59
    %1013 = vmatprep.subr.mxu0 0.0
    %1014 = vmatpush1.msra.mxu0 %v60
    %1015 = vmatprep.subr.mxu0 0.0
    %1016 = vmatpush1.msra.mxu0 %v61
    %1017 = vmatprep.subr.mxu0 0.0
    %1018 = vmatpush1.msra.mxu0 %v62
    %1019 = vmatprep.subr.mxu0 0.0
    %1020 = vmatpush1.msra.mxu0 %v63
    %1021 = vmatprep.subr.mxu0 0.0
    %1022 = vmatpush1.msra.mxu0 %v64
    %1023 = vmatprep.subr.mxu0 0.0
    %1024 = vmatpush1.msra.mxu0 %v65
    %1025 = vmatprep.subr.mxu0 0.0
    %1026 = vmatpush1.msra.mxu0 %v66
    %1027 = vmatprep.subr.mxu0 0.0
    %1028 = vmatpush1.msra.mxu0 %v67
    %1029 = vmatprep.subr.mxu0 0.0
    %1030 = vmatpush1.msra.mxu0 %v68
    %1031 = vmatprep.subr.mxu0 0.0
    %1032 = vmatpush1.msra.mxu0 %v69
    %1033 = vmatprep.subr.mxu0 0.0
    %1034 = vmatpush1.msra.mxu0 %v70
    %1035 = vmatprep.subr.mxu0 0.0
    %1036 = vmatpush1.msra.mxu0 %v71
    %1037 = vmatprep.subr.mxu0 0.0
    %1038 = vmatpush1.msra.mxu0 %v72
    %1039 = vmatprep.subr.mxu0 0.0
    %1040 = vmatpush1.msra.mxu0 %v73
    %1041 = vmatprep.subr.mxu0 0.0
    %1042 = vmatpush1.msra.mxu0 %v74
    %1043 = vmatprep.subr.mxu0 0.0
    %1044 = vmatpush1.msra.mxu0 %v75
    %1045 = vmatprep.subr.mxu0 0.0
    %1046 = vmatpush1.msra.mxu0 %v76
    %1047 = vmatprep.mubr.f32.mxu0 %v319
    %1048 = vmatmul.mubr.f32.gmra.mrb[0].mxu0 %v317
    %v1049 = vpop.f32.mrb[0].mxu0
    %v1050 = vadd.f32 0.0, %v1049
    %v1051 = vpop.f32.mrb[0].mxu0
    %1052 = vdwg.mxu0
    %1053 = vmatprep.subr.mxu0 0.0
    %1054 = vmatpush1.msra.mxu0 %v77
    %1055 = vmatprep.subr.mxu0 0.0
    %1056 = vmatpush1.msra.mxu0 %v78
    %1057 = vmatprep.subr.mxu0 0.0
    %1058 = vmatpush1.msra.mxu0 %v79
    %1059 = vmatprep.subr.mxu0 0.0
    %1060 = vmatpush1.msra.mxu0 %v80
    %1061 = vmatprep.subr.mxu0 0.0
    %1062 = vmatpush1.msra.mxu0 %v81
    %1063 = vmatprep.subr.mxu0 0.0
    %1064 = vmatpush1.msra.mxu0 %v82
    %1065 = vmatprep.subr.mxu0 0.0
    %1066 = vmatpush1.msra.mxu0 %v83
    %1067 = vmatprep.subr.mxu0 0.0
    %1068 = vmatpush1.msra.mxu0 %v84
    %1069 = vmatprep.subr.mxu0 0.0
    %1070 = vmatpush1.msra.mxu0 %v85
    %1071 = vmatprep.subr.mxu0 0.0
    %1072 = vmatpush1.msra.mxu0 %v86
    %1073 = vmatprep.subr.mxu0 0.0
    %1074 = vmatpush1.msra.mxu0 %v87
    %1075 = vmatprep.subr.mxu0 0.0
    %1076 = vmatpush1.msra.mxu0 %v88
    %1077 = vmatprep.subr.mxu0 0.0
    %1078 = vmatpush1.msra.mxu0 %v89
    %1079 = vmatprep.subr.mxu0 0.0
    %1080 = vmatpush1.msra.mxu0 %v90
    %1081 = vmatprep.subr.mxu0 0.0
    %1082 = vmatpush1.msra.mxu0 %v91
    %1083 = vmatprep.subr.mxu0 0.0
    %1084 = vmatpush1.msra.mxu0 %v92
    %1085 = vmatprep.subr.mxu0 0.0
    %1086 = vmatpush1.msra.mxu0 %v93
    %1087 = vmatprep.subr.mxu0 0.0
    %1088 = vmatpush1.msra.mxu0 %v94
    %1089 = vmatprep.subr.mxu0 0.0
    %1090 = vmatpush1.msra.mxu0 %v95
    %1091 = vmatprep.subr.mxu0 0.0
    %1092 = vmatpush1.msra.mxu0 %v96
    %1093 = vmatprep.subr.mxu0 0.0
    %1094 = vmatpush1.msra.mxu0 %v97
    %1095 = vmatprep.subr.mxu0 0.0
    %1096 = vmatpush1.msra.mxu0 %v98
    %1097 = vmatprep.subr.mxu0 0.0
    %1098 = vmatpush1.msra.mxu0 %v99
    %1099 = vmatprep.subr.mxu0 0.0
    %1100 = vmatpush1.msra.mxu0 %v100
    %1101 = vmatprep.subr.mxu0 0.0
    %1102 = vmatpush1.msra.mxu0 %v101
    %1103 = vmatprep.subr.mxu0 0.0
    %1104 = vmatpush1.msra.mxu0 %v102
    %1105 = vmatprep.subr.mxu0 0.0
    %1106 = vmatpush1.msra.mxu0 %v103
    %1107 = vmatprep.subr.mxu0 0.0
    %1108 = vmatpush1.msra.mxu0 %v104
    %1109 = vmatprep.subr.mxu0 0.0
    %1110 = vmatpush1.msra.mxu0 %v105
    %1111 = vmatprep.subr.mxu0 0.0
    %1112 = vmatpush1.msra.mxu0 %v106
    %1113 = vmatprep.subr.mxu0 0.0
    %1114 = vmatpush1.msra.mxu0 %v107
    %1115 = vmatprep.subr.mxu0 0.0
    %1116 = vmatpush1.msra.mxu0 %v108
    %1117 = vmatprep.mubr.f32.mxu0 %v390
    %1118 = vmatmul.mubr.f32.gmra.mrb[0].mxu0 %v388
    %v1119 = vpop.f32.mrb[0].mxu0
    %v1120 = vadd.f32 %v1050, %v1119
    %v1121 = vpop.f32.mrb[0].mxu0
    %1122 = vdwg.mxu0
    %1123 = vmatprep.subr.mxu0 0.0
    %1124 = vmatpush1.msra.mxu0 %v109
    %1125 = vmatprep.subr.mxu0 0.0
    %1126 = vmatpush1.msra.mxu0 %v110
    %1127 = vmatprep.subr.mxu0 0.0
    %1128 = vmatpush1.msra.mxu0 %v111
    %1129 = vmatprep.subr.mxu0 0.0
    %1130 = vmatpush1.msra.mxu0 %v112
    %1131 = vmatprep.subr.mxu0 0.0
    %1132 = vmatpush1.msra.mxu0 %v113
    %1133 = vmatprep.subr.mxu0 0.0
    %1134 = vmatpush1.msra.mxu0 %v114
    %1135 = vmatprep.subr.mxu0 0.0
    %1136 = vmatpush1.msra.mxu0 %v115
    %1137 = vmatprep.subr.mxu0 0.0
    %1138 = vmatpush1.msra.mxu0 %v116
    %1139 = vmatprep.subr.mxu0 0.0
    %1140 = vmatpush1.msra.mxu0 %v117
    %1141 = vmatprep.subr.mxu0 0.0
    %1142 = vmatpush1.msra.mxu0 %v118
    %1143 = vmatprep.subr.mxu0 0.0
    %1144 = vmatpush1.msra.mxu0 %v119
    %1145 = vmatprep.subr.mxu0 0.0
    %1146 = vmatpush1.msra.mxu0 %v120
    %1147 = vmatprep.subr.mxu0 0.0
    %1148 = vmatpush1.msra.mxu0 %v121
    %1149 = vmatprep.subr.mxu0 0.0
    %1150 = vmatpush1.msra.mxu0 %v122
    %1151 = vmatprep.subr.mxu0 0.0
    %1152 = vmatpush1.msra.mxu0 %v123
    %1153 = vmatprep.subr.mxu0 0.0
    %1154 = vmatpush1.msra.mxu0 %v124
    %1155 = vmatprep.subr.mxu0 0.0
    %1156 = vmatpush1.msra.mxu0 %v125
    %1157 = vmatprep.subr.mxu0 0.0
    %1158 = vmatpush1.msra.mxu0 %v126
    %1159 = vmatprep.subr.mxu0 0.0
    %1160 = vmatpush1.msra.mxu0 %v127
    %1161 = vmatprep.subr.mxu0 0.0
    %1162 = vmatpush1.msra.mxu0 %v128
    %1163 = vmatprep.subr.mxu0 0.0
    %1164 = vmatpush1.msra.mxu0 %v129
    %1165 = vmatprep.subr.mxu0 0.0
    %1166 = vmatpush1.msra.mxu0 %v130
    %1167 = vmatprep.subr.mxu0 0.0
    %1168 = vmatpush1.msra.mxu0 %v131
    %1169 = vmatprep.subr.mxu0 0.0
    %1170 = vmatpush1.msra.mxu0 %v132
    %1171 = vmatprep.subr.mxu0 0.0
    %1172 = vmatpush1.msra.mxu0 %v133
    %1173 = vmatprep.subr.mxu0 0.0
    %1174 = vmatpush1.msra.mxu0 %v134
    %1175 = vmatprep.subr.mxu0 0.0
    %1176 = vmatpush1.msra.mxu0 %v135
    %1177 = vmatprep.subr.mxu0 0.0
    %1178 = vmatpush1.msra.mxu0 %v136
    %1179 = vmatprep.subr.mxu0 0.0
    %1180 = vmatpush1.msra.mxu0 %v137
    %1181 = vmatprep.subr.mxu0 0.0
    %1182 = vmatpush1.msra.mxu0 %v138
    %1183 = vmatprep.subr.mxu0 0.0
    %1184 = vmatpush1.msra.mxu0 %v139
    %1185 = vmatprep.subr.mxu0 0.0
    %1186 = vmatpush1.msra.mxu0 %v140
    %1187 = vmatprep.mubr.f32.mxu0 %v461
    %1188 = vmatmul.mubr.f32.gmra.mrb[0].mxu0 %v459
    %v1189 = vpop.f32.mrb[0].mxu0
    %v1190 = vadd.f32 %v1120, %v1189
    %v1191 = vpop.f32.mrb[0].mxu0
    %1192 = vdwg.mxu0
    %1193 = vmatprep.subr.mxu0 0.0
    %1194 = vmatpush1.msra.mxu0 %v141
    %1195 = vmatprep.subr.mxu0 0.0
    %1196 = vmatpush1.msra.mxu0 %v981
    %1197 = vmatprep.subr.mxu0 0.0
    %1198 = vmatpush1.msra.mxu0 0.0
    %1199 = vmatprep.subr.mxu0 0.0
    %1200 = vmatpush1.msra.mxu0 0.0
    %1201 = vmatprep.subr.mxu0 0.0
    %1202 = vmatpush1.msra.mxu0 0.0
    %1203 = vmatprep.subr.mxu0 0.0
    %1204 = vmatpush1.msra.mxu0 0.0
    %1205 = vmatprep.subr.mxu0 0.0
    %1206 = vmatpush1.msra.mxu0 0.0
    %1207 = vmatprep.subr.mxu0 0.0
    %1208 = vmatpush1.msra.mxu0 0.0
    %1209 = vmatprep.subr.mxu0 0.0
    %1210 = vmatpush1.msra.mxu0 0.0
    %1211 = vmatprep.subr.mxu0 0.0
    %1212 = vmatpush1.msra.mxu0 0.0
    %1213 = vmatprep.subr.mxu0 0.0
    %1214 = vmatpush1.msra.mxu0 0.0
    %1215 = vmatprep.subr.mxu0 0.0
    %1216 = vmatpush1.msra.mxu0 0.0
    %1217 = vmatprep.subr.mxu0 0.0
    %1218 = vmatpush1.msra.mxu0 0.0
    %1219 = vmatprep.subr.mxu0 0.0
    %1220 = vmatpush1.msra.mxu0 0.0
    %1221 = vmatprep.subr.mxu0 0.0
    %1222 = vmatpush1.msra.mxu0 0.0
    %1223 = vmatprep.subr.mxu0 0.0
    %1224 = vmatpush1.msra.mxu0 0.0
    %1225 = vmatprep.subr.mxu0 0.0
    %1226 = vmatpush1.msra.mxu0 0.0
    %1227 = vmatprep.subr.mxu0 0.0
    %1228 = vmatpush1.msra.mxu0 0.0
    %1229 = vmatprep.subr.mxu0 0.0
    %1230 = vmatpush1.msra.mxu0 0.0
    %1231 = vmatprep.subr.mxu0 0.0
    %1232 = vmatpush1.msra.mxu0 0.0
    %1233 = vmatprep.subr.mxu0 0.0
    %1234 = vmatpush1.msra.mxu0 0.0
    %1235 = vmatprep.subr.mxu0 0.0
    %1236 = vmatpush1.msra.mxu0 0.0
    %1237 = vmatprep.subr.mxu0 0.0
    %1238 = vmatpush1.msra.mxu0 0.0
    %1239 = vmatprep.subr.mxu0 0.0
    %1240 = vmatpush1.msra.mxu0 0.0
    %1241 = vmatprep.subr.mxu0 0.0
    %1242 = vmatpush1.msra.mxu0 0.0
    %1243 = vmatprep.subr.mxu0 0.0
    %1244 = vmatpush1.msra.mxu0 0.0
    %1245 = vmatprep.subr.mxu0 0.0
    %1246 = vmatpush1.msra.mxu0 0.0
    %1247 = vmatprep.subr.mxu0 0.0
    %1248 = vmatpush1.msra.mxu0 0.0
    %1249 = vmatprep.subr.mxu0 0.0
    %1250 = vmatpush1.msra.mxu0 0.0
    %1251 = vmatprep.subr.mxu0 0.0
    %1252 = vmatpush1.msra.mxu0 0.0
    %1253 = vmatprep.subr.mxu0 0.0
    %1254 = vmatpush1.msra.mxu0 0.0
    %1255 = vmatprep.subr.mxu0 0.0
    %1256 = vmatpush1.msra.mxu0 0.0
    %1257 = vmatprep.mubr.f32.mxu0 0.0
    %1258 = vmatmul.mubr.f32.gmra.mrb[0].mxu0 %v978
    %v1259 = vpop.f32.mrb[0].mxu0
    %v1260 = vadd.f32 %v1190, %v1259
    %v1261 = vpop.f32.mrb[0].mxu0
    %1262 = vdwg.mxu0
    %s1263 = scalar_lea.vmem %s2, 112
    %v1264 = vld [vmem:[%s1263] sm:$0xff]
    %v1265 = vld [vmem:[%s1263 + $0x8] sm:$0xff]
    %v1266 = vld [vmem:[%s1263 + $0x10] sm:$0xff]
    %v1267 = vld [vmem:[%s1263 + $0x18] sm:$0xff]
    %v1268 = vld [vmem:[%s1263 + $0x20] sm:$0xff]
    %v1269 = vld [vmem:[%s1263 + $0x28] sm:$0xff]
    %v1270 = vld [vmem:[%s1263 + $0x30] sm:$0xff]
    %v1271 = vld [vmem:[%s1263 + $0x38] sm:$0x3]
    %v1272 = vld [vmem:[%s1263 + $0x40] sm:$0x3]
    %v1273 = vld [vmem:[%s1263 + $0x48] sm:$0x3]
    %v1274 = vld [vmem:[%s1263 + $0x50] sm:$0x3]
    %v1275 = vld [vmem:[%s1263 + $0x58] sm:$0x3]
    %v1276 = vld [vmem:[%s1263 + $0x60] sm:$0x3]
    %v1277 = vld [vmem:[%s1263 + $0x68] sm:$0x3]
    %v1278 = vlaneseq
    %v1279 = vshrl.u32 %v1278, 7
    %v1280 = vsub.s32 1, %v1279
    %v1281 = vrot.slane %v41, %v1280
    %v1282 = vlaneseq
    %v1283 = vshrl.u32 %v1282, 7
    %v1284 = vsub.s32 5, %v1283
    %v1285 = vrot.slane %v41, %v1284
    %v1286 = vlaneseq
    %v1287 = vshrl.u32 %v1286, 7
    %v1288 = vsub.s32 1, %v1287
    %v1289 = vrot.slane %v42, %v1288
    %v1290 = vlaneseq
    %v1291 = vshrl.u32 %v1290, 7
    %v1292 = vsub.s32 5, %v1291
    %v1293 = vrot.slane %v42, %v1292
    %v1294 = vlaneseq
    %v1295 = vshrl.u32 %v1294, 7
    %v1296 = vsub.s32 1, %v1295
    %v1297 = vrot.slane %v43, %v1296
    %v1298 = vlaneseq
    %v1299 = vshrl.u32 %v1298, 7
    %v1300 = vsub.s32 5, %v1299
    %v1301 = vrot.slane %v43, %v1300
    %v1302 = vlaneseq
    %v1303 = vshrl.u32 %v1302, 7
    %v1304 = vsub.s32 1, %v1303
    %v1305 = vrot.slane %v44, %v1304
    %v1313 = vlaneseq
    %v1314 = vshrl.u32 %v1313, 7
    %v1315 = vsub.s32 1, %v1314
    %v1316 = vrot.slane %v1281, %v1315
    %v1317 = vlaneseq
    %v1318 = vshrl.u32 %v1317, 7
    %v1319 = vsub.s32 1, %v1318
    %v1320 = vrot.slane %v1285, %v1319
    %v1321 = vlaneseq
    %v1322 = vshrl.u32 %v1321, 7
    %v1323 = vsub.s32 1, %v1322
    %v1324 = vrot.slane %v1289, %v1323
    %v1325 = vlaneseq
    %v1326 = vshrl.u32 %v1325, 7
    %v1327 = vsub.s32 1, %v1326
    %v1328 = vrot.slane %v1293, %v1327
    %v1329 = vlaneseq
    %v1330 = vshrl.u32 %v1329, 7
    %v1331 = vsub.s32 1, %v1330
    %v1332 = vrot.slane %v1297, %v1331
    %v1333 = vlaneseq
    %v1334 = vshrl.u32 %v1333, 7
    %v1335 = vsub.s32 1, %v1334
    %v1336 = vrot.slane %v1301, %v1335
    %v1337 = vlaneseq
    %v1338 = vshrl.u32 %v1337, 7
    %v1339 = vsub.s32 1, %v1338
    %v1340 = vrot.slane %v1305, %v1339
    %v1342 = vsel %vm228, %v1271, 0
    %v1345 = vsel %vm228, %v1272, 0
    %v1348 = vsel %vm228, %v1273, 0
    %v1351 = vsel %vm228, %v1274, 0
    %v1354 = vsel %vm228, %v1275, 0
    %v1357 = vsel %vm228, %v1276, 0
    %v1360 = vsel %vm228, %v1277, 0
    %1362 = vmatprep.subr.mxu0 %v1265
    %1363 = vmatpush1.msra.mxu0 %v1264
    %1364 = vmatprep.subr.mxu0 %v1345
    %1365 = vmatpush1.msra.mxu0 %v1342
    %1366 = vmatprep.subr.mxu0 0.0
    %1367 = vmatpush1.msra.mxu0 0.0
    %1368 = vmatprep.subr.mxu0 0.0
    %1369 = vmatpush1.msra.mxu0 0.0
    %1370 = vmatprep.subr.mxu0 0.0
    %1371 = vmatpush1.msra.mxu0 0.0
    %1372 = vmatprep.subr.mxu0 0.0
    %1373 = vmatpush1.msra.mxu0 0.0
    %1374 = vmatprep.subr.mxu0 0.0
    %1375 = vmatpush1.msra.mxu0 0.0
    %1376 = vmatprep.subr.mxu0 0.0
    %1377 = vmatpush1.msra.mxu0 0.0
    %1378 = vmatprep.subr.mxu0 0.0
    %1379 = vmatpush1.msra.mxu0 0.0
    %1380 = vmatprep.subr.mxu0 0.0
    %1381 = vmatpush1.msra.mxu0 0.0
    %1382 = vmatprep.subr.mxu0 0.0
    %1383 = vmatpush1.msra.mxu0 0.0
    %1384 = vmatprep.subr.mxu0 0.0
    %1385 = vmatpush1.msra.mxu0 0.0
    %1386 = vmatprep.subr.mxu0 0.0
    %1387 = vmatpush1.msra.mxu0 0.0
    %1388 = vmatprep.subr.mxu0 0.0
    %1389 = vmatpush1.msra.mxu0 0.0
    %1390 = vmatprep.subr.mxu0 0.0
    %1391 = vmatpush1.msra.mxu0 0.0
    %1392 = vmatprep.subr.mxu0 0.0
    %1393 = vmatpush1.msra.mxu0 0.0
    %1394 = vmatprep.subr.mxu0 0.0
    %1395 = vmatpush1.msra.mxu0 0.0
    %1396 = vmatprep.subr.mxu0 0.0
    %1397 = vmatpush1.msra.mxu0 0.0
    %1398 = vmatprep.subr.mxu0 0.0
    %1399 = vmatpush1.msra.mxu0 0.0
    %1400 = vmatprep.subr.mxu0 0.0
    %1401 = vmatpush1.msra.mxu0 0.0
    %1402 = vmatprep.subr.mxu0 0.0
    %1403 = vmatpush1.msra.mxu0 0.0
    %1404 = vmatprep.subr.mxu0 0.0
    %1405 = vmatpush1.msra.mxu0 0.0
    %1406 = vmatprep.subr.mxu0 0.0
    %1407 = vmatpush1.msra.mxu0 0.0
    %1408 = vmatprep.subr.mxu0 0.0
    %1409 = vmatpush1.msra.mxu0 0.0
    %1410 = vmatprep.subr.mxu0 0.0
    %1411 = vmatpush1.msra.mxu0 0.0
    %1412 = vmatprep.subr.mxu0 0.0
    %1413 = vmatpush1.msra.mxu0 0.0
    %1414 = vmatprep.subr.mxu0 0.0
    %1415 = vmatpush1.msra.mxu0 0.0
    %1416 = vmatprep.subr.mxu0 0.0
    %1417 = vmatpush1.msra.mxu0 0.0
    %1418 = vmatprep.subr.mxu0 0.0
    %1419 = vmatpush1.msra.mxu0 0.0
    %1420 = vmatprep.subr.mxu0 0.0
    %1421 = vmatpush1.msra.mxu0 0.0
    %1422 = vmatprep.subr.mxu0 0.0
    %1423 = vmatpush1.msra.mxu0 0.0
    %1424 = vmatprep.subr.mxu0 0.0
    %1425 = vmatpush1.msra.mxu0 0.0
    %1426 = vmatprep.mubr.f32.mxu0 0.0
    %1427 = vmatmul.mubr.f32.gmra.mrb[0].mxu0 %v226
    %v1428 = vpop.f32.mrb[0].mxu0
    %v1429 = vadd.f32 %v1316, %v1428
    %v1430 = vpop.f32.mrb[0].mxu0
    %v1431 = vadd.f32 %v1320, %v1430
    %1432 = vdwg.mxu0
    %1433 = vmatprep.subr.mxu0 %v1267
    %1434 = vmatpush1.msra.mxu0 %v1266
    %1435 = vmatprep.subr.mxu0 %v1351
    %1436 = vmatpush1.msra.mxu0 %v1348
    %1437 = vmatprep.subr.mxu0 0.0
    %1438 = vmatpush1.msra.mxu0 0.0
    %1439 = vmatprep.subr.mxu0 0.0
    %1440 = vmatpush1.msra.mxu0 0.0
    %1441 = vmatprep.subr.mxu0 0.0
    %1442 = vmatpush1.msra.mxu0 0.0
    %1443 = vmatprep.subr.mxu0 0.0
    %1444 = vmatpush1.msra.mxu0 0.0
    %1445 = vmatprep.subr.mxu0 0.0
    %1446 = vmatpush1.msra.mxu0 0.0
    %1447 = vmatprep.subr.mxu0 0.0
    %1448 = vmatpush1.msra.mxu0 0.0
    %1449 = vmatprep.subr.mxu0 0.0
    %1450 = vmatpush1.msra.mxu0 0.0
    %1451 = vmatprep.subr.mxu0 0.0
    %1452 = vmatpush1.msra.mxu0 0.0
    %1453 = vmatprep.subr.mxu0 0.0
    %1454 = vmatpush1.msra.mxu0 0.0
    %1455 = vmatprep.subr.mxu0 0.0
    %1456 = vmatpush1.msra.mxu0 0.0
    %1457 = vmatprep.subr.mxu0 0.0
    %1458 = vmatpush1.msra.mxu0 0.0
    %1459 = vmatprep.subr.mxu0 0.0
    %1460 = vmatpush1.msra.mxu0 0.0
    %1461 = vmatprep.subr.mxu0 0.0
    %1462 = vmatpush1.msra.mxu0 0.0
    %1463 = vmatprep.subr.mxu0 0.0
    %1464 = vmatpush1.msra.mxu0 0.0
    %1465 = vmatprep.subr.mxu0 0.0
    %1466 = vmatpush1.msra.mxu0 0.0
    %1467 = vmatprep.subr.mxu0 0.0
    %1468 = vmatpush1.msra.mxu0 0.0
    %1469 = vmatprep.subr.mxu0 0.0
    %1470 = vmatpush1.msra.mxu0 0.0
    %1471 = vmatprep.subr.mxu0 0.0
    %1472 = vmatpush1.msra.mxu0 0.0
    %1473 = vmatprep.subr.mxu0 0.0
    %1474 = vmatpush1.msra.mxu0 0.0
    %1475 = vmatprep.subr.mxu0 0.0
    %1476 = vmatpush1.msra.mxu0 0.0
    %1477 = vmatprep.subr.mxu0 0.0
    %1478 = vmatpush1.msra.mxu0 0.0
    %1479 = vmatprep.subr.mxu0 0.0
    %1480 = vmatpush1.msra.mxu0 0.0
    %1481 = vmatprep.subr.mxu0 0.0
    %1482 = vmatpush1.msra.mxu0 0.0
    %1483 = vmatprep.subr.mxu0 0.0
    %1484 = vmatpush1.msra.mxu0 0.0
    %1485 = vmatprep.subr.mxu0 0.0
    %1486 = vmatpush1.msra.mxu0 0.0
    %1487 = vmatprep.subr.mxu0 0.0
    %1488 = vmatpush1.msra.mxu0 0.0
    %1489 = vmatprep.subr.mxu0 0.0
    %1490 = vmatpush1.msra.mxu0 0.0
    %1491 = vmatprep.subr.mxu0 0.0
    %1492 = vmatpush1.msra.mxu0 0.0
    %1493 = vmatprep.subr.mxu0 0.0
    %1494 = vmatpush1.msra.mxu0 0.0
    %1495 = vmatprep.subr.mxu0 0.0
    %1496 = vmatpush1.msra.mxu0 0.0
    %1497 = vmatprep.mubr.f32.mxu0 0.0
    %1498 = vmatmul.mubr.f32.gmra.mrb[0].mxu0 %v226
    %v1499 = vpop.f32.mrb[0].mxu0
    %v1500 = vadd.f32 %v1324, %v1499
    %v1501 = vpop.f32.mrb[0].mxu0
    %v1502 = vadd.f32 %v1328, %v1501
    %1503 = vdwg.mxu0
    %1504 = vmatprep.subr.mxu0 %v1269
    %1505 = vmatpush1.msra.mxu0 %v1268
    %1506 = vmatprep.subr.mxu0 %v1357
    %1507 = vmatpush1.msra.mxu0 %v1354
    %1508 = vmatprep.subr.mxu0 0.0
    %1509 = vmatpush1.msra.mxu0 0.0
    %1510 = vmatprep.subr.mxu0 0.0
    %1511 = vmatpush1.msra.mxu0 0.0
    %1512 = vmatprep.subr.mxu0 0.0
    %1513 = vmatpush1.msra.mxu0 0.0
    %1514 = vmatprep.subr.mxu0 0.0
    %1515 = vmatpush1.msra.mxu0 0.0
    %1516 = vmatprep.subr.mxu0 0.0
    %1517 = vmatpush1.msra.mxu0 0.0
    %1518 = vmatprep.subr.mxu0 0.0
    %1519 = vmatpush1.msra.mxu0 0.0
    %1520 = vmatprep.subr.mxu0 0.0
    %1521 = vmatpush1.msra.mxu0 0.0
    %1522 = vmatprep.subr.mxu0 0.0
    %1523 = vmatpush1.msra.mxu0 0.0
    %1524 = vmatprep.subr.mxu0 0.0
    %1525 = vmatpush1.msra.mxu0 0.0
    %1526 = vmatprep.subr.mxu0 0.0
    %1527 = vmatpush1.msra.mxu0 0.0
    %1528 = vmatprep.subr.mxu0 0.0
    %1529 = vmatpush1.msra.mxu0 0.0
    %1530 = vmatprep.subr.mxu0 0.0
    %1531 = vmatpush1.msra.mxu0 0.0
    %1532 = vmatprep.subr.mxu0 0.0
    %1533 = vmatpush1.msra.mxu0 0.0
    %1534 = vmatprep.subr.mxu0 0.0
    %1535 = vmatpush1.msra.mxu0 0.0
    %1536 = vmatprep.subr.mxu0 0.0
    %1537 = vmatpush1.msra.mxu0 0.0
    %1538 = vmatprep.subr.mxu0 0.0
    %1539 = vmatpush1.msra.mxu0 0.0
    %1540 = vmatprep.subr.mxu0 0.0
    %1541 = vmatpush1.msra.mxu0 0.0
    %1542 = vmatprep.subr.mxu0 0.0
    %1543 = vmatpush1.msra.mxu0 0.0
    %1544 = vmatprep.subr.mxu0 0.0
    %1545 = vmatpush1.msra.mxu0 0.0
    %1546 = vmatprep.subr.mxu0 0.0
    %1547 = vmatpush1.msra.mxu0 0.0
    %1548 = vmatprep.subr.mxu0 0.0
    %1549 = vmatpush1.msra.mxu0 0.0
    %1550 = vmatprep.subr.mxu0 0.0
    %1551 = vmatpush1.msra.mxu0 0.0
    %1552 = vmatprep.subr.mxu0 0.0
    %1553 = vmatpush1.msra.mxu0 0.0
    %1554 = vmatprep.subr.mxu0 0.0
    %1555 = vmatpush1.msra.mxu0 0.0
    %1556 = vmatprep.subr.mxu0 0.0
    %1557 = vmatpush1.msra.mxu0 0.0
    %1558 = vmatprep.subr.mxu0 0.0
    %1559 = vmatpush1.msra.mxu0 0.0
    %1560 = vmatprep.subr.mxu0 0.0
    %1561 = vmatpush1.msra.mxu0 0.0
    %1562 = vmatprep.subr.mxu0 0.0
    %1563 = vmatpush1.msra.mxu0 0.0
    %1564 = vmatprep.subr.mxu0 0.0
    %1565 = vmatpush1.msra.mxu0 0.0
    %1566 = vmatprep.subr.mxu0 0.0
    %1567 = vmatpush1.msra.mxu0 0.0
    %1568 = vmatprep.mubr.f32.mxu0 0.0
    %1569 = vmatmul.mubr.f32.gmra.mrb[0].mxu0 %v226
    %v1570 = vpop.f32.mrb[0].mxu0
    %v1571 = vadd.f32 %v1332, %v1570
    %v1572 = vpop.f32.mrb[0].mxu0
    %v1573 = vadd.f32 %v1336, %v1572
    %1574 = vdwg.mxu0
    %1575 = vmatprep.subr.mxu0 0.0
    %1576 = vmatpush1.msra.mxu0 %v1270
    %1577 = vmatprep.subr.mxu0 0.0
    %1578 = vmatpush1.msra.mxu0 %v1360
    %1579 = vmatprep.subr.mxu0 0.0
    %1580 = vmatpush1.msra.mxu0 0.0
    %1581 = vmatprep.subr.mxu0 0.0
    %1582 = vmatpush1.msra.mxu0 0.0
    %1583 = vmatprep.subr.mxu0 0.0
    %1584 = vmatpush1.msra.mxu0 0.0
    %1585 = vmatprep.subr.mxu0 0.0
    %1586 = vmatpush1.msra.mxu0 0.0
    %1587 = vmatprep.subr.mxu0 0.0
    %1588 = vmatpush1.msra.mxu0 0.0
    %1589 = vmatprep.subr.mxu0 0.0
    %1590 = vmatpush1.msra.mxu0 0.0
    %1591 = vmatprep.subr.mxu0 0.0
    %1592 = vmatpush1.msra.mxu0 0.0
    %1593 = vmatprep.subr.mxu0 0.0
    %1594 = vmatpush1.msra.mxu0 0.0
    %1595 = vmatprep.subr.mxu0 0.0
    %1596 = vmatpush1.msra.mxu0 0.0
    %1597 = vmatprep.subr.mxu0 0.0
    %1598 = vmatpush1.msra.mxu0 0.0
    %1599 = vmatprep.subr.mxu0 0.0
    %1600 = vmatpush1.msra.mxu0 0.0
    %1601 = vmatprep.subr.mxu0 0.0
    %1602 = vmatpush1.msra.mxu0 0.0
    %1603 = vmatprep.subr.mxu0 0.0
    %1604 = vmatpush1.msra.mxu0 0.0
    %1605 = vmatprep.subr.mxu0 0.0
    %1606 = vmatpush1.msra.mxu0 0.0
    %1607 = vmatprep.subr.mxu0 0.0
    %1608 = vmatpush1.msra.mxu0 0.0
    %1609 = vmatprep.subr.mxu0 0.0
    %1610 = vmatpush1.msra.mxu0 0.0
    %1611 = vmatprep.subr.mxu0 0.0
    %1612 = vmatpush1.msra.mxu0 0.0
    %1613 = vmatprep.subr.mxu0 0.0
    %1614 = vmatpush1.msra.mxu0 0.0
    %1615 = vmatprep.subr.mxu0 0.0
    %1616 = vmatpush1.msra.mxu0 0.0
    %1617 = vmatprep.subr.mxu0 0.0
    %1618 = vmatpush1.msra.mxu0 0.0
    %1619 = vmatprep.subr.mxu0 0.0
    %1620 = vmatpush1.msra.mxu0 0.0
    %1621 = vmatprep.subr.mxu0 0.0
    %1622 = vmatpush1.msra.mxu0 0.0
    %1623 = vmatprep.subr.mxu0 0.0
    %1624 = vmatpush1.msra.mxu0 0.0
    %1625 = vmatprep.subr.mxu0 0.0
    %1626 = vmatpush1.msra.mxu0 0.0
    %1627 = vmatprep.subr.mxu0 0.0
    %1628 = vmatpush1.msra.mxu0 0.0
    %1629 = vmatprep.subr.mxu0 0.0
    %1630 = vmatpush1.msra.mxu0 0.0
    %1631 = vmatprep.subr.mxu0 0.0
    %1632 = vmatpush1.msra.mxu0 0.0
    %1633 = vmatprep.subr.mxu0 0.0
    %1634 = vmatpush1.msra.mxu0 0.0
    %1635 = vmatprep.subr.mxu0 0.0
    %1636 = vmatpush1.msra.mxu0 0.0
    %1637 = vmatprep.subr.mxu0 0.0
    %1638 = vmatpush1.msra.mxu0 0.0
    %1639 = vmatprep.mubr.f32.mxu0 0.0
    %1640 = vmatmul.mubr.f32.gmra.mrb[0].mxu0 %v226
    %v1641 = vpop.f32.mrb[0].mxu0
    %v1642 = vadd.f32 %v1340, %v1641
    %v1643 = vpop.f32.mrb[0].mxu0
    %1644 = vdwg.mxu0
    %s1645 = scalar_lea.vmem %s4, 952
    %v1646 = vld [vmem:[%s1645] sm:$0xff]
    %v1647 = vld [vmem:[%s1645 + $0x8] sm:$0xff]
    %v1648 = vld [vmem:[%s1645 + $0x10] sm:$0xff]
    %v1649 = vld [vmem:[%s1645 + $0x18] sm:$0xff]
    %v1650 = vld [vmem:[%s1645 + $0x20] sm:$0xff]
    %v1651 = vld [vmem:[%s1645 + $0x28] sm:$0xff]
    %v1652 = vld [vmem:[%s1645 + $0x30] sm:$0xff]
    %v1653 = vld [vmem:[%s1645 + $0x38] sm:$0xff]
    %v1654 = vld [vmem:[%s1645 + $0x40] sm:$0xff]
    %v1655 = vld [vmem:[%s1645 + $0x48] sm:$0xff]
    %v1656 = vld [vmem:[%s1645 + $0x50] sm:$0xff]
    %v1657 = vld [vmem:[%s1645 + $0x58] sm:$0xff]
    %v1658 = vld [vmem:[%s1645 + $0x60] sm:$0xff]
    %v1659 = vld [vmem:[%s1645 + $0x68] sm:$0xff]
    %v1660 = vld [vmem:[%s1645 + $0x70] sm:$0xff]
    %v1661 = vld [vmem:[%s1645 + $0x78] sm:$0xff]
    %v1662 = vld [vmem:[%s1645 + $0x80] sm:$0xff]
    %v1663 = vld [vmem:[%s1645 + $0x88] sm:$0xff]
    %v1664 = vld [vmem:[%s1645 + $0x90] sm:$0xff]
    %v1665 = vld [vmem:[%s1645 + $0x98] sm:$0xff]
    %v1666 = vld [vmem:[%s1645 + $0xa0] sm:$0xff]
    %v1667 = vld [vmem:[%s1645 + $0xa8] sm:$0xff]
    %v1668 = vld [vmem:[%s1645 + $0xb0] sm:$0xff]
    %v1669 = vld [vmem:[%s1645 + $0xb8] sm:$0xff]
    %v1670 = vld [vmem:[%s1645 + $0xc0] sm:$0xff]
    %v1671 = vld [vmem:[%s1645 + $0xc8] sm:$0xff]
    %v1672 = vld [vmem:[%s1645 + $0xd0] sm:$0xff]
    %v1673 = vld [vmem:[%s1645 + $0xd8] sm:$0xff]
    %v1674 = vld [vmem:[%s1645 + $0xe0] sm:$0xff]
    %v1675 = vld [vmem:[%s1645 + $0xe8] sm:$0xff]
    %v1676 = vld [vmem:[%s1645 + $0xf0] sm:$0xff]
    %v1677 = vld [vmem:[%s1645 + $0xf8] sm:$0xff]
    %v1678 = vld [vmem:[%s1645 + $0x100] sm:$0xff]
    %v1679 = vld [vmem:[%s1645 + $0x108] sm:$0xff]
    %v1680 = vld [vmem:[%s1645 + $0x110] sm:$0xff]
    %v1681 = vld [vmem:[%s1645 + $0x118] sm:$0xff]
    %v1682 = vld [vmem:[%s1645 + $0x120] sm:$0xff]
    %v1683 = vld [vmem:[%s1645 + $0x128] sm:$0xff]
    %v1684 = vld [vmem:[%s1645 + $0x130] sm:$0xff]
    %v1685 = vld [vmem:[%s1645 + $0x138] sm:$0xff]
    %v1686 = vld [vmem:[%s1645 + $0x140] sm:$0xff]
    %v1687 = vld [vmem:[%s1645 + $0x148] sm:$0xff]
    %v1688 = vld [vmem:[%s1645 + $0x150] sm:$0xff]
    %v1689 = vld [vmem:[%s1645 + $0x158] sm:$0xff]
    %v1690 = vld [vmem:[%s1645 + $0x160] sm:$0xff]
    %v1691 = vld [vmem:[%s1645 + $0x168] sm:$0xff]
    %v1692 = vld [vmem:[%s1645 + $0x170] sm:$0xff]
    %v1693 = vld [vmem:[%s1645 + $0x178] sm:$0xff]
    %v1694 = vld [vmem:[%s1645 + $0x180] sm:$0xff]
    %v1695 = vld [vmem:[%s1645 + $0x188] sm:$0xff]
    %v1696 = vld [vmem:[%s1645 + $0x190] sm:$0xff]
    %v1697 = vld [vmem:[%s1645 + $0x198] sm:$0xff]
    %v1698 = vld [vmem:[%s1645 + $0x1a0] sm:$0xff]
    %v1699 = vld [vmem:[%s1645 + $0x1a8] sm:$0xff]
    %v1700 = vld [vmem:[%s1645 + $0x1b0] sm:$0xff]
    %v1701 = vld [vmem:[%s1645 + $0x1b8] sm:$0xff]
    %v1702 = vld [vmem:[%s1645 + $0x1c0] sm:$0xff]
    %v1703 = vld [vmem:[%s1645 + $0x1c8] sm:$0xff]
    %v1704 = vld [vmem:[%s1645 + $0x1d0] sm:$0xff]
    %v1705 = vld [vmem:[%s1645 + $0x1d8] sm:$0xff]
    %v1706 = vld [vmem:[%s1645 + $0x1e0] sm:$0xff]
    %v1707 = vld [vmem:[%s1645 + $0x1e8] sm:$0xff]
    %v1708 = vld [vmem:[%s1645 + $0x1f0] sm:$0xff]
    %v1709 = vld [vmem:[%s1645 + $0x1f8] sm:$0xff]
    %v1710 = vld [vmem:[%s1645 + $0x200] sm:$0xff]
    %v1711 = vld [vmem:[%s1645 + $0x208] sm:$0xff]
    %v1712 = vld [vmem:[%s1645 + $0x210] sm:$0xff]
    %v1713 = vld [vmem:[%s1645 + $0x218] sm:$0xff]
    %v1714 = vld [vmem:[%s1645 + $0x220] sm:$0xff]
    %v1715 = vld [vmem:[%s1645 + $0x228] sm:$0xff]
    %v1716 = vld [vmem:[%s1645 + $0x230] sm:$0xff]
    %v1717 = vld [vmem:[%s1645 + $0x238] sm:$0xff]
    %v1718 = vld [vmem:[%s1645 + $0x240] sm:$0xff]
    %v1719 = vld [vmem:[%s1645 + $0x248] sm:$0xff]
    %v1720 = vld [vmem:[%s1645 + $0x250] sm:$0xff]
    %v1721 = vld [vmem:[%s1645 + $0x258] sm:$0xff]
    %v1722 = vld [vmem:[%s1645 + $0x260] sm:$0xff]
    %v1723 = vld [vmem:[%s1645 + $0x268] sm:$0xff]
    %v1724 = vld [vmem:[%s1645 + $0x270] sm:$0xff]
    %v1725 = vld [vmem:[%s1645 + $0x278] sm:$0xff]
    %v1726 = vld [vmem:[%s1645 + $0x280] sm:$0xff]
    %v1727 = vld [vmem:[%s1645 + $0x288] sm:$0xff]
    %v1728 = vld [vmem:[%s1645 + $0x290] sm:$0xff]
    %v1729 = vld [vmem:[%s1645 + $0x298] sm:$0xff]
    %v1730 = vld [vmem:[%s1645 + $0x2a0] sm:$0xff]
    %v1731 = vld [vmem:[%s1645 + $0x2a8] sm:$0xff]
    %v1732 = vld [vmem:[%s1645 + $0x2b0] sm:$0xff]
    %v1733 = vld [vmem:[%s1645 + $0x2b8] sm:$0xff]
    %v1734 = vld [vmem:[%s1645 + $0x2c0] sm:$0xff]
    %v1735 = vld [vmem:[%s1645 + $0x2c8] sm:$0xff]
    %v1736 = vld [vmem:[%s1645 + $0x2d0] sm:$0xff]
    %v1737 = vld [vmem:[%s1645 + $0x2d8] sm:$0xff]
    %v1738 = vld [vmem:[%s1645 + $0x2e0] sm:$0xff]
    %v1739 = vld [vmem:[%s1645 + $0x2e8] sm:$0xff]
    %v1740 = vld [vmem:[%s1645 + $0x2f0] sm:$0xff]
    %v1741 = vld [vmem:[%s1645 + $0x2f8] sm:$0xff]
    %v1742 = vld [vmem:[%s1645 + $0x300] sm:$0xff]
    %v1743 = vld [vmem:[%s1645 + $0x308] sm:$0xff]
    %v1744 = vld [vmem:[%s1645 + $0x310] sm:$0xff]
    %v1745 = vld [vmem:[%s1645 + $0x318] sm:$0xff]
    %v1746 = vld [vmem:[%s1645 + $0x320] sm:$0xff]
    %v1747 = vld [vmem:[%s1645 + $0x328] sm:$0xff]
    %v1748 = vld [vmem:[%s1645 + $0x330] sm:$0xff]
    %v1749 = vld [vmem:[%s1645 + $0x338] sm:$0xff]
    %v1750 = vld [vmem:[%s1645 + $0x340] sm:$0xff]
    %v1751 = vld [vmem:[%s1645 + $0x348] sm:$0xff]
    %v1752 = vld [vmem:[%s1645 + $0x350] sm:$0xff]
    %v1753 = vld [vmem:[%s1645 + $0x358] sm:$0xff]
    %v1754 = vld [vmem:[%s1645 + $0x360] sm:$0xff]
    %v1755 = vld [vmem:[%s1645 + $0x368] sm:$0xff]
    %v1756 = vld [vmem:[%s1645 + $0x370] sm:$0xff]
    %v1757 = vld [vmem:[%s1645 + $0x378] sm:$0xff]
    %v1758 = vld [vmem:[%s1645 + $0x380] sm:$0x7f]
    %v1759 = vld [vmem:[%s1645 + $0x388] sm:$0x7f]
    %v1760 = vld [vmem:[%s1645 + $0x390] sm:$0x7f]
    %v1761 = vld [vmem:[%s1645 + $0x398] sm:$0x7f]
    %v1762 = vld [vmem:[%s1645 + $0x3a0] sm:$0x7f]
    %v1763 = vld [vmem:[%s1645 + $0x3a8] sm:$0x7f]
    %v1764 = vld [vmem:[%s1645 + $0x3b0] sm:$0x7f]
    %v1766 = vsel %vm665, %v1758, 0
    %v1769 = vsel %vm665, %v1759, 0
    %v1772 = vsel %vm665, %v1760, 0
    %v1775 = vsel %vm665, %v1761, 0
    %v1778 = vsel %vm665, %v1762, 0
    %v1781 = vsel %vm665, %v1763, 0
    %v1784 = vsel %vm665, %v1764, 0
    %1786 = vmatprep.subr.mxu0 %v1647
    %1787 = vmatpush1.msra.mxu0 %v1646
    %1788 = vmatprep.subr.mxu0 %v1654
    %1789 = vmatpush1.msra.mxu0 %v1653
    %1790 = vmatprep.subr.mxu0 %v1661
    %1791 = vmatpush1.msra.mxu0 %v1660
    %1792 = vmatprep.subr.mxu0 %v1668
    %1793 = vmatpush1.msra.mxu0 %v1667
    %1794 = vmatprep.subr.mxu0 %v1675
    %1795 = vmatpush1.msra.mxu0 %v1674
    %1796 = vmatprep.subr.mxu0 %v1682
    %1797 = vmatpush1.msra.mxu0 %v1681
    %1798 = vmatprep.subr.mxu0 %v1689
    %1799 = vmatpush1.msra.mxu0 %v1688
    %1800 = vmatprep.subr.mxu0 %v1696
    %1801 = vmatpush1.msra.mxu0 %v1695
    %1802 = vmatprep.subr.mxu0 %v1703
    %1803 = vmatpush1.msra.mxu0 %v1702
    %1804 = vmatprep.subr.mxu0 %v1710
    %1805 = vmatpush1.msra.mxu0 %v1709
    %1806 = vmatprep.subr.mxu0 %v1717
    %1807 = vmatpush1.msra.mxu0 %v1716
    %1808 = vmatprep.subr.mxu0 %v1724
    %1809 = vmatpush1.msra.mxu0 %v1723
    %1810 = vmatprep.subr.mxu0 %v1731
    %1811 = vmatpush1.msra.mxu0 %v1730
    %1812 = vmatprep.subr.mxu0 %v1738
    %1813 = vmatpush1.msra.mxu0 %v1737
    %1814 = vmatprep.subr.mxu0 %v1745
    %1815 = vmatpush1.msra.mxu0 %v1744
    %1816 = vmatprep.subr.mxu0 %v1752
    %1817 = vmatpush1.msra.mxu0 %v1751
    %1818 = vmatprep.subr.mxu0 %v1769
    %1819 = vmatpush1.msra.mxu0 %v1766
    %1820 = vmatprep.subr.mxu0 0.0
    %1821 = vmatpush1.msra.mxu0 0.0
    %1822 = vmatprep.subr.mxu0 0.0
    %1823 = vmatpush1.msra.mxu0 0.0
    %1824 = vmatprep.subr.mxu0 0.0
    %1825 = vmatpush1.msra.mxu0 0.0
    %1826 = vmatprep.subr.mxu0 0.0
    %1827 = vmatpush1.msra.mxu0 0.0
    %1828 = vmatprep.subr.mxu0 0.0
    %1829 = vmatpush1.msra.mxu0 0.0
    %1830 = vmatprep.subr.mxu0 0.0
    %1831 = vmatpush1.msra.mxu0 0.0
    %1832 = vmatprep.subr.mxu0 0.0
    %1833 = vmatpush1.msra.mxu0 0.0
    %1834 = vmatprep.subr.mxu0 0.0
    %1835 = vmatpush1.msra.mxu0 0.0
    %1836 = vmatprep.subr.mxu0 0.0
    %1837 = vmatpush1.msra.mxu0 0.0
    %1838 = vmatprep.subr.mxu0 0.0
    %1839 = vmatpush1.msra.mxu0 0.0
    %1840 = vmatprep.subr.mxu0 0.0
    %1841 = vmatpush1.msra.mxu0 0.0
    %1842 = vmatprep.subr.mxu0 0.0
    %1843 = vmatpush1.msra.mxu0 0.0
    %1844 = vmatprep.subr.mxu0 0.0
    %1845 = vmatpush1.msra.mxu0 0.0
    %1846 = vmatprep.subr.mxu0 0.0
    %1847 = vmatpush1.msra.mxu0 0.0
    %1848 = vmatprep.subr.mxu0 0.0
    %1849 = vmatpush1.msra.mxu0 0.0
    %1850 = vmatprep.mubr.f32.mxu0 %v663
    %1851 = vmatmul.mubr.f32.gmra.mrb[0].mxu0 %v659
    %v1852 = vpop.f32.mrb[0].mxu0
    %v1853 = vadd.f32 0.0, %v1852
    %v1854 = vpop.f32.mrb[0].mxu0
    %v1855 = vadd.f32 0.0, %v1854
    %1856 = vdwg.mxu0
    %1857 = vmatprep.subr.mxu0 %v1649
    %1858 = vmatpush1.msra.mxu0 %v1648
    %1859 = vmatprep.subr.mxu0 %v1656
    %1860 = vmatpush1.msra.mxu0 %v1655
    %1861 = vmatprep.subr.mxu0 %v1663
    %1862 = vmatpush1.msra.mxu0 %v1662
    %1863 = vmatprep.subr.mxu0 %v1670
    %1864 = vmatpush1.msra.mxu0 %v1669
    %1865 = vmatprep.subr.mxu0 %v1677
    %1866 = vmatpush1.msra.mxu0 %v1676
    %1867 = vmatprep.subr.mxu0 %v1684
    %1868 = vmatpush1.msra.mxu0 %v1683
    %1869 = vmatprep.subr.mxu0 %v1691
    %1870 = vmatpush1.msra.mxu0 %v1690
    %1871 = vmatprep.subr.mxu0 %v1698
    %1872 = vmatpush1.msra.mxu0 %v1697
    %1873 = vmatprep.subr.mxu0 %v1705
    %1874 = vmatpush1.msra.mxu0 %v1704
    %1875 = vmatprep.subr.mxu0 %v1712
    %1876 = vmatpush1.msra.mxu0 %v1711
    %1877 = vmatprep.subr.mxu0 %v1719
    %1878 = vmatpush1.msra.mxu0 %v1718
    %1879 = vmatprep.subr.mxu0 %v1726
    %1880 = vmatpush1.msra.mxu0 %v1725
    %1881 = vmatprep.subr.mxu0 %v1733
    %1882 = vmatpush1.msra.mxu0 %v1732
    %1883 = vmatprep.subr.mxu0 %v1740
    %1884 = vmatpush1.msra.mxu0 %v1739
    %1885 = vmatprep.subr.mxu0 %v1747
    %1886 = vmatpush1.msra.mxu0 %v1746
    %1887 = vmatprep.subr.mxu0 %v1754
    %1888 = vmatpush1.msra.mxu0 %v1753
    %1889 = vmatprep.subr.mxu0 %v1775
    %1890 = vmatpush1.msra.mxu0 %v1772
    %1891 = vmatprep.subr.mxu0 0.0
    %1892 = vmatpush1.msra.mxu0 0.0
    %1893 = vmatprep.subr.mxu0 0.0
    %1894 = vmatpush1.msra.mxu0 0.0
    %1895 = vmatprep.subr.mxu0 0.0
    %1896 = vmatpush1.msra.mxu0 0.0
    %1897 = vmatprep.subr.mxu0 0.0
    %1898 = vmatpush1.msra.mxu0 0.0
    %1899 = vmatprep.subr.mxu0 0.0
    %1900 = vmatpush1.msra.mxu0 0.0
    %1901 = vmatprep.subr.mxu0 0.0
    %1902 = vmatpush1.msra.mxu0 0.0
    %1903 = vmatprep.subr.mxu0 0.0
    %1904 = vmatpush1.msra.mxu0 0.0
    %1905 = vmatprep.subr.mxu0 0.0
    %1906 = vmatpush1.msra.mxu0 0.0
    %1907 = vmatprep.subr.mxu0 0.0
    %1908 = vmatpush1.msra.mxu0 0.0
    %1909 = vmatprep.subr.mxu0 0.0
    %1910 = vmatpush1.msra.mxu0 0.0
    %1911 = vmatprep.subr.mxu0 0.0
    %1912 = vmatpush1.msra.mxu0 0.0
    %1913 = vmatprep.subr.mxu0 0.0
    %1914 = vmatpush1.msra.mxu0 0.0
    %1915 = vmatprep.subr.mxu0 0.0
    %1916 = vmatpush1.msra.mxu0 0.0
    %1917 = vmatprep.subr.mxu0 0.0
    %1918 = vmatpush1.msra.mxu0 0.0
    %1919 = vmatprep.subr.mxu0 0.0
    %1920 = vmatpush1.msra.mxu0 0.0
    %1921 = vmatprep.mubr.f32.mxu0 %v663
    %1922 = vmatmul.mubr.f32.gmra.mrb[0].mxu0 %v659
    %v1923 = vpop.f32.mrb[0].mxu0
    %v1924 = vadd.f32 0.0, %v1923
    %v1925 = vpop.f32.mrb[0].mxu0
    %v1926 = vadd.f32 0.0, %v1925
    %1927 = vdwg.mxu0
    %1928 = vmatprep.subr.mxu0 %v1651
    %1929 = vmatpush1.msra.mxu0 %v1650
    %1930 = vmatprep.subr.mxu0 %v1658
    %1931 = vmatpush1.msra.mxu0 %v1657
    %1932 = vmatprep.subr.mxu0 %v1665
    %1933 = vmatpush1.msra.mxu0 %v1664
    %1934 = vmatprep.subr.mxu0 %v1672
    %1935 = vmatpush1.msra.mxu0 %v1671
    %1936 = vmatprep.subr.mxu0 %v1679
    %1937 = vmatpush1.msra.mxu0 %v1678
    %1938 = vmatprep.subr.mxu0 %v1686
    %1939 = vmatpush1.msra.mxu0 %v1685
    %1940 = vmatprep.subr.mxu0 %v1693
    %1941 = vmatpush1.msra.mxu0 %v1692
    %1942 = vmatprep.subr.mxu0 %v1700
    %1943 = vmatpush1.msra.mxu0 %v1699
    %1944 = vmatprep.subr.mxu0 %v1707
    %1945 = vmatpush1.msra.mxu0 %v1706
    %1946 = vmatprep.subr.mxu0 %v1714
    %1947 = vmatpush1.msra.mxu0 %v1713
    %1948 = vmatprep.subr.mxu0 %v1721
    %1949 = vmatpush1.msra.mxu0 %v1720
    %1950 = vmatprep.subr.mxu0 %v1728
    %1951 = vmatpush1.msra.mxu0 %v1727
    %1952 = vmatprep.subr.mxu0 %v1735
    %1953 = vmatpush1.msra.mxu0 %v1734
    %1954 = vmatprep.subr.mxu0 %v1742
    %1955 = vmatpush1.msra.mxu0 %v1741
    %1956 = vmatprep.subr.mxu0 %v1749
    %1957 = vmatpush1.msra.mxu0 %v1748
    %1958 = vmatprep.subr.mxu0 %v1756
    %1959 = vmatpush1.msra.mxu0 %v1755
    %1960 = vmatprep.subr.mxu0 %v1781
    %1961 = vmatpush1.msra.mxu0 %v1778
    %1962 = vmatprep.subr.mxu0 0.0
    %1963 = vmatpush1.msra.mxu0 0.0
    %1964 = vmatprep.subr.mxu0 0.0
    %1965 = vmatpush1.msra.mxu0 0.0
    %1966 = vmatprep.subr.mxu0 0.0
    %1967 = vmatpush1.msra.mxu0 0.0
    %1968 = vmatprep.subr.mxu0 0.0
    %1969 = vmatpush1.msra.mxu0 0.0
    %1970 = vmatprep.subr.mxu0 0.0
    %1971 = vmatpush1.msra.mxu0 0.0
    %1972 = vmatprep.subr.mxu0 0.0
    %1973 = vmatpush1.msra.mxu0 0.0
    %1974 = vmatprep.subr.mxu0 0.0
    %1975 = vmatpush1.msra.mxu0 0.0
    %1976 = vmatprep.subr.mxu0 0.0
    %1977 = vmatpush1.msra.mxu0 0.0
    %1978 = vmatprep.subr.mxu0 0.0
    %1979 = vmatpush1.msra.mxu0 0.0
    %1980 = vmatprep.subr.mxu0 0.0
    %1981 = vmatpush1.msra.mxu0 0.0
    %1982 = vmatprep.subr.mxu0 0.0
    %1983 = vmatpush1.msra.mxu0 0.0
    %1984 = vmatprep.subr.mxu0 0.0
    %1985 = vmatpush1.msra.mxu0 0.0
    %1986 = vmatprep.subr.mxu0 0.0
    %1987 = vmatpush1.msra.mxu0 0.0
    %1988 = vmatprep.subr.mxu0 0.0
    %1989 = vmatpush1.msra.mxu0 0.0
    %1990 = vmatprep.subr.mxu0 0.0
    %1991 = vmatpush1.msra.mxu0 0.0
    %1992 = vmatprep.mubr.f32.mxu0 %v663
    %1993 = vmatmul.mubr.f32.gmra.mrb[0].mxu0 %v659
    %v1994 = vpop.f32.mrb[0].mxu0
    %v1995 = vadd.f32 0.0, %v1994
    %v1996 = vpop.f32.mrb[0].mxu0
    %v1997 = vadd.f32 0.0, %v1996
    %1998 = vdwg.mxu0
    %1999 = vmatprep.subr.mxu0 0.0
    %2000 = vmatpush1.msra.mxu0 %v1652
    %2001 = vmatprep.subr.mxu0 0.0
    %2002 = vmatpush1.msra.mxu0 %v1659
    %2003 = vmatprep.subr.mxu0 0.0
    %2004 = vmatpush1.msra.mxu0 %v1666
    %2005 = vmatprep.subr.mxu0 0.0
    %2006 = vmatpush1.msra.mxu0 %v1673
    %2007 = vmatprep.subr.mxu0 0.0
    %2008 = vmatpush1.msra.mxu0 %v1680
    %2009 = vmatprep.subr.mxu0 0.0
    %2010 = vmatpush1.msra.mxu0 %v1687
    %2011 = vmatprep.subr.mxu0 0.0
    %2012 = vmatpush1.msra.mxu0 %v1694
    %2013 = vmatprep.subr.mxu0 0.0
    %2014 = vmatpush1.msra.mxu0 %v1701
    %2015 = vmatprep.subr.mxu0 0.0
    %2016 = vmatpush1.msra.mxu0 %v1708
    %2017 = vmatprep.subr.mxu0 0.0
    %2018 = vmatpush1.msra.mxu0 %v1715
    %2019 = vmatprep.subr.mxu0 0.0
    %2020 = vmatpush1.msra.mxu0 %v1722
    %2021 = vmatprep.subr.mxu0 0.0
    %2022 = vmatpush1.msra.mxu0 %v1729
    %2023 = vmatprep.subr.mxu0 0.0
    %2024 = vmatpush1.msra.mxu0 %v1736
    %2025 = vmatprep.subr.mxu0 0.0
    %2026 = vmatpush1.msra.mxu0 %v1743
    %2027 = vmatprep.subr.mxu0 0.0
    %2028 = vmatpush1.msra.mxu0 %v1750
    %2029 = vmatprep.subr.mxu0 0.0
    %2030 = vmatpush1.msra.mxu0 %v1757
    %2031 = vmatprep.subr.mxu0 0.0
    %2032 = vmatpush1.msra.mxu0 %v1784
    %2033 = vmatprep.subr.mxu0 0.0
    %2034 = vmatpush1.msra.mxu0 0.0
    %2035 = vmatprep.subr.mxu0 0.0
    %2036 = vmatpush1.msra.mxu0 0.0
    %2037 = vmatprep.subr.mxu0 0.0
    %2038 = vmatpush1.msra.mxu0 0.0
    %2039 = vmatprep.subr.mxu0 0.0
    %2040 = vmatpush1.msra.mxu0 0.0
    %2041 = vmatprep.subr.mxu0 0.0
    %2042 = vmatpush1.msra.mxu0 0.0
    %2043 = vmatprep.subr.mxu0 0.0
    %2044 = vmatpush1.msra.mxu0 0.0
    %2045 = vmatprep.subr.mxu0 0.0
    %2046 = vmatpush1.msra.mxu0 0.0
    %2047 = vmatprep.subr.mxu0 0.0
    %2048 = vmatpush1.msra.mxu0 0.0
    %2049 = vmatprep.subr.mxu0 0.0
    %2050 = vmatpush1.msra.mxu0 0.0
    %2051 = vmatprep.subr.mxu0 0.0
    %2052 = vmatpush1.msra.mxu0 0.0
    %2053 = vmatprep.subr.mxu0 0.0
    %2054 = vmatpush1.msra.mxu0 0.0
    %2055 = vmatprep.subr.mxu0 0.0
    %2056 = vmatpush1.msra.mxu0 0.0
    %2057 = vmatprep.subr.mxu0 0.0
    %2058 = vmatpush1.msra.mxu0 0.0
    %2059 = vmatprep.subr.mxu0 0.0
    %2060 = vmatpush1.msra.mxu0 0.0
    %2061 = vmatprep.subr.mxu0 0.0
    %2062 = vmatpush1.msra.mxu0 0.0
    %2063 = vmatprep.mubr.f32.mxu0 %v663
    %2064 = vmatmul.mubr.f32.gmra.mrb[0].mxu0 %v659
    %v2065 = vpop.f32.mrb[0].mxu0
    %v2066 = vadd.f32 0.0, %v2065
    %v2067 = vpop.f32.mrb[0].mxu0
    %2068 = vdwg.mxu0
    %v2069 = vadd.f32 %v1429, %v1853
    %v2070 = vadd.f32 %v1431, %v1855
    %v2071 = vadd.f32 %v1500, %v1924
    %v2072 = vadd.f32 %v1502, %v1926
    %v2073 = vadd.f32 %v1571, %v1995
    %v2074 = vadd.f32 %v1573, %v1997
    %v2075 = vadd.f32 %v1642, %v2066
    %v2077 = vsel %vm224, %v1642, 0
    %2079 = vmatprep.subr.mxu0 0.0
    %2080 = vmatpush1.msra.mxu0 %v45
    %2081 = vmatprep.subr.mxu0 0.0
    %2082 = vmatpush1.msra.mxu0 %v46
    %2083 = vmatprep.subr.mxu0 0.0
    %2084 = vmatpush1.msra.mxu0 %v47
    %2085 = vmatprep.subr.mxu0 0.0
    %2086 = vmatpush1.msra.mxu0 %v48
    %2087 = vmatprep.subr.mxu0 0.0
    %2088 = vmatpush1.msra.mxu0 %v49
    %2089 = vmatprep.subr.mxu0 0.0
    %2090 = vmatpush1.msra.mxu0 %v50
    %2091 = vmatprep.subr.mxu0 0.0
    %2092 = vmatpush1.msra.mxu0 %v51
    %2093 = vmatprep.subr.mxu0 0.0
    %2094 = vmatpush1.msra.mxu0 %v52
    %2095 = vmatprep.subr.mxu0 0.0
    %2096 = vmatpush1.msra.mxu0 %v53
    %2097 = vmatprep.subr.mxu0 0.0
    %2098 = vmatpush1.msra.mxu0 %v54
    %2099 = vmatprep.subr.mxu0 0.0
    %2100 = vmatpush1.msra.mxu0 %v55
    %2101 = vmatprep.subr.mxu0 0.0
    %2102 = vmatpush1.msra.mxu0 %v56
    %2103 = vmatprep.subr.mxu0 0.0
    %2104 = vmatpush1.msra.mxu0 %v57
    %2105 = vmatprep.subr.mxu0 0.0
    %2106 = vmatpush1.msra.mxu0 %v58
    %2107 = vmatprep.subr.mxu0 0.0
    %2108 = vmatpush1.msra.mxu0 %v59
    %2109 = vmatprep.subr.mxu0 0.0
    %2110 = vmatpush1.msra.mxu0 %v60
    %2111 = vmatprep.subr.mxu0 0.0
    %2112 = vmatpush1.msra.mxu0 %v61
    %2113 = vmatprep.subr.mxu0 0.0
    %2114 = vmatpush1.msra.mxu0 %v62
    %2115 = vmatprep.subr.mxu0 0.0
    %2116 = vmatpush1.msra.mxu0 %v63
    %2117 = vmatprep.subr.mxu0 0.0
    %2118 = vmatpush1.msra.mxu0 %v64
    %2119 = vmatprep.subr.mxu0 0.0
    %2120 = vmatpush1.msra.mxu0 %v65
    %2121 = vmatprep.subr.mxu0 0.0
    %2122 = vmatpush1.msra.mxu0 %v66
    %2123 = vmatprep.subr.mxu0 0.0
    %2124 = vmatpush1.msra.mxu0 %v67
    %2125 = vmatprep.subr.mxu0 0.0
    %2126 = vmatpush1.msra.mxu0 %v68
    %2127 = vmatprep.subr.mxu0 0.0
    %2128 = vmatpush1.msra.mxu0 %v69
    %2129 = vmatprep.subr.mxu0 0.0
    %2130 = vmatpush1.msra.mxu0 %v70
    %2131 = vmatprep.subr.mxu0 0.0
    %2132 = vmatpush1.msra.mxu0 %v71
    %2133 = vmatprep.subr.mxu0 0.0
    %2134 = vmatpush1.msra.mxu0 %v72
    %2135 = vmatprep.subr.mxu0 0.0
    %2136 = vmatpush1.msra.mxu0 %v73
    %2137 = vmatprep.subr.mxu0 0.0
    %2138 = vmatpush1.msra.mxu0 %v74
    %2139 = vmatprep.subr.mxu0 0.0
    %2140 = vmatpush1.msra.mxu0 %v75
    %2141 = vmatprep.subr.mxu0 0.0
    %2142 = vmatpush1.msra.mxu0 %v76
    %2143 = vmatprep.mubr.f32.mxu0 %v1431
    %2144 = vmatmul.mubr.f32.gmra.mrb[0].mxu0 %v1429
    %v2145 = vpop.f32.mrb[0].mxu0
    %v2146 = vadd.f32 0.0, %v2145
    %v2147 = vpop.f32.mrb[0].mxu0
    %2148 = vdwg.mxu0
    %2149 = vmatprep.subr.mxu0 0.0
    %2150 = vmatpush1.msra.mxu0 %v77
    %2151 = vmatprep.subr.mxu0 0.0
    %2152 = vmatpush1.msra.mxu0 %v78
    %2153 = vmatprep.subr.mxu0 0.0
    %2154 = vmatpush1.msra.mxu0 %v79
    %2155 = vmatprep.subr.mxu0 0.0
    %2156 = vmatpush1.msra.mxu0 %v80
    %2157 = vmatprep.subr.mxu0 0.0
    %2158 = vmatpush1.msra.mxu0 %v81
    %2159 = vmatprep.subr.mxu0 0.0
    %2160 = vmatpush1.msra.mxu0 %v82
    %2161 = vmatprep.subr.mxu0 0.0
    %2162 = vmatpush1.msra.mxu0 %v83
    %2163 = vmatprep.subr.mxu0 0.0
    %2164 = vmatpush1.msra.mxu0 %v84
    %2165 = vmatprep.subr.mxu0 0.0
    %2166 = vmatpush1.msra.mxu0 %v85
    %2167 = vmatprep.subr.mxu0 0.0
    %2168 = vmatpush1.msra.mxu0 %v86
    %2169 = vmatprep.subr.mxu0 0.0
    %2170 = vmatpush1.msra.mxu0 %v87
    %2171 = vmatprep.subr.mxu0 0.0
    %2172 = vmatpush1.msra.mxu0 %v88
    %2173 = vmatprep.subr.mxu0 0.0
    %2174 = vmatpush1.msra.mxu0 %v89
    %2175 = vmatprep.subr.mxu0 0.0
    %2176 = vmatpush1.msra.mxu0 %v90
    %2177 = vmatprep.subr.mxu0 0.0
    %2178 = vmatpush1.msra.mxu0 %v91
    %2179 = vmatprep.subr.mxu0 0.0
    %2180 = vmatpush1.msra.mxu0 %v92
    %2181 = vmatprep.subr.mxu0 0.0
    %2182 = vmatpush1.msra.mxu0 %v93
    %2183 = vmatprep.subr.mxu0 0.0
    %2184 = vmatpush1.msra.mxu0 %v94
    %2185 = vmatprep.subr.mxu0 0.0
    %2186 = vmatpush1.msra.mxu0 %v95
    %2187 = vmatprep.subr.mxu0 0.0
    %2188 = vmatpush1.msra.mxu0 %v96
    %2189 = vmatprep.subr.mxu0 0.0
    %2190 = vmatpush1.msra.mxu0 %v97
    %2191 = vmatprep.subr.mxu0 0.0
    %2192 = vmatpush1.msra.mxu0 %v98
    %2193 = vmatprep.subr.mxu0 0.0
    %2194 = vmatpush1.msra.mxu0 %v99
    %2195 = vmatprep.subr.mxu0 0.0
    %2196 = vmatpush1.msra.mxu0 %v100
    %2197 = vmatprep.subr.mxu0 0.0
    %2198 = vmatpush1.msra.mxu0 %v101
    %2199 = vmatprep.subr.mxu0 0.0
    %2200 = vmatpush1.msra.mxu0 %v102
    %2201 = vmatprep.subr.mxu0 0.0
    %2202 = vmatpush1.msra.mxu0 %v103
    %2203 = vmatprep.subr.mxu0 0.0
    %2204 = vmatpush1.msra.mxu0 %v104
    %2205 = vmatprep.subr.mxu0 0.0
    %2206 = vmatpush1.msra.mxu0 %v105
    %2207 = vmatprep.subr.mxu0 0.0
    %2208 = vmatpush1.msra.mxu0 %v106
    %2209 = vmatprep.subr.mxu0 0.0
    %2210 = vmatpush1.msra.mxu0 %v107
    %2211 = vmatprep.subr.mxu0 0.0
    %2212 = vmatpush1.msra.mxu0 %v108
    %2213 = vmatprep.mubr.f32.mxu0 %v1502
    %2214 = vmatmul.mubr.f32.gmra.mrb[0].mxu0 %v1500
    %v2215 = vpop.f32.mrb[0].mxu0
    %v2216 = vadd.f32 %v2146, %v2215
    %v2217 = vpop.f32.mrb[0].mxu0
    %2218 = vdwg.mxu0
    %2219 = vmatprep.subr.mxu0 0.0
    %2220 = vmatpush1.msra.mxu0 %v109
    %2221 = vmatprep.subr.mxu0 0.0
    %2222 = vmatpush1.msra.mxu0 %v110
    %2223 = vmatprep.subr.mxu0 0.0
    %2224 = vmatpush1.msra.mxu0 %v111
    %2225 = vmatprep.subr.mxu0 0.0
    %2226 = vmatpush1.msra.mxu0 %v112
    %2227 = vmatprep.subr.mxu0 0.0
    %2228 = vmatpush1.msra.mxu0 %v113
    %2229 = vmatprep.subr.mxu0 0.0
    %2230 = vmatpush1.msra.mxu0 %v114
    %2231 = vmatprep.subr.mxu0 0.0
    %2232 = vmatpush1.msra.mxu0 %v115
    %2233 = vmatprep.subr.mxu0 0.0
    %2234 = vmatpush1.msra.mxu0 %v116
    %2235 = vmatprep.subr.mxu0 0.0
    %2236 = vmatpush1.msra.mxu0 %v117
    %2237 = vmatprep.subr.mxu0 0.0
    %2238 = vmatpush1.msra.mxu0 %v118
    %2239 = vmatprep.subr.mxu0 0.0
    %2240 = vmatpush1.msra.mxu0 %v119
    %2241 = vmatprep.subr.mxu0 0.0
    %2242 = vmatpush1.msra.mxu0 %v120
    %2243 = vmatprep.subr.mxu0 0.0
    %2244 = vmatpush1.msra.mxu0 %v121
    %2245 = vmatprep.subr.mxu0 0.0
    %2246 = vmatpush1.msra.mxu0 %v122
    %2247 = vmatprep.subr.mxu0 0.0
    %2248 = vmatpush1.msra.mxu0 %v123
    %2249 = vmatprep.subr.mxu0 0.0
    %2250 = vmatpush1.msra.mxu0 %v124
    %2251 = vmatprep.subr.mxu0 0.0
    %2252 = vmatpush1.msra.mxu0 %v125
    %2253 = vmatprep.subr.mxu0 0.0
    %2254 = vmatpush1.msra.mxu0 %v126
    %2255 = vmatprep.subr.mxu0 0.0
    %2256 = vmatpush1.msra.mxu0 %v127
    %2257 = vmatprep.subr.mxu0 0.0
    %2258 = vmatpush1.msra.mxu0 %v128
    %2259 = vmatprep.subr.mxu0 0.0
    %2260 = vmatpush1.msra.mxu0 %v129
    %2261 = vmatprep.subr.mxu0 0.0
    %2262 = vmatpush1.msra.mxu0 %v130
    %2263 = vmatprep.subr.mxu0 0.0
    %2264 = vmatpush1.msra.mxu0 %v131
    %2265 = vmatprep.subr.mxu0 0.0
    %2266 = vmatpush1.msra.mxu0 %v132
    %2267 = vmatprep.subr.mxu0 0.0
    %2268 = vmatpush1.msra.mxu0 %v133
    %2269 = vmatprep.subr.mxu0 0.0
    %2270 = vmatpush1.msra.mxu0 %v134
    %2271 = vmatprep.subr.mxu0 0.0
    %2272 = vmatpush1.msra.mxu0 %v135
    %2273 = vmatprep.subr.mxu0 0.0
    %2274 = vmatpush1.msra.mxu0 %v136
    %2275 = vmatprep.subr.mxu0 0.0
    %2276 = vmatpush1.msra.mxu0 %v137
    %2277 = vmatprep.subr.mxu0 0.0
    %2278 = vmatpush1.msra.mxu0 %v138
    %2279 = vmatprep.subr.mxu0 0.0
    %2280 = vmatpush1.msra.mxu0 %v139
    %2281 = vmatprep.subr.mxu0 0.0
    %2282 = vmatpush1.msra.mxu0 %v140
    %2283 = vmatprep.mubr.f32.mxu0 %v1573
    %2284 = vmatmul.mubr.f32.gmra.mrb[0].mxu0 %v1571
    %v2285 = vpop.f32.mrb[0].mxu0
    %v2286 = vadd.f32 %v2216, %v2285
    %v2287 = vpop.f32.mrb[0].mxu0
    %2288 = vdwg.mxu0
    %2289 = vmatprep.subr.mxu0 0.0
    %2290 = vmatpush1.msra.mxu0 %v141
    %2291 = vmatprep.subr.mxu0 0.0
    %2292 = vmatpush1.msra.mxu0 %v981
    %2293 = vmatprep.subr.mxu0 0.0
    %2294 = vmatpush1.msra.mxu0 0.0
    %2295 = vmatprep.subr.mxu0 0.0
    %2296 = vmatpush1.msra.mxu0 0.0
    %2297 = vmatprep.subr.mxu0 0.0
    %2298 = vmatpush1.msra.mxu0 0.0
    %2299 = vmatprep.subr.mxu0 0.0
    %2300 = vmatpush1.msra.mxu0 0.0
    %2301 = vmatprep.subr.mxu0 0.0
    %2302 = vmatpush1.msra.mxu0 0.0
    %2303 = vmatprep.subr.mxu0 0.0
    %2304 = vmatpush1.msra.mxu0 0.0
    %2305 = vmatprep.subr.mxu0 0.0
    %2306 = vmatpush1.msra.mxu0 0.0
    %2307 = vmatprep.subr.mxu0 0.0
    %2308 = vmatpush1.msra.mxu0 0.0
    %2309 = vmatprep.subr.mxu0 0.0
    %2310 = vmatpush1.msra.mxu0 0.0
    %2311 = vmatprep.subr.mxu0 0.0
    %2312 = vmatpush1.msra.mxu0 0.0
    %2313 = vmatprep.subr.mxu0 0.0
    %2314 = vmatpush1.msra.mxu0 0.0
    %2315 = vmatprep.subr.mxu0 0.0
    %2316 = vmatpush1.msra.mxu0 0.0
    %2317 = vmatprep.subr.mxu0 0.0
    %2318 = vmatpush1.msra.mxu0 0.0
    %2319 = vmatprep.subr.mxu0 0.0
    %2320 = vmatpush1.msra.mxu0 0.0
    %2321 = vmatprep.subr.mxu0 0.0
    %2322 = vmatpush1.msra.mxu0 0.0
    %2323 = vmatprep.subr.mxu0 0.0
    %2324 = vmatpush1.msra.mxu0 0.0
    %2325 = vmatprep.subr.mxu0 0.0
    %2326 = vmatpush1.msra.mxu0 0.0
    %2327 = vmatprep.subr.mxu0 0.0
    %2328 = vmatpush1.msra.mxu0 0.0
    %2329 = vmatprep.subr.mxu0 0.0
    %2330 = vmatpush1.msra.mxu0 0.0
    %2331 = vmatprep.subr.mxu0 0.0
    %2332 = vmatpush1.msra.mxu0 0.0
    %2333 = vmatprep.subr.mxu0 0.0
    %2334 = vmatpush1.msra.mxu0 0.0
    %2335 = vmatprep.subr.mxu0 0.0
    %2336 = vmatpush1.msra.mxu0 0.0
    %2337 = vmatprep.subr.mxu0 0.0
    %2338 = vmatpush1.msra.mxu0 0.0
    %2339 = vmatprep.subr.mxu0 0.0
    %2340 = vmatpush1.msra.mxu0 0.0
    %2341 = vmatprep.subr.mxu0 0.0
    %2342 = vmatpush1.msra.mxu0 0.0
    %2343 = vmatprep.subr.mxu0 0.0
    %2344 = vmatpush1.msra.mxu0 0.0
    %2345 = vmatprep.subr.mxu0 0.0
    %2346 = vmatpush1.msra.mxu0 0.0
    %2347 = vmatprep.subr.mxu0 0.0
    %2348 = vmatpush1.msra.mxu0 0.0
    %2349 = vmatprep.subr.mxu0 0.0
    %2350 = vmatpush1.msra.mxu0 0.0
    %2351 = vmatprep.subr.mxu0 0.0
    %2352 = vmatpush1.msra.mxu0 0.0
    %2353 = vmatprep.mubr.f32.mxu0 0.0
    %2354 = vmatmul.mubr.f32.gmra.mrb[0].mxu0 %v2077
    %v2355 = vpop.f32.mrb[0].mxu0
    %v2356 = vadd.f32 %v2286, %v2355
    %v2357 = vpop.f32.mrb[0].mxu0
    %2358 = vdwg.mxu0
    %s2359 = scalar_lea.vmem %s2, 224
    %v2360 = vld [vmem:[%s2359] sm:$0xff]
    %v2361 = vld [vmem:[%s2359 + $0x8] sm:$0xff]
    %v2362 = vld [vmem:[%s2359 + $0x10] sm:$0xff]
    %v2363 = vld [vmem:[%s2359 + $0x18] sm:$0xff]
    %v2364 = vld [vmem:[%s2359 + $0x20] sm:$0xff]
    %v2365 = vld [vmem:[%s2359 + $0x28] sm:$0xff]
    %v2366 = vld [vmem:[%s2359 + $0x30] sm:$0xff]
    %v2367 = vld [vmem:[%s2359 + $0x38] sm:$0x3]
    %v2368 = vld [vmem:[%s2359 + $0x40] sm:$0x3]
    %v2369 = vld [vmem:[%s2359 + $0x48] sm:$0x3]
    %v2370 = vld [vmem:[%s2359 + $0x50] sm:$0x3]
    %v2371 = vld [vmem:[%s2359 + $0x58] sm:$0x3]
    %v2372 = vld [vmem:[%s2359 + $0x60] sm:$0x3]
    %v2373 = vld [vmem:[%s2359 + $0x68] sm:$0x3]
    %v2374 = vlaneseq
    %v2375 = vshrl.u32 %v2374, 7
    %v2376 = vsub.s32 2, %v2375
    %v2377 = vrot.slane %v41, %v2376
    %v2378 = vlaneseq
    %v2379 = vshrl.u32 %v2378, 7
    %v2380 = vsub.s32 6, %v2379
    %v2381 = vrot.slane %v41, %v2380
    %v2382 = vlaneseq
    %v2383 = vshrl.u32 %v2382, 7
    %v2384 = vsub.s32 2, %v2383
    %v2385 = vrot.slane %v42, %v2384
    %v2386 = vlaneseq
    %v2387 = vshrl.u32 %v2386, 7
    %v2388 = vsub.s32 6, %v2387
    %v2389 = vrot.slane %v42, %v2388
    %v2390 = vlaneseq
    %v2391 = vshrl.u32 %v2390, 7
    %v2392 = vsub.s32 2, %v2391
    %v2393 = vrot.slane %v43, %v2392
    %v2394 = vlaneseq
    %v2395 = vshrl.u32 %v2394, 7
    %v2396 = vsub.s32 6, %v2395
    %v2397 = vrot.slane %v43, %v2396
    %v2398 = vlaneseq
    %v2399 = vshrl.u32 %v2398, 7
    %v2400 = vsub.s32 2, %v2399
    %v2401 = vrot.slane %v44, %v2400
    %v2409 = vlaneseq
    %v2410 = vshrl.u32 %v2409, 7
    %v2411 = vsub.s32 2, %v2410
    %v2412 = vrot.slane %v2377, %v2411
    %v2413 = vlaneseq
    %v2414 = vshrl.u32 %v2413, 7
    %v2415 = vsub.s32 2, %v2414
    %v2416 = vrot.slane %v2381, %v2415
    %v2417 = vlaneseq
    %v2418 = vshrl.u32 %v2417, 7
    %v2419 = vsub.s32 2, %v2418
    %v2420 = vrot.slane %v2385, %v2419
    %v2421 = vlaneseq
    %v2422 = vshrl.u32 %v2421, 7
    %v2423 = vsub.s32 2, %v2422
    %v2424 = vrot.slane %v2389, %v2423
    %v2425 = vlaneseq
    %v2426 = vshrl.u32 %v2425, 7
    %v2427 = vsub.s32 2, %v2426
    %v2428 = vrot.slane %v2393, %v2427
    %v2429 = vlaneseq
    %v2430 = vshrl.u32 %v2429, 7
    %v2431 = vsub.s32 2, %v2430
    %v2432 = vrot.slane %v2397, %v2431
    %v2433 = vlaneseq
    %v2434 = vshrl.u32 %v2433, 7
    %v2435 = vsub.s32 2, %v2434
    %v2436 = vrot.slane %v2401, %v2435
    %v2438 = vsel %vm228, %v2367, 0
    %v2441 = vsel %vm228, %v2368, 0
    %v2444 = vsel %vm228, %v2369, 0
    %v2447 = vsel %vm228, %v2370, 0
    %v2450 = vsel %vm228, %v2371, 0
    %v2453 = vsel %vm228, %v2372, 0
    %v2456 = vsel %vm228, %v2373, 0
    %2458 = vmatprep.subr.mxu0 %v2361
    %2459 = vmatpush1.msra.mxu0 %v2360
    %2460 = vmatprep.subr.mxu0 %v2441
    %2461 = vmatpush1.msra.mxu0 %v2438
    %2462 = vmatprep.subr.mxu0 0.0
    %2463 = vmatpush1.msra.mxu0 0.0
    %2464 = vmatprep.subr.mxu0 0.0
    %2465 = vmatpush1.msra.mxu0 0.0
    %2466 = vmatprep.subr.mxu0 0.0
    %2467 = vmatpush1.msra.mxu0 0.0
    %2468 = vmatprep.subr.mxu0 0.0
    %2469 = vmatpush1.msra.mxu0 0.0
    %2470 = vmatprep.subr.mxu0 0.0
    %2471 = vmatpush1.msra.mxu0 0.0
    %2472 = vmatprep.subr.mxu0 0.0
    %2473 = vmatpush1.msra.mxu0 0.0
    %2474 = vmatprep.subr.mxu0 0.0
    %2475 = vmatpush1.msra.mxu0 0.0
    %2476 = vmatprep.subr.mxu0 0.0
    %2477 = vmatpush1.msra.mxu0 0.0
    %2478 = vmatprep.subr.mxu0 0.0
    %2479 = vmatpush1.msra.mxu0 0.0
    %2480 = vmatprep.subr.mxu0 0.0
    %2481 = vmatpush1.msra.mxu0 0.0
    %2482 = vmatprep.subr.mxu0 0.0
    %2483 = vmatpush1.msra.mxu0 0.0
    %2484 = vmatprep.subr.mxu0 0.0
    %2485 = vmatpush1.msra.mxu0 0.0
    %2486 = vmatprep.subr.mxu0 0.0
    %2487 = vmatpush1.msra.mxu0 0.0
    %2488 = vmatprep.subr.mxu0 0.0
    %2489 = vmatpush1.msra.mxu0 0.0
    %2490 = vmatprep.subr.mxu0 0.0
    %2491 = vmatpush1.msra.mxu0 0.0
    %2492 = vmatprep.subr.mxu0 0.0
    %2493 = vmatpush1.msra.mxu0 0.0
    %2494 = vmatprep.subr.mxu0 0.0
    %2495 = vmatpush1.msra.mxu0 0.0
    %2496 = vmatprep.subr.mxu0 0.0
    %2497 = vmatpush1.msra.mxu0 0.0
    %2498 = vmatprep.subr.mxu0 0.0
    %2499 = vmatpush1.msra.mxu0 0.0
    %2500 = vmatprep.subr.mxu0 0.0
    %2501 = vmatpush1.msra.mxu0 0.0
    %2502 = vmatprep.subr.mxu0 0.0
    %2503 = vmatpush1.msra.mxu0 0.0
    %2504 = vmatprep.subr.mxu0 0.0
    %2505 = vmatpush1.msra.mxu0 0.0
    %2506 = vmatprep.subr.mxu0 0.0
    %2507 = vmatpush1.msra.mxu0 0.0
    %2508 = vmatprep.subr.mxu0 0.0
    %2509 = vmatpush1.msra.mxu0 0.0
    %2510 = vmatprep.subr.mxu0 0.0
    %2511 = vmatpush1.msra.mxu0 0.0
    %2512 = vmatprep.subr.mxu0 0.0
    %2513 = vmatpush1.msra.mxu0 0.0
    %2514 = vmatprep.subr.mxu0 0.0
    %2515 = vmatpush1.msra.mxu0 0.0
    %2516 = vmatprep.subr.mxu0 0.0
    %2517 = vmatpush1.msra.mxu0 0.0
    %2518 = vmatprep.subr.mxu0 0.0
    %2519 = vmatpush1.msra.mxu0 0.0
    %2520 = vmatprep.subr.mxu0 0.0
    %2521 = vmatpush1.msra.mxu0 0.0
    %2522 = vmatprep.mubr.f32.mxu0 0.0
    %2523 = vmatmul.mubr.f32.gmra.mrb[0].mxu0 %v226
    %v2524 = vpop.f32.mrb[0].mxu0
    %v2525 = vadd.f32 %v2412, %v2524
    %v2526 = vpop.f32.mrb[0].mxu0
    %v2527 = vadd.f32 %v2416, %v2526
    %2528 = vdwg.mxu0
    %2529 = vmatprep.subr.mxu0 %v2363
    %2530 = vmatpush1.msra.mxu0 %v2362
    %2531 = vmatprep.subr.mxu0 %v2447
    %2532 = vmatpush1.msra.mxu0 %v2444
    %2533 = vmatprep.subr.mxu0 0.0
    %2534 = vmatpush1.msra.mxu0 0.0
    %2535 = vmatprep.subr.mxu0 0.0
    %2536 = vmatpush1.msra.mxu0 0.0
    %2537 = vmatprep.subr.mxu0 0.0
    %2538 = vmatpush1.msra.mxu0 0.0
    %2539 = vmatprep.subr.mxu0 0.0
    %2540 = vmatpush1.msra.mxu0 0.0
    %2541 = vmatprep.subr.mxu0 0.0
    %2542 = vmatpush1.msra.mxu0 0.0
    %2543 = vmatprep.subr.mxu0 0.0
    %2544 = vmatpush1.msra.mxu0 0.0
    %2545 = vmatprep.subr.mxu0 0.0
    %2546 = vmatpush1.msra.mxu0 0.0
    %2547 = vmatprep.subr.mxu0 0.0
    %2548 = vmatpush1.msra.mxu0 0.0
    %2549 = vmatprep.subr.mxu0 0.0
    %2550 = vmatpush1.msra.mxu0 0.0
    %2551 = vmatprep.subr.mxu0 0.0
    %2552 = vmatpush1.msra.mxu0 0.0
    %2553 = vmatprep.subr.mxu0 0.0
    %2554 = vmatpush1.msra.mxu0 0.0
    %2555 = vmatprep.subr.mxu0 0.0
    %2556 = vmatpush1.msra.mxu0 0.0
    %2557 = vmatprep.subr.mxu0 0.0
    %2558 = vmatpush1.msra.mxu0 0.0
    %2559 = vmatprep.subr.mxu0 0.0
    %2560 = vmatpush1.msra.mxu0 0.0
    %2561 = vmatprep.subr.mxu0 0.0
    %2562 = vmatpush1.msra.mxu0 0.0
    %2563 = vmatprep.subr.mxu0 0.0
    %2564 = vmatpush1.msra.mxu0 0.0
    %2565 = vmatprep.subr.mxu0 0.0
    %2566 = vmatpush1.msra.mxu0 0.0
    %2567 = vmatprep.subr.mxu0 0.0
    %2568 = vmatpush1.msra.mxu0 0.0
    %2569 = vmatprep.subr.mxu0 0.0
    %2570 = vmatpush1.msra.mxu0 0.0
    %2571 = vmatprep.subr.mxu0 0.0
    %2572 = vmatpush1.msra.mxu0 0.0
    %2573 = vmatprep.subr.mxu0 0.0
    %2574 = vmatpush1.msra.mxu0 0.0
    %2575 = vmatprep.subr.mxu0 0.0
    %2576 = vmatpush1.msra.mxu0 0.0
    %2577 = vmatprep.subr.mxu0 0.0
    %2578 = vmatpush1.msra.mxu0 0.0
    %2579 = vmatprep.subr.mxu0 0.0
    %2580 = vmatpush1.msra.mxu0 0.0
    %2581 = vmatprep.subr.mxu0 0.0
    %2582 = vmatpush1.msra.mxu0 0.0
    %2583 = vmatprep.subr.mxu0 0.0
    %2584 = vmatpush1.msra.mxu0 0.0
    %2585 = vmatprep.subr.mxu0 0.0
    %2586 = vmatpush1.msra.mxu0 0.0
    %2587 = vmatprep.subr.mxu0 0.0
    %2588 = vmatpush1.msra.mxu0 0.0
    %2589 = vmatprep.subr.mxu0 0.0
    %2590 = vmatpush1.msra.mxu0 0.0
    %2591 = vmatprep.subr.mxu0 0.0
    %2592 = vmatpush1.msra.mxu0 0.0
    %2593 = vmatprep.mubr.f32.mxu0 0.0
    %2594 = vmatmul.mubr.f32.gmra.mrb[0].mxu0 %v226
    %v2595 = vpop.f32.mrb[0].mxu0
    %v2596 = vadd.f32 %v2420, %v2595
    %v2597 = vpop.f32.mrb[0].mxu0
    %v2598 = vadd.f32 %v2424, %v2597
    %2599 = vdwg.mxu0
    %2600 = vmatprep.subr.mxu0 %v2365
    %2601 = vmatpush1.msra.mxu0 %v2364
    %2602 = vmatprep.subr.mxu0 %v2453
    %2603 = vmatpush1.msra.mxu0 %v2450
    %2604 = vmatprep.subr.mxu0 0.0
    %2605 = vmatpush1.msra.mxu0 0.0
    %2606 = vmatprep.subr.mxu0 0.0
    %2607 = vmatpush1.msra.mxu0 0.0
    %2608 = vmatprep.subr.mxu0 0.0
    %2609 = vmatpush1.msra.mxu0 0.0
    %2610 = vmatprep.subr.mxu0 0.0
    %2611 = vmatpush1.msra.mxu0 0.0
    %2612 = vmatprep.subr.mxu0 0.0
    %2613 = vmatpush1.msra.mxu0 0.0
    %2614 = vmatprep.subr.mxu0 0.0
    %2615 = vmatpush1.msra.mxu0 0.0
    %2616 = vmatprep.subr.mxu0 0.0
    %2617 = vmatpush1.msra.mxu0 0.0
    %2618 = vmatprep.subr.mxu0 0.0
    %2619 = vmatpush1.msra.mxu0 0.0
    %2620 = vmatprep.subr.mxu0 0.0
    %2621 = vmatpush1.msra.mxu0 0.0
    %2622 = vmatprep.subr.mxu0 0.0
    %2623 = vmatpush1.msra.mxu0 0.0
    %2624 = vmatprep.subr.mxu0 0.0
    %2625 = vmatpush1.msra.mxu0 0.0
    %2626 = vmatprep.subr.mxu0 0.0
    %2627 = vmatpush1.msra.mxu0 0.0
    %2628 = vmatprep.subr.mxu0 0.0
    %2629 = vmatpush1.msra.mxu0 0.0
    %2630 = vmatprep.subr.mxu0 0.0
    %2631 = vmatpush1.msra.mxu0 0.0
    %2632 = vmatprep.subr.mxu0 0.0
    %2633 = vmatpush1.msra.mxu0 0.0
    %2634 = vmatprep.subr.mxu0 0.0
    %2635 = vmatpush1.msra.mxu0 0.0
    %2636 = vmatprep.subr.mxu0 0.0
    %2637 = vmatpush1.msra.mxu0 0.0
    %2638 = vmatprep.subr.mxu0 0.0
    %2639 = vmatpush1.msra.mxu0 0.0
    %2640 = vmatprep.subr.mxu0 0.0
    %2641 = vmatpush1.msra.mxu0 0.0
    %2642 = vmatprep.subr.mxu0 0.0
    %2643 = vmatpush1.msra.mxu0 0.0
    %2644 = vmatprep.subr.mxu0 0.0
    %2645 = vmatpush1.msra.mxu0 0.0
    %2646 = vmatprep.subr.mxu0 0.0
    %2647 = vmatpush1.msra.mxu0 0.0
    %2648 = vmatprep.subr.mxu0 0.0
    %2649 = vmatpush1.msra.mxu0 0.0
    %2650 = vmatprep.subr.mxu0 0.0
    %2651 = vmatpush1.msra.mxu0 0.0
    %2652 = vmatprep.subr.mxu0 0.0
    %2653 = vmatpush1.msra.mxu0 0.0
    %2654 = vmatprep.subr.mxu0 0.0
    %2655 = vmatpush1.msra.mxu0 0.0
    %2656 = vmatprep.subr.mxu0 0.0
    %2657 = vmatpush1.msra.mxu0 0.0
    %2658 = vmatprep.subr.mxu0 0.0
    %2659 = vmatpush1.msra.mxu0 0.0
    %2660 = vmatprep.subr.mxu0 0.0
    %2661 = vmatpush1.msra.mxu0 0.0
    %2662 = vmatprep.subr.mxu0 0.0
    %2663 = vmatpush1.msra.mxu0 0.0
    %2664 = vmatprep.mubr.f32.mxu0 0.0
    %2665 = vmatmul.mubr.f32.gmra.mrb[0].mxu0 %v226
    %v2666 = vpop.f32.mrb[0].mxu0
    %v2667 = vadd.f32 %v2428, %v2666
    %v2668 = vpop.f32.mrb[0].mxu0
    %v2669 = vadd.f32 %v2432, %v2668
    %2670 = vdwg.mxu0
    %2671 = vmatprep.subr.mxu0 0.0
    %2672 = vmatpush1.msra.mxu0 %v2366
    %2673 = vmatprep.subr.mxu0 0.0
    %2674 = vmatpush1.msra.mxu0 %v2456
    %2675 = vmatprep.subr.mxu0 0.0
    %2676 = vmatpush1.msra.mxu0 0.0
    %2677 = vmatprep.subr.mxu0 0.0
    %2678 = vmatpush1.msra.mxu0 0.0
    %2679 = vmatprep.subr.mxu0 0.0
    %2680 = vmatpush1.msra.mxu0 0.0
    %2681 = vmatprep.subr.mxu0 0.0
    %2682 = vmatpush1.msra.mxu0 0.0
    %2683 = vmatprep.subr.mxu0 0.0
    %2684 = vmatpush1.msra.mxu0 0.0
    %2685 = vmatprep.subr.mxu0 0.0
    %2686 = vmatpush1.msra.mxu0 0.0
    %2687 = vmatprep.subr.mxu0 0.0
    %2688 = vmatpush1.msra.mxu0 0.0
    %2689 = vmatprep.subr.mxu0 0.0
    %2690 = vmatpush1.msra.mxu0 0.0
    %2691 = vmatprep.subr.mxu0 0.0
    %2692 = vmatpush1.msra.mxu0 0.0
    %2693 = vmatprep.subr.mxu0 0.0
    %2694 = vmatpush1.msra.mxu0 0.0
    %2695 = vmatprep.subr.mxu0 0.0
    %2696 = vmatpush1.msra.mxu0 0.0
    %2697 = vmatprep.subr.mxu0 0.0
    %2698 = vmatpush1.msra.mxu0 0.0
    %2699 = vmatprep.subr.mxu0 0.0
    %2700 = vmatpush1.msra.mxu0 0.0
    %2701 = vmatprep.subr.mxu0 0.0
    %2702 = vmatpush1.msra.mxu0 0.0
    %2703 = vmatprep.subr.mxu0 0.0
    %2704 = vmatpush1.msra.mxu0 0.0
    %2705 = vmatprep.subr.mxu0 0.0
    %2706 = vmatpush1.msra.mxu0 0.0
    %2707 = vmatprep.subr.mxu0 0.0
    %2708 = vmatpush1.msra.mxu0 0.0
    %2709 = vmatprep.subr.mxu0 0.0
    %2710 = vmatpush1.msra.mxu0 0.0
    %2711 = vmatprep.subr.mxu0 0.0
    %2712 = vmatpush1.msra.mxu0 0.0
    %2713 = vmatprep.subr.mxu0 0.0
    %2714 = vmatpush1.msra.mxu0 0.0
    %2715 = vmatprep.subr.mxu0 0.0
    %2716 = vmatpush1.msra.mxu0 0.0
    %2717 = vmatprep.subr.mxu0 0.0
    %2718 = vmatpush1.msra.mxu0 0.0
    %2719 = vmatprep.subr.mxu0 0.0
    %2720 = vmatpush1.msra.mxu0 0.0
    %2721 = vmatprep.subr.mxu0 0.0
    %2722 = vmatpush1.msra.mxu0 0.0
    %2723 = vmatprep.subr.mxu0 0.0
    %2724 = vmatpush1.msra.mxu0 0.0
    %2725 = vmatprep.subr.mxu0 0.0
    %2726 = vmatpush1.msra.mxu0 0.0
    %2727 = vmatprep.subr.mxu0 0.0
    %2728 = vmatpush1.msra.mxu0 0.0
    %2729 = vmatprep.subr.mxu0 0.0
    %2730 = vmatpush1.msra.mxu0 0.0
    %2731 = vmatprep.subr.mxu0 0.0
    %2732 = vmatpush1.msra.mxu0 0.0
    %2733 = vmatprep.subr.mxu0 0.0
    %2734 = vmatpush1.msra.mxu0 0.0
    %2735 = vmatprep.mubr.f32.mxu0 0.0
    %2736 = vmatmul.mubr.f32.gmra.mrb[0].mxu0 %v226
    %v2737 = vpop.f32.mrb[0].mxu0
    %v2738 = vadd.f32 %v2436, %v2737
    %v2739 = vpop.f32.mrb[0].mxu0
    %2740 = vdwg.mxu0
    %s2741 = scalar_lea.vmem %s4, 1904
    %v2742 = vld [vmem:[%s2741] sm:$0xff]
    %v2743 = vld [vmem:[%s2741 + $0x8] sm:$0xff]
    %v2744 = vld [vmem:[%s2741 + $0x10] sm:$0xff]
    %v2745 = vld [vmem:[%s2741 + $0x18] sm:$0xff]
    %v2746 = vld [vmem:[%s2741 + $0x20] sm:$0xff]
    %v2747 = vld [vmem:[%s2741 + $0x28] sm:$0xff]
    %v2748 = vld [vmem:[%s2741 + $0x30] sm:$0xff]
    %v2749 = vld [vmem:[%s2741 + $0x38] sm:$0xff]
    %v2750 = vld [vmem:[%s2741 + $0x40] sm:$0xff]
    %v2751 = vld [vmem:[%s2741 + $0x48] sm:$0xff]
    %v2752 = vld [vmem:[%s2741 + $0x50] sm:$0xff]
    %v2753 = vld [vmem:[%s2741 + $0x58] sm:$0xff]
    %v2754 = vld [vmem:[%s2741 + $0x60] sm:$0xff]
    %v2755 = vld [vmem:[%s2741 + $0x68] sm:$0xff]
    %v2756 = vld [vmem:[%s2741 + $0x70] sm:$0xff]
    %v2757 = vld [vmem:[%s2741 + $0x78] sm:$0xff]
    %v2758 = vld [vmem:[%s2741 + $0x80] sm:$0xff]
    %v2759 = vld [vmem:[%s2741 + $0x88] sm:$0xff]
    %v2760 = vld [vmem:[%s2741 + $0x90] sm:$0xff]
    %v2761 = vld [vmem:[%s2741 + $0x98] sm:$0xff]
    %v2762 = vld [vmem:[%s2741 + $0xa0] sm:$0xff]
    %v2763 = vld [vmem:[%s2741 + $0xa8] sm:$0xff]
    %v2764 = vld [vmem:[%s2741 + $0xb0] sm:$0xff]
    %v2765 = vld [vmem:[%s2741 + $0xb8] sm:$0xff]
    %v2766 = vld [vmem:[%s2741 + $0xc0] sm:$0xff]
    %v2767 = vld [vmem:[%s2741 + $0xc8] sm:$0xff]
    %v2768 = vld [vmem:[%s2741 + $0xd0] sm:$0xff]
    %v2769 = vld [vmem:[%s2741 + $0xd8] sm:$0xff]
    %v2770 = vld [vmem:[%s2741 + $0xe0] sm:$0xff]
    %v2771 = vld [vmem:[%s2741 + $0xe8] sm:$0xff]
    %v2772 = vld [vmem:[%s2741 + $0xf0] sm:$0xff]
    %v2773 = vld [vmem:[%s2741 + $0xf8] sm:$0xff]
    %v2774 = vld [vmem:[%s2741 + $0x100] sm:$0xff]
    %v2775 = vld [vmem:[%s2741 + $0x108] sm:$0xff]
    %v2776 = vld [vmem:[%s2741 + $0x110] sm:$0xff]
    %v2777 = vld [vmem:[%s2741 + $0x118] sm:$0xff]
    %v2778 = vld [vmem:[%s2741 + $0x120] sm:$0xff]
    %v2779 = vld [vmem:[%s2741 + $0x128] sm:$0xff]
    %v2780 = vld [vmem:[%s2741 + $0x130] sm:$0xff]
    %v2781 = vld [vmem:[%s2741 + $0x138] sm:$0xff]
    %v2782 = vld [vmem:[%s2741 + $0x140] sm:$0xff]
    %v2783 = vld [vmem:[%s2741 + $0x148] sm:$0xff]
    %v2784 = vld [vmem:[%s2741 + $0x150] sm:$0xff]
    %v2785 = vld [vmem:[%s2741 + $0x158] sm:$0xff]
    %v2786 = vld [vmem:[%s2741 + $0x160] sm:$0xff]
    %v2787 = vld [vmem:[%s2741 + $0x168] sm:$0xff]
    %v2788 = vld [vmem:[%s2741 + $0x170] sm:$0xff]
    %v2789 = vld [vmem:[%s2741 + $0x178] sm:$0xff]
    %v2790 = vld [vmem:[%s2741 + $0x180] sm:$0xff]
    %v2791 = vld [vmem:[%s2741 + $0x188] sm:$0xff]
    %v2792 = vld [vmem:[%s2741 + $0x190] sm:$0xff]
    %v2793 = vld [vmem:[%s2741 + $0x198] sm:$0xff]
    %v2794 = vld [vmem:[%s2741 + $0x1a0] sm:$0xff]
    %v2795 = vld [vmem:[%s2741 + $0x1a8] sm:$0xff]
    %v2796 = vld [vmem:[%s2741 + $0x1b0] sm:$0xff]
    %v2797 = vld [vmem:[%s2741 + $0x1b8] sm:$0xff]
    %v2798 = vld [vmem:[%s2741 + $0x1c0] sm:$0xff]
    %v2799 = vld [vmem:[%s2741 + $0x1c8] sm:$0xff]
    %v2800 = vld [vmem:[%s2741 + $0x1d0] sm:$0xff]
    %v2801 = vld [vmem:[%s2741 + $0x1d8] sm:$0xff]
    %v2802 = vld [vmem:[%s2741 + $0x1e0] sm:$0xff]
    %v2803 = vld [vmem:[%s2741 + $0x1e8] sm:$0xff]
    %v2804 = vld [vmem:[%s2741 + $0x1f0] sm:$0xff]
    %v2805 = vld [vmem:[%s2741 + $0x1f8] sm:$0xff]
    %v2806 = vld [vmem:[%s2741 + $0x200] sm:$0xff]
    %v2807 = vld [vmem:[%s2741 + $0x208] sm:$0xff]
    %v2808 = vld [vmem:[%s2741 + $0x210] sm:$0xff]
    %v2809 = vld [vmem:[%s2741 + $0x218] sm:$0xff]
    %v2810 = vld [vmem:[%s2741 + $0x220] sm:$0xff]
    %v2811 = vld [vmem:[%s2741 + $0x228] sm:$0xff]
    %v2812 = vld [vmem:[%s2741 + $0x230] sm:$0xff]
    %v2813 = vld [vmem:[%s2741 + $0x238] sm:$0xff]
    %v2814 = vld [vmem:[%s2741 + $0x240] sm:$0xff]
    %v2815 = vld [vmem:[%s2741 + $0x248] sm:$0xff]
    %v2816 = vld [vmem:[%s2741 + $0x250] sm:$0xff]
    %v2817 = vld [vmem:[%s2741 + $0x258] sm:$0xff]
    %v2818 = vld [vmem:[%s2741 + $0x260] sm:$0xff]
    %v2819 = vld [vmem:[%s2741 + $0x268] sm:$0xff]
    %v2820 = vld [vmem:[%s2741 + $0x270] sm:$0xff]
    %v2821 = vld [vmem:[%s2741 + $0x278] sm:$0xff]
    %v2822 = vld [vmem:[%s2741 + $0x280] sm:$0xff]
    %v2823 = vld [vmem:[%s2741 + $0x288] sm:$0xff]
    %v2824 = vld [vmem:[%s2741 + $0x290] sm:$0xff]
    %v2825 = vld [vmem:[%s2741 + $0x298] sm:$0xff]
    %v2826 = vld [vmem:[%s2741 + $0x2a0] sm:$0xff]
    %v2827 = vld [vmem:[%s2741 + $0x2a8] sm:$0xff]
    %v2828 = vld [vmem:[%s2741 + $0x2b0] sm:$0xff]
    %v2829 = vld [vmem:[%s2741 + $0x2b8] sm:$0xff]
    %v2830 = vld [vmem:[%s2741 + $0x2c0] sm:$0xff]
    %v2831 = vld [vmem:[%s2741 + $0x2c8] sm:$0xff]
    %v2832 = vld [vmem:[%s2741 + $0x2d0] sm:$0xff]
    %v2833 = vld [vmem:[%s2741 + $0x2d8] sm:$0xff]
    %v2834 = vld [vmem:[%s2741 + $0x2e0] sm:$0xff]
    %v2835 = vld [vmem:[%s2741 + $0x2e8] sm:$0xff]
    %v2836 = vld [vmem:[%s2741 + $0x2f0] sm:$0xff]
    %v2837 = vld [vmem:[%s2741 + $0x2f8] sm:$0xff]
    %v2838 = vld [vmem:[%s2741 + $0x300] sm:$0xff]
    %v2839 = vld [vmem:[%s2741 + $0x308] sm:$0xff]
    %v2840 = vld [vmem:[%s2741 + $0x310] sm:$0xff]
    %v2841 = vld [vmem:[%s2741 + $0x318] sm:$0xff]
    %v2842 = vld [vmem:[%s2741 + $0x320] sm:$0xff]
    %v2843 = vld [vmem:[%s2741 + $0x328] sm:$0xff]
    %v2844 = vld [vmem:[%s2741 + $0x330] sm:$0xff]
    %v2845 = vld [vmem:[%s2741 + $0x338] sm:$0xff]
    %v2846 = vld [vmem:[%s2741 + $0x340] sm:$0xff]
    %v2847 = vld [vmem:[%s2741 + $0x348] sm:$0xff]
    %v2848 = vld [vmem:[%s2741 + $0x350] sm:$0xff]
    %v2849 = vld [vmem:[%s2741 + $0x358] sm:$0xff]
    %v2850 = vld [vmem:[%s2741 + $0x360] sm:$0xff]
    %v2851 = vld [vmem:[%s2741 + $0x368] sm:$0xff]
    %v2852 = vld [vmem:[%s2741 + $0x370] sm:$0xff]
    %v2853 = vld [vmem:[%s2741 + $0x378] sm:$0xff]
    %v2854 = vld [vmem:[%s2741 + $0x380] sm:$0x7f]
    %v2855 = vld [vmem:[%s2741 + $0x388] sm:$0x7f]
    %v2856 = vld [vmem:[%s2741 + $0x390] sm:$0x7f]
    %v2857 = vld [vmem:[%s2741 + $0x398] sm:$0x7f]
    %v2858 = vld [vmem:[%s2741 + $0x3a0] sm:$0x7f]
    %v2859 = vld [vmem:[%s2741 + $0x3a8] sm:$0x7f]
    %v2860 = vld [vmem:[%s2741 + $0x3b0] sm:$0x7f]
    %v2862 = vsel %vm665, %v2854, 0
    %v2865 = vsel %vm665, %v2855, 0
    %v2868 = vsel %vm665, %v2856, 0
    %v2871 = vsel %vm665, %v2857, 0
    %v2874 = vsel %vm665, %v2858, 0
    %v2877 = vsel %vm665, %v2859, 0
    %v2880 = vsel %vm665, %v2860, 0
    %2882 = vmatprep.subr.mxu0 %v2743
    %2883 = vmatpush1.msra.mxu0 %v2742
    %2884 = vmatprep.subr.mxu0 %v2750
    %2885 = vmatpush1.msra.mxu0 %v2749
    %2886 = vmatprep.subr.mxu0 %v2757
    %2887 = vmatpush1.msra.mxu0 %v2756
    %2888 = vmatprep.subr.mxu0 %v2764
    %2889 = vmatpush1.msra.mxu0 %v2763
    %2890 = vmatprep.subr.mxu0 %v2771
    %2891 = vmatpush1.msra.mxu0 %v2770
    %2892 = vmatprep.subr.mxu0 %v2778
    %2893 = vmatpush1.msra.mxu0 %v2777
    %2894 = vmatprep.subr.mxu0 %v2785
    %2895 = vmatpush1.msra.mxu0 %v2784
    %2896 = vmatprep.subr.mxu0 %v2792
    %2897 = vmatpush1.msra.mxu0 %v2791
    %2898 = vmatprep.subr.mxu0 %v2799
    %2899 = vmatpush1.msra.mxu0 %v2798
    %2900 = vmatprep.subr.mxu0 %v2806
    %2901 = vmatpush1.msra.mxu0 %v2805
    %2902 = vmatprep.subr.mxu0 %v2813
    %2903 = vmatpush1.msra.mxu0 %v2812
    %2904 = vmatprep.subr.mxu0 %v2820
    %2905 = vmatpush1.msra.mxu0 %v2819
    %2906 = vmatprep.subr.mxu0 %v2827
    %2907 = vmatpush1.msra.mxu0 %v2826
    %2908 = vmatprep.subr.mxu0 %v2834
    %2909 = vmatpush1.msra.mxu0 %v2833
    %2910 = vmatprep.subr.mxu0 %v2841
    %2911 = vmatpush1.msra.mxu0 %v2840
    %2912 = vmatprep.subr.mxu0 %v2848
    %2913 = vmatpush1.msra.mxu0 %v2847
    %2914 = vmatprep.subr.mxu0 %v2865
    %2915 = vmatpush1.msra.mxu0 %v2862
    %2916 = vmatprep.subr.mxu0 0.0
    %2917 = vmatpush1.msra.mxu0 0.0
    %2918 = vmatprep.subr.mxu0 0.0
    %2919 = vmatpush1.msra.mxu0 0.0
    %2920 = vmatprep.subr.mxu0 0.0
    %2921 = vmatpush1.msra.mxu0 0.0
    %2922 = vmatprep.subr.mxu0 0.0
    %2923 = vmatpush1.msra.mxu0 0.0
    %2924 = vmatprep.subr.mxu0 0.0
    %2925 = vmatpush1.msra.mxu0 0.0
    %2926 = vmatprep.subr.mxu0 0.0
    %2927 = vmatpush1.msra.mxu0 0.0
    %2928 = vmatprep.subr.mxu0 0.0
    %2929 = vmatpush1.msra.mxu0 0.0
    %2930 = vmatprep.subr.mxu0 0.0
    %2931 = vmatpush1.msra.mxu0 0.0
    %2932 = vmatprep.subr.mxu0 0.0
    %2933 = vmatpush1.msra.mxu0 0.0
    %2934 = vmatprep.subr.mxu0 0.0
    %2935 = vmatpush1.msra.mxu0 0.0
    %2936 = vmatprep.subr.mxu0 0.0
    %2937 = vmatpush1.msra.mxu0 0.0
    %2938 = vmatprep.subr.mxu0 0.0
    %2939 = vmatpush1.msra.mxu0 0.0
    %2940 = vmatprep.subr.mxu0 0.0
    %2941 = vmatpush1.msra.mxu0 0.0
    %2942 = vmatprep.subr.mxu0 0.0
    %2943 = vmatpush1.msra.mxu0 0.0
    %2944 = vmatprep.subr.mxu0 0.0
    %2945 = vmatpush1.msra.mxu0 0.0
    %2946 = vmatprep.mubr.f32.mxu0 %v663
    %2947 = vmatmul.mubr.f32.gmra.mrb[0].mxu0 %v659
    %v2948 = vpop.f32.mrb[0].mxu0
    %v2949 = vadd.f32 0.0, %v2948
    %v2950 = vpop.f32.mrb[0].mxu0
    %v2951 = vadd.f32 0.0, %v2950
    %2952 = vdwg.mxu0
    %2953 = vmatprep.subr.mxu0 %v2745
    %2954 = vmatpush1.msra.mxu0 %v2744
    %2955 = vmatprep.subr.mxu0 %v2752
    %2956 = vmatpush1.msra.mxu0 %v2751
    %2957 = vmatprep.subr.mxu0 %v2759
    %2958 = vmatpush1.msra.mxu0 %v2758
    %2959 = vmatprep.subr.mxu0 %v2766
    %2960 = vmatpush1.msra.mxu0 %v2765
    %2961 = vmatprep.subr.mxu0 %v2773
    %2962 = vmatpush1.msra.mxu0 %v2772
    %2963 = vmatprep.subr.mxu0 %v2780
    %2964 = vmatpush1.msra.mxu0 %v2779
    %2965 = vmatprep.subr.mxu0 %v2787
    %2966 = vmatpush1.msra.mxu0 %v2786
    %2967 = vmatprep.subr.mxu0 %v2794
    %2968 = vmatpush1.msra.mxu0 %v2793
    %2969 = vmatprep.subr.mxu0 %v2801
    %2970 = vmatpush1.msra.mxu0 %v2800
    %2971 = vmatprep.subr.mxu0 %v2808
    %2972 = vmatpush1.msra.mxu0 %v2807
    %2973 = vmatprep.subr.mxu0 %v2815
    %2974 = vmatpush1.msra.mxu0 %v2814
    %2975 = vmatprep.subr.mxu0 %v2822
    %2976 = vmatpush1.msra.mxu0 %v2821
    %2977 = vmatprep.subr.mxu0 %v2829
    %2978 = vmatpush1.msra.mxu0 %v2828
    %2979 = vmatprep.subr.mxu0 %v2836
    %2980 = vmatpush1.msra.mxu0 %v2835
    %2981 = vmatprep.subr.mxu0 %v2843
    %2982 = vmatpush1.msra.mxu0 %v2842
    %2983 = vmatprep.subr.mxu0 %v2850
    %2984 = vmatpush1.msra.mxu0 %v2849
    %2985 = vmatprep.subr.mxu0 %v2871
    %2986 = vmatpush1.msra.mxu0 %v2868
    %2987 = vmatprep.subr.mxu0 0.0
    %2988 = vmatpush1.msra.mxu0 0.0
    %2989 = vmatprep.subr.mxu0 0.0
    %2990 = vmatpush1.msra.mxu0 0.0
    %2991 = vmatprep.subr.mxu0 0.0
    %2992 = vmatpush1.msra.mxu0 0.0
    %2993 = vmatprep.subr.mxu0 0.0
    %2994 = vmatpush1.msra.mxu0 0.0
    %2995 = vmatprep.subr.mxu0 0.0
    %2996 = vmatpush1.msra.mxu0 0.0
    %2997 = vmatprep.subr.mxu0 0.0
    %2998 = vmatpush1.msra.mxu0 0.0
    %2999 = vmatprep.subr.mxu0 0.0
    %3000 = vmatpush1.msra.mxu0 0.0
    %3001 = vmatprep.subr.mxu0 0.0
    %3002 = vmatpush1.msra.mxu0 0.0
    %3003 = vmatprep.subr.mxu0 0.0
    %3004 = vmatpush1.msra.mxu0 0.0
    %3005 = vmatprep.subr.mxu0 0.0
    %3006 = vmatpush1.msra.mxu0 0.0
    %3007 = vmatprep.subr.mxu0 0.0
    %3008 = vmatpush1.msra.mxu0 0.0
    %3009 = vmatprep.subr.mxu0 0.0
    %3010 = vmatpush1.msra.mxu0 0.0
    %3011 = vmatprep.subr.mxu0 0.0
    %3012 = vmatpush1.msra.mxu0 0.0
    %3013 = vmatprep.subr.mxu0 0.0
    %3014 = vmatpush1.msra.mxu0 0.0
    %3015 = vmatprep.subr.mxu0 0.0
    %3016 = vmatpush1.msra.mxu0 0.0
    %3017 = vmatprep.mubr.f32.mxu0 %v663
    %3018 = vmatmul.mubr.f32.gmra.mrb[0].mxu0 %v659
    %v3019 = vpop.f32.mrb[0].mxu0
    %v3020 = vadd.f32 0.0, %v3019
    %v3021 = vpop.f32.mrb[0].mxu0
    %v3022 = vadd.f32 0.0, %v3021
    %3023 = vdwg.mxu0
    %3024 = vmatprep.subr.mxu0 %v2747
    %3025 = vmatpush1.msra.mxu0 %v2746
    %3026 = vmatprep.subr.mxu0 %v2754
    %3027 = vmatpush1.msra.mxu0 %v2753
    %3028 = vmatprep.subr.mxu0 %v2761
    %3029 = vmatpush1.msra.mxu0 %v2760
    %3030 = vmatprep.subr.mxu0 %v2768
    %3031 = vmatpush1.msra.mxu0 %v2767
    %3032 = vmatprep.subr.mxu0 %v2775
    %3033 = vmatpush1.msra.mxu0 %v2774
    %3034 = vmatprep.subr.mxu0 %v2782
    %3035 = vmatpush1.msra.mxu0 %v2781
    %3036 = vmatprep.subr.mxu0 %v2789
    %3037 = vmatpush1.msra.mxu0 %v2788
    %3038 = vmatprep.subr.mxu0 %v2796
    %3039 = vmatpush1.msra.mxu0 %v2795
    %3040 = vmatprep.subr.mxu0 %v2803
    %3041 = vmatpush1.msra.mxu0 %v2802
    %3042 = vmatprep.subr.mxu0 %v2810
    %3043 = vmatpush1.msra.mxu0 %v2809
    %3044 = vmatprep.subr.mxu0 %v2817
    %3045 = vmatpush1.msra.mxu0 %v2816
    %3046 = vmatprep.subr.mxu0 %v2824
    %3047 = vmatpush1.msra.mxu0 %v2823
    %3048 = vmatprep.subr.mxu0 %v2831
    %3049 = vmatpush1.msra.mxu0 %v2830
    %3050 = vmatprep.subr.mxu0 %v2838
    %3051 = vmatpush1.msra.mxu0 %v2837
    %3052 = vmatprep.subr.mxu0 %v2845
    %3053 = vmatpush1.msra.mxu0 %v2844
    %3054 = vmatprep.subr.mxu0 %v2852
    %3055 = vmatpush1.msra.mxu0 %v2851
    %3056 = vmatprep.subr.mxu0 %v2877
    %3057 = vmatpush1.msra.mxu0 %v2874
    %3058 = vmatprep.subr.mxu0 0.0
    %3059 = vmatpush1.msra.mxu0 0.0
    %3060 = vmatprep.subr.mxu0 0.0
    %3061 = vmatpush1.msra.mxu0 0.0
    %3062 = vmatprep.subr.mxu0 0.0
    %3063 = vmatpush1.msra.mxu0 0.0
    %3064 = vmatprep.subr.mxu0 0.0
    %3065 = vmatpush1.msra.mxu0 0.0
    %3066 = vmatprep.subr.mxu0 0.0
    %3067 = vmatpush1.msra.mxu0 0.0
    %3068 = vmatprep.subr.mxu0 0.0
    %3069 = vmatpush1.msra.mxu0 0.0
    %3070 = vmatprep.subr.mxu0 0.0
    %3071 = vmatpush1.msra.mxu0 0.0
    %3072 = vmatprep.subr.mxu0 0.0
    %3073 = vmatpush1.msra.mxu0 0.0
    %3074 = vmatprep.subr.mxu0 0.0
    %3075 = vmatpush1.msra.mxu0 0.0
    %3076 = vmatprep.subr.mxu0 0.0
    %3077 = vmatpush1.msra.mxu0 0.0
    %3078 = vmatprep.subr.mxu0 0.0
    %3079 = vmatpush1.msra.mxu0 0.0
    %3080 = vmatprep.subr.mxu0 0.0
    %3081 = vmatpush1.msra.mxu0 0.0
    %3082 = vmatprep.subr.mxu0 0.0
    %3083 = vmatpush1.msra.mxu0 0.0
    %3084 = vmatprep.subr.mxu0 0.0
    %3085 = vmatpush1.msra.mxu0 0.0
    %3086 = vmatprep.subr.mxu0 0.0
    %3087 = vmatpush1.msra.mxu0 0.0
    %3088 = vmatprep.mubr.f32.mxu0 %v663
    %3089 = vmatmul.mubr.f32.gmra.mrb[0].mxu0 %v659
    %v3090 = vpop.f32.mrb[0].mxu0
    %v3091 = vadd.f32 0.0, %v3090
    %v3092 = vpop.f32.mrb[0].mxu0
    %v3093 = vadd.f32 0.0, %v3092
    %3094 = vdwg.mxu0
    %3095 = vmatprep.subr.mxu0 0.0
    %3096 = vmatpush1.msra.mxu0 %v2748
    %3097 = vmatprep.subr.mxu0 0.0
    %3098 = vmatpush1.msra.mxu0 %v2755
    %3099 = vmatprep.subr.mxu0 0.0
    %3100 = vmatpush1.msra.mxu0 %v2762
    %3101 = vmatprep.subr.mxu0 0.0
    %3102 = vmatpush1.msra.mxu0 %v2769
    %3103 = vmatprep.subr.mxu0 0.0
    %3104 = vmatpush1.msra.mxu0 %v2776
    %3105 = vmatprep.subr.mxu0 0.0
    %3106 = vmatpush1.msra.mxu0 %v2783
    %3107 = vmatprep.subr.mxu0 0.0
    %3108 = vmatpush1.msra.mxu0 %v2790
    %3109 = vmatprep.subr.mxu0 0.0
    %3110 = vmatpush1.msra.mxu0 %v2797
    %3111 = vmatprep.subr.mxu0 0.0
    %3112 = vmatpush1.msra.mxu0 %v2804
    %3113 = vmatprep.subr.mxu0 0.0
    %3114 = vmatpush1.msra.mxu0 %v2811
    %3115 = vmatprep.subr.mxu0 0.0
    %3116 = vmatpush1.msra.mxu0 %v2818
    %3117 = vmatprep.subr.mxu0 0.0
    %3118 = vmatpush1.msra.mxu0 %v2825
    %3119 = vmatprep.subr.mxu0 0.0
    %3120 = vmatpush1.msra.mxu0 %v2832
    %3121 = vmatprep.subr.mxu0 0.0
    %3122 = vmatpush1.msra.mxu0 %v2839
    %3123 = vmatprep.subr.mxu0 0.0
    %3124 = vmatpush1.msra.mxu0 %v2846
    %3125 = vmatprep.subr.mxu0 0.0
    %3126 = vmatpush1.msra.mxu0 %v2853
    %3127 = vmatprep.subr.mxu0 0.0
    %3128 = vmatpush1.msra.mxu0 %v2880
    %3129 = vmatprep.subr.mxu0 0.0
    %3130 = vmatpush1.msra.mxu0 0.0
    %3131 = vmatprep.subr.mxu0 0.0
    %3132 = vmatpush1.msra.mxu0 0.0
    %3133 = vmatprep.subr.mxu0 0.0
    %3134 = vmatpush1.msra.mxu0 0.0
    %3135 = vmatprep.subr.mxu0 0.0
    %3136 = vmatpush1.msra.mxu0 0.0
    %3137 = vmatprep.subr.mxu0 0.0
    %3138 = vmatpush1.msra.mxu0 0.0
    %3139 = vmatprep.subr.mxu0 0.0
    %3140 = vmatpush1.msra.mxu0 0.0
    %3141 = vmatprep.subr.mxu0 0.0
    %3142 = vmatpush1.msra.mxu0 0.0
    %3143 = vmatprep.subr.mxu0 0.0
    %3144 = vmatpush1.msra.mxu0 0.0
    %3145 = vmatprep.subr.mxu0 0.0
    %3146 = vmatpush1.msra.mxu0 0.0
    %3147 = vmatprep.subr.mxu0 0.0
    %3148 = vmatpush1.msra.mxu0 0.0
    %3149 = vmatprep.subr.mxu0 0.0
    %3150 = vmatpush1.msra.mxu0 0.0
    %3151 = vmatprep.subr.mxu0 0.0
    %3152 = vmatpush1.msra.mxu0 0.0
    %3153 = vmatprep.subr.mxu0 0.0
    %3154 = vmatpush1.msra.mxu0 0.0
    %3155 = vmatprep.subr.mxu0 0.0
    %3156 = vmatpush1.msra.mxu0 0.0
    %3157 = vmatprep.subr.mxu0 0.0
    %3158 = vmatpush1.msra.mxu0 0.0
    %3159 = vmatprep.mubr.f32.mxu0 %v663
    %3160 = vmatmul.mubr.f32.gmra.mrb[0].mxu0 %v659
    %v3161 = vpop.f32.mrb[0].mxu0
    %v3162 = vadd.f32 0.0, %v3161
    %v3163 = vpop.f32.mrb[0].mxu0
    %3164 = vdwg.mxu0
    %v3165 = vadd.f32 %v2525, %v2949
    %v3166 = vadd.f32 %v2527, %v2951
    %v3167 = vadd.f32 %v2596, %v3020
    %v3168 = vadd.f32 %v2598, %v3022
    %v3169 = vadd.f32 %v2667, %v3091
    %v3170 = vadd.f32 %v2669, %v3093
    %v3171 = vadd.f32 %v2738, %v3162
    %v3173 = vsel %vm224, %v2738, 0
    %3175 = vmatprep.subr.mxu0 0.0
    %3176 = vmatpush1.msra.mxu0 %v45
    %3177 = vmatprep.subr.mxu0 0.0
    %3178 = vmatpush1.msra.mxu0 %v46
    %3179 = vmatprep.subr.mxu0 0.0
    %3180 = vmatpush1.msra.mxu0 %v47
    %3181 = vmatprep.subr.mxu0 0.0
    %3182 = vmatpush1.msra.mxu0 %v48
    %3183 = vmatprep.subr.mxu0 0.0
    %3184 = vmatpush1.msra.mxu0 %v49
    %3185 = vmatprep.subr.mxu0 0.0
    %3186 = vmatpush1.msra.mxu0 %v50
    %3187 = vmatprep.subr.mxu0 0.0
    %3188 = vmatpush1.msra.mxu0 %v51
    %3189 = vmatprep.subr.mxu0 0.0
    %3190 = vmatpush1.msra.mxu0 %v52
    %3191 = vmatprep.subr.mxu0 0.0
    %3192 = vmatpush1.msra.mxu0 %v53
    %3193 = vmatprep.subr.mxu0 0.0
    %3194 = vmatpush1.msra.mxu0 %v54
    %3195 = vmatprep.subr.mxu0 0.0
    %3196 = vmatpush1.msra.mxu0 %v55
    %3197 = vmatprep.subr.mxu0 0.0
    %3198 = vmatpush1.msra.mxu0 %v56
    %3199 = vmatprep.subr.mxu0 0.0
    %3200 = vmatpush1.msra.mxu0 %v57
    %3201 = vmatprep.subr.mxu0 0.0
    %3202 = vmatpush1.msra.mxu0 %v58
    %3203 = vmatprep.subr.mxu0 0.0
    %3204 = vmatpush1.msra.mxu0 %v59
    %3205 = vmatprep.subr.mxu0 0.0
    %3206 = vmatpush1.msra.mxu0 %v60
    %3207 = vmatprep.subr.mxu0 0.0
    %3208 = vmatpush1.msra.mxu0 %v61
    %3209 = vmatprep.subr.mxu0 0.0
    %3210 = vmatpush1.msra.mxu0 %v62
    %3211 = vmatprep.subr.mxu0 0.0
    %3212 = vmatpush1.msra.mxu0 %v63
    %3213 = vmatprep.subr.mxu0 0.0
    %3214 = vmatpush1.msra.mxu0 %v64
    %3215 = vmatprep.subr.mxu0 0.0
    %3216 = vmatpush1.msra.mxu0 %v65
    %3217 = vmatprep.subr.mxu0 0.0
    %3218 = vmatpush1.msra.mxu0 %v66
    %3219 = vmatprep.subr.mxu0 0.0
    %3220 = vmatpush1.msra.mxu0 %v67
    %3221 = vmatprep.subr.mxu0 0.0
    %3222 = vmatpush1.msra.mxu0 %v68
    %3223 = vmatprep.subr.mxu0 0.0
    %3224 = vmatpush1.msra.mxu0 %v69
    %3225 = vmatprep.subr.mxu0 0.0
    %3226 = vmatpush1.msra.mxu0 %v70
    %3227 = vmatprep.subr.mxu0 0.0
    %3228 = vmatpush1.msra.mxu0 %v71
    %3229 = vmatprep.subr.mxu0 0.0
    %3230 = vmatpush1.msra.mxu0 %v72
    %3231 = vmatprep.subr.mxu0 0.0
    %3232 = vmatpush1.msra.mxu0 %v73
    %3233 = vmatprep.subr.mxu0 0.0
    %3234 = vmatpush1.msra.mxu0 %v74
    %3235 = vmatprep.subr.mxu0 0.0
    %3236 = vmatpush1.msra.mxu0 %v75
    %3237 = vmatprep.subr.mxu0 0.0
    %3238 = vmatpush1.msra.mxu0 %v76
    %3239 = vmatprep.mubr.f32.mxu0 %v2527
    %3240 = vmatmul.mubr.f32.gmra.mrb[0].mxu0 %v2525
    %v3241 = vpop.f32.mrb[0].mxu0
    %v3242 = vadd.f32 0.0, %v3241
    %v3243 = vpop.f32.mrb[0].mxu0
    %3244 = vdwg.mxu0
    %3245 = vmatprep.subr.mxu0 0.0
    %3246 = vmatpush1.msra.mxu0 %v77
    %3247 = vmatprep.subr.mxu0 0.0
    %3248 = vmatpush1.msra.mxu0 %v78
    %3249 = vmatprep.subr.mxu0 0.0
    %3250 = vmatpush1.msra.mxu0 %v79
    %3251 = vmatprep.subr.mxu0 0.0
    %3252 = vmatpush1.msra.mxu0 %v80
    %3253 = vmatprep.subr.mxu0 0.0
    %3254 = vmatpush1.msra.mxu0 %v81
    %3255 = vmatprep.subr.mxu0 0.0
    %3256 = vmatpush1.msra.mxu0 %v82
    %3257 = vmatprep.subr.mxu0 0.0
    %3258 = vmatpush1.msra.mxu0 %v83
    %3259 = vmatprep.subr.mxu0 0.0
    %3260 = vmatpush1.msra.mxu0 %v84
    %3261 = vmatprep.subr.mxu0 0.0
    %3262 = vmatpush1.msra.mxu0 %v85
    %3263 = vmatprep.subr.mxu0 0.0
    %3264 = vmatpush1.msra.mxu0 %v86
    %3265 = vmatprep.subr.mxu0 0.0
    %3266 = vmatpush1.msra.mxu0 %v87
    %3267 = vmatprep.subr.mxu0 0.0
    %3268 = vmatpush1.msra.mxu0 %v88
    %3269 = vmatprep.subr.mxu0 0.0
    %3270 = vmatpush1.msra.mxu0 %v89
    %3271 = vmatprep.subr.mxu0 0.0
    %3272 = vmatpush1.msra.mxu0 %v90
    %3273 = vmatprep.subr.mxu0 0.0
    %3274 = vmatpush1.msra.mxu0 %v91
    %3275 = vmatprep.subr.mxu0 0.0
    %3276 = vmatpush1.msra.mxu0 %v92
    %3277 = vmatprep.subr.mxu0 0.0
    %3278 = vmatpush1.msra.mxu0 %v93
    %3279 = vmatprep.subr.mxu0 0.0
    %3280 = vmatpush1.msra.mxu0 %v94
    %3281 = vmatprep.subr.mxu0 0.0
    %3282 = vmatpush1.msra.mxu0 %v95
    %3283 = vmatprep.subr.mxu0 0.0
    %3284 = vmatpush1.msra.mxu0 %v96
    %3285 = vmatprep.subr.mxu0 0.0
    %3286 = vmatpush1.msra.mxu0 %v97
    %3287 = vmatprep.subr.mxu0 0.0
    %3288 = vmatpush1.msra.mxu0 %v98
    %3289 = vmatprep.subr.mxu0 0.0
    %3290 = vmatpush1.msra.mxu0 %v99
    %3291 = vmatprep.subr.mxu0 0.0
    %3292 = vmatpush1.msra.mxu0 %v100
    %3293 = vmatprep.subr.mxu0 0.0
    %3294 = vmatpush1.msra.mxu0 %v101
    %3295 = vmatprep.subr.mxu0 0.0
    %3296 = vmatpush1.msra.mxu0 %v102
    %3297 = vmatprep.subr.mxu0 0.0
    %3298 = vmatpush1.msra.mxu0 %v103
    %3299 = vmatprep.subr.mxu0 0.0
    %3300 = vmatpush1.msra.mxu0 %v104
    %3301 = vmatprep.subr.mxu0 0.0
    %3302 = vmatpush1.msra.mxu0 %v105
    %3303 = vmatprep.subr.mxu0 0.0
    %3304 = vmatpush1.msra.mxu0 %v106
    %3305 = vmatprep.subr.mxu0 0.0
    %3306 = vmatpush1.msra.mxu0 %v107
    %3307 = vmatprep.subr.mxu0 0.0
    %3308 = vmatpush1.msra.mxu0 %v108
    %3309 = vmatprep.mubr.f32.mxu0 %v2598
    %3310 = vmatmul.mubr.f32.gmra.mrb[0].mxu0 %v2596
    %v3311 = vpop.f32.mrb[0].mxu0
    %v3312 = vadd.f32 %v3242, %v3311
    %v3313 = vpop.f32.mrb[0].mxu0
    %3314 = vdwg.mxu0
    %3315 = vmatprep.subr.mxu0 0.0
    %3316 = vmatpush1.msra.mxu0 %v109
    %3317 = vmatprep.subr.mxu0 0.0
    %3318 = vmatpush1.msra.mxu0 %v110
    %3319 = vmatprep.subr.mxu0 0.0
    %3320 = vmatpush1.msra.mxu0 %v111
    %3321 = vmatprep.subr.mxu0 0.0
    %3322 = vmatpush1.msra.mxu0 %v112
    %3323 = vmatprep.subr.mxu0 0.0
    %3324 = vmatpush1.msra.mxu0 %v113
    %3325 = vmatprep.subr.mxu0 0.0
    %3326 = vmatpush1.msra.mxu0 %v114
    %3327 = vmatprep.subr.mxu0 0.0
    %3328 = vmatpush1.msra.mxu0 %v115
    %3329 = vmatprep.subr.mxu0 0.0
    %3330 = vmatpush1.msra.mxu0 %v116
    %3331 = vmatprep.subr.mxu0 0.0
    %3332 = vmatpush1.msra.mxu0 %v117
    %3333 = vmatprep.subr.mxu0 0.0
    %3334 = vmatpush1.msra.mxu0 %v118
    %3335 = vmatprep.subr.mxu0 0.0
    %3336 = vmatpush1.msra.mxu0 %v119
    %3337 = vmatprep.subr.mxu0 0.0
    %3338 = vmatpush1.msra.mxu0 %v120
    %3339 = vmatprep.subr.mxu0 0.0
    %3340 = vmatpush1.msra.mxu0 %v121
    %3341 = vmatprep.subr.mxu0 0.0
    %3342 = vmatpush1.msra.mxu0 %v122
    %3343 = vmatprep.subr.mxu0 0.0
    %3344 = vmatpush1.msra.mxu0 %v123
    %3345 = vmatprep.subr.mxu0 0.0
    %3346 = vmatpush1.msra.mxu0 %v124
    %3347 = vmatprep.subr.mxu0 0.0
    %3348 = vmatpush1.msra.mxu0 %v125
    %3349 = vmatprep.subr.mxu0 0.0
    %3350 = vmatpush1.msra.mxu0 %v126
    %3351 = vmatprep.subr.mxu0 0.0
    %3352 = vmatpush1.msra.mxu0 %v127
    %3353 = vmatprep.subr.mxu0 0.0
    %3354 = vmatpush1.msra.mxu0 %v128
    %3355 = vmatprep.subr.mxu0 0.0
    %3356 = vmatpush1.msra.mxu0 %v129
    %3357 = vmatprep.subr.mxu0 0.0
    %3358 = vmatpush1.msra.mxu0 %v130
    %3359 = vmatprep.subr.mxu0 0.0
    %3360 = vmatpush1.msra.mxu0 %v131
    %3361 = vmatprep.subr.mxu0 0.0
    %3362 = vmatpush1.msra.mxu0 %v132
    %3363 = vmatprep.subr.mxu0 0.0
    %3364 = vmatpush1.msra.mxu0 %v133
    %3365 = vmatprep.subr.mxu0 0.0
    %3366 = vmatpush1.msra.mxu0 %v134
    %3367 = vmatprep.subr.mxu0 0.0
    %3368 = vmatpush1.msra.mxu0 %v135
    %3369 = vmatprep.subr.mxu0 0.0
    %3370 = vmatpush1.msra.mxu0 %v136
    %3371 = vmatprep.subr.mxu0 0.0
    %3372 = vmatpush1.msra.mxu0 %v137
    %3373 = vmatprep.subr.mxu0 0.0
    %3374 = vmatpush1.msra.mxu0 %v138
    %3375 = vmatprep.subr.mxu0 0.0
    %3376 = vmatpush1.msra.mxu0 %v139
    %3377 = vmatprep.subr.mxu0 0.0
    %3378 = vmatpush1.msra.mxu0 %v140
    %3379 = vmatprep.mubr.f32.mxu0 %v2669
    %3380 = vmatmul.mubr.f32.gmra.mrb[0].mxu0 %v2667
    %v3381 = vpop.f32.mrb[0].mxu0
    %v3382 = vadd.f32 %v3312, %v3381
    %v3383 = vpop.f32.mrb[0].mxu0
    %3384 = vdwg.mxu0
    %3385 = vmatprep.subr.mxu0 0.0
    %3386 = vmatpush1.msra.mxu0 %v141
    %3387 = vmatprep.subr.mxu0 0.0
    %3388 = vmatpush1.msra.mxu0 %v981
    %3389 = vmatprep.subr.mxu0 0.0
    %3390 = vmatpush1.msra.mxu0 0.0
    %3391 = vmatprep.subr.mxu0 0.0
    %3392 = vmatpush1.msra.mxu0 0.0
    %3393 = vmatprep.subr.mxu0 0.0
    %3394 = vmatpush1.msra.mxu0 0.0
    %3395 = vmatprep.subr.mxu0 0.0
    %3396 = vmatpush1.msra.mxu0 0.0
    %3397 = vmatprep.subr.mxu0 0.0
    %3398 = vmatpush1.msra.mxu0 0.0
    %3399 = vmatprep.subr.mxu0 0.0
    %3400 = vmatpush1.msra.mxu0 0.0
    %3401 = vmatprep.subr.mxu0 0.0
    %3402 = vmatpush1.msra.mxu0 0.0
    %3403 = vmatprep.subr.mxu0 0.0
    %3404 = vmatpush1.msra.mxu0 0.0
    %3405 = vmatprep.subr.mxu0 0.0
    %3406 = vmatpush1.msra.mxu0 0.0
    %3407 = vmatprep.subr.mxu0 0.0
    %3408 = vmatpush1.msra.mxu0 0.0
    %3409 = vmatprep.subr.mxu0 0.0
    %3410 = vmatpush1.msra.mxu0 0.0
    %3411 = vmatprep.subr.mxu0 0.0
    %3412 = vmatpush1.msra.mxu0 0.0
    %3413 = vmatprep.subr.mxu0 0.0
    %3414 = vmatpush1.msra.mxu0 0.0
    %3415 = vmatprep.subr.mxu0 0.0
    %3416 = vmatpush1.msra.mxu0 0.0
    %3417 = vmatprep.subr.mxu0 0.0
    %3418 = vmatpush1.msra.mxu0 0.0
    %3419 = vmatprep.subr.mxu0 0.0
    %3420 = vmatpush1.msra.mxu0 0.0
    %3421 = vmatprep.subr.mxu0 0.0
    %3422 = vmatpush1.msra.mxu0 0.0
    %3423 = vmatprep.subr.mxu0 0.0
    %3424 = vmatpush1.msra.mxu0 0.0
    %3425 = vmatprep.subr.mxu0 0.0
    %3426 = vmatpush1.msra.mxu0 0.0
    %3427 = vmatprep.subr.mxu0 0.0
    %3428 = vmatpush1.msra.mxu0 0.0
    %3429 = vmatprep.subr.mxu0 0.0
    %3430 = vmatpush1.msra.mxu0 0.0
    %3431 = vmatprep.subr.mxu0 0.0
    %3432 = vmatpush1.msra.mxu0 0.0
    %3433 = vmatprep.subr.mxu0 0.0
    %3434 = vmatpush1.msra.mxu0 0.0
    %3435 = vmatprep.subr.mxu0 0.0
    %3436 = vmatpush1.msra.mxu0 0.0
    %3437 = vmatprep.subr.mxu0 0.0
    %3438 = vmatpush1.msra.mxu0 0.0
    %3439 = vmatprep.subr.mxu0 0.0
    %3440 = vmatpush1.msra.mxu0 0.0
    %3441 = vmatprep.subr.mxu0 0.0
    %3442 = vmatpush1.msra.mxu0 0.0
    %3443 = vmatprep.subr.mxu0 0.0
    %3444 = vmatpush1.msra.mxu0 0.0
    %3445 = vmatprep.subr.mxu0 0.0
    %3446 = vmatpush1.msra.mxu0 0.0
    %3447 = vmatprep.subr.mxu0 0.0
    %3448 = vmatpush1.msra.mxu0 0.0
    %3449 = vmatprep.mubr.f32.mxu0 0.0
    %3450 = vmatmul.mubr.f32.gmra.mrb[0].mxu0 %v3173
    %v3451 = vpop.f32.mrb[0].mxu0
    %v3452 = vadd.f32 %v3382, %v3451
    %v3453 = vpop.f32.mrb[0].mxu0
    %3454 = vdwg.mxu0
    %v3462 = vcombine.low %v970, %v971
    %v3463 = vcombine.low %v972, %v973
    %v3464 = vcombine.low %v974, %v975
    %v3466 = vunpack.c.l.s4 1966171168
    %v3467 = vunpack.c.0.s8 %v3466
    %v3468 = vlaneseq
    %v3469 = vshrl.u32 %v3468, 7
    %v3470 = vsub.s32 %v3467, %v3469
    %v3471 = vrot.slane %v3462, %v3470
    %v3473 = vunpack.c.l.s4 1966171168
    %v3474 = vunpack.c.0.s8 %v3473
    %v3475 = vlaneseq
    %v3476 = vshrl.u32 %v3475, 7
    %v3477 = vsub.s32 %v3474, %v3476
    %v3478 = vrot.slane %v3463, %v3477
    %v3480 = vunpack.c.l.s4 1966171168
    %v3481 = vunpack.c.0.s8 %v3480
    %v3482 = vlaneseq
    %v3483 = vshrl.u32 %v3482, 7
    %v3484 = vsub.s32 %v3481, %v3483
    %v3485 = vrot.slane %v3464, %v3484
    %v3487 = vunpack.c.l.s4 1966171168
    %v3488 = vunpack.c.0.s8 %v3487
    %v3489 = vlaneseq
    %v3490 = vshrl.u32 %v3489, 7
    %v3491 = vsub.s32 %v3488, %v3490
    %v3492 = vrot.slane %v976, %v3491
    %v3493 = vcombine.low %v3471, %v3478
    %v3494 = vcombine.high %v3471, %v3478
    %v3495 = vcombine.low %v3485, %v3492
    %v3496 = vcombine.high %v3485, %v3492
    %v3498 = vunpack.c.l.s4 1966171168
    %v3499 = vunpack.c.0.s8 %v3498
    %v3500 = vlaneseq
    %v3501 = vshrl.u32 %v3500, 7
    %v3502 = vsub.s32 %v3499, %v3501
    %v3503 = vrot.slane %v3493, %v3502
    %v3505 = vunpack.c.l.s4 1966171168
    %v3506 = vunpack.c.0.s8 %v3505
    %v3507 = vlaneseq
    %v3508 = vshrl.u32 %v3507, 7
    %v3509 = vsub.s32 %v3506, %v3508
    %v3510 = vrot.slane %v3494, %v3509
    %v3512 = vunpack.c.l.s4 1966171168
    %v3513 = vunpack.c.0.s8 %v3512
    %v3514 = vlaneseq
    %v3515 = vshrl.u32 %v3514, 7
    %v3516 = vsub.s32 %v3513, %v3515
    %v3517 = vrot.slane %v3495, %v3516
    %v3519 = vunpack.c.l.s4 1966171168
    %v3520 = vunpack.c.0.s8 %v3519
    %v3521 = vlaneseq
    %v3522 = vshrl.u32 %v3521, 7
    %v3523 = vsub.s32 %v3520, %v3522
    %v3524 = vrot.slane %v3496, %v3523
    %v3525 = vcombine.low %v3503, %v3517
    %v3526 = vcombine.low %v3510, %v3524
    %v3534 = vcombine.low %v2069, %v2070
    %v3535 = vcombine.low %v2071, %v2072
    %v3536 = vcombine.low %v2073, %v2074
    %v3538 = vunpack.c.l.s4 1966171168
    %v3539 = vunpack.c.0.s8 %v3538
    %v3540 = vlaneseq
    %v3541 = vshrl.u32 %v3540, 7
    %v3542 = vsub.s32 %v3539, %v3541
    %v3543 = vrot.slane %v3534, %v3542
    %v3545 = vunpack.c.l.s4 1966171168
    %v3546 = vunpack.c.0.s8 %v3545
    %v3547 = vlaneseq
    %v3548 = vshrl.u32 %v3547, 7
    %v3549 = vsub.s32 %v3546, %v3548
    %v3550 = vrot.slane %v3535, %v3549
    %v3552 = vunpack.c.l.s4 1966171168
    %v3553 = vunpack.c.0.s8 %v3552
    %v3554 = vlaneseq
    %v3555 = vshrl.u32 %v3554, 7
    %v3556 = vsub.s32 %v3553, %v3555
    %v3557 = vrot.slane %v3536, %v3556
    %v3559 = vunpack.c.l.s4 1966171168
    %v3560 = vunpack.c.0.s8 %v3559
    %v3561 = vlaneseq
    %v3562 = vshrl.u32 %v3561, 7
    %v3563 = vsub.s32 %v3560, %v3562
    %v3564 = vrot.slane %v2075, %v3563
    %v3565 = vcombine.low %v3543, %v3550
    %v3566 = vcombine.high %v3543, %v3550
    %v3567 = vcombine.low %v3557, %v3564
    %v3568 = vcombine.high %v3557, %v3564
    %v3570 = vunpack.c.l.s4 1966171168
    %v3571 = vunpack.c.0.s8 %v3570
    %v3572 = vlaneseq
    %v3573 = vshrl.u32 %v3572, 7
    %v3574 = vsub.s32 %v3571, %v3573
    %v3575 = vrot.slane %v3565, %v3574
    %v3577 = vunpack.c.l.s4 1966171168
    %v3578 = vunpack.c.0.s8 %v3577
    %v3579 = vlaneseq
    %v3580 = vshrl.u32 %v3579, 7
    %v3581 = vsub.s32 %v3578, %v3580
    %v3582 = vrot.slane %v3566, %v3581
    %v3584 = vunpack.c.l.s4 1966171168
    %v3585 = vunpack.c.0.s8 %v3584
    %v3586 = vlaneseq
    %v3587 = vshrl.u32 %v3586, 7
    %v3588 = vsub.s32 %v3585, %v3587
    %v3589 = vrot.slane %v3567, %v3588
    %v3591 = vunpack.c.l.s4 1966171168
    %v3592 = vunpack.c.0.s8 %v3591
    %v3593 = vlaneseq
    %v3594 = vshrl.u32 %v3593, 7
    %v3595 = vsub.s32 %v3592, %v3594
    %v3596 = vrot.slane %v3568, %v3595
    %v3597 = vcombine.low %v3575, %v3589
    %v3598 = vcombine.low %v3582, %v3596
    %v3606 = vcombine.low %v3165, %v3166
    %v3607 = vcombine.low %v3167, %v3168
    %v3608 = vcombine.low %v3169, %v3170
    %v3610 = vunpack.c.l.s4 1966171168
    %v3611 = vunpack.c.0.s8 %v3610
    %v3612 = vlaneseq
    %v3613 = vshrl.u32 %v3612, 7
    %v3614 = vsub.s32 %v3611, %v3613
    %v3615 = vrot.slane %v3606, %v3614
    %v3617 = vunpack.c.l.s4 1966171168
    %v3618 = vunpack.c.0.s8 %v3617
    %v3619 = vlaneseq
    %v3620 = vshrl.u32 %v3619, 7
    %v3621 = vsub.s32 %v3618, %v3620
    %v3622 = vrot.slane %v3607, %v3621
    %v3624 = vunpack.c.l.s4 1966171168
    %v3625 = vunpack.c.0.s8 %v3624
    %v3626 = vlaneseq
    %v3627 = vshrl.u32 %v3626, 7
    %v3628 = vsub.s32 %v3625, %v3627
    %v3629 = vrot.slane %v3608, %v3628
    %v3631 = vunpack.c.l.s4 1966171168
    %v3632 = vunpack.c.0.s8 %v3631
    %v3633 = vlaneseq
    %v3634 = vshrl.u32 %v3633, 7
    %v3635 = vsub.s32 %v3632, %v3634
    %v3636 = vrot.slane %v3171, %v3635
    %v3637 = vcombine.low %v3615, %v3622
    %v3638 = vcombine.high %v3615, %v3622
    %v3639 = vcombine.low %v3629, %v3636
    %v3640 = vcombine.high %v3629, %v3636
    %v3642 = vunpack.c.l.s4 1966171168
    %v3643 = vunpack.c.0.s8 %v3642
    %v3644 = vlaneseq
    %v3645 = vshrl.u32 %v3644, 7
    %v3646 = vsub.s32 %v3643, %v3645
    %v3647 = vrot.slane %v3637, %v3646
    %v3649 = vunpack.c.l.s4 1966171168
    %v3650 = vunpack.c.0.s8 %v3649
    %v3651 = vlaneseq
    %v3652 = vshrl.u32 %v3651, 7
    %v3653 = vsub.s32 %v3650, %v3652
    %v3654 = vrot.slane %v3638, %v3653
    %v3656 = vunpack.c.l.s4 1966171168
    %v3657 = vunpack.c.0.s8 %v3656
    %v3658 = vlaneseq
    %v3659 = vshrl.u32 %v3658, 7
    %v3660 = vsub.s32 %v3657, %v3659
    %v3661 = vrot.slane %v3639, %v3660
    %v3663 = vunpack.c.l.s4 1966171168
    %v3664 = vunpack.c.0.s8 %v3663
    %v3665 = vlaneseq
    %v3666 = vshrl.u32 %v3665, 7
    %v3667 = vsub.s32 %v3664, %v3666
    %v3668 = vrot.slane %v3640, %v3667
    %v3669 = vcombine.low %v3647, %v3661
    %v3670 = vcombine.low %v3654, %v3668
    %v3671 = vlaneseq
    %v3672 = vshrl.u32 %v3671, 7
    %v3673 = vsub.s32 0, %v3672
    %v3674 = vrot.slane %v3525, %v3673
    %v3675 = vlaneseq
    %v3676 = vshrl.u32 %v3675, 7
    %v3677 = vsub.s32 1, %v3676
    %v3678 = vrot.slane %v3525, %v3677
    %v3679 = vlaneseq
    %v3680 = vshrl.u32 %v3679, 7
    %v3681 = vsub.s32 2, %v3680
    %v3682 = vrot.slane %v3525, %v3681
    %v3683 = vlaneseq
    %v3684 = vshrl.u32 %v3683, 7
    %v3685 = vsub.s32 3, %v3684
    %v3686 = vrot.slane %v3525, %v3685
    %v3687 = vlaneseq
    %v3688 = vshrl.u32 %v3687, 7
    %v3689 = vsub.s32 4, %v3688
    %v3690 = vrot.slane %v3525, %v3689
    %v3691 = vlaneseq
    %v3692 = vshrl.u32 %v3691, 7
    %v3693 = vsub.s32 5, %v3692
    %v3694 = vrot.slane %v3525, %v3693
    %v3695 = vlaneseq
    %v3696 = vshrl.u32 %v3695, 7
    %v3697 = vsub.s32 6, %v3696
    %v3698 = vrot.slane %v3525, %v3697
    %v3699 = vlaneseq
    %v3700 = vshrl.u32 %v3699, 7
    %v3701 = vsub.s32 0, %v3700
    %v3702 = vrot.slane %v3526, %v3701
    %v3703 = vlaneseq
    %v3704 = vshrl.u32 %v3703, 7
    %v3705 = vsub.s32 1, %v3704
    %v3706 = vrot.slane %v3526, %v3705
    %v3707 = vlaneseq
    %v3708 = vshrl.u32 %v3707, 7
    %v3709 = vsub.s32 2, %v3708
    %v3710 = vrot.slane %v3526, %v3709
    %v3711 = vlaneseq
    %v3712 = vshrl.u32 %v3711, 7
    %v3713 = vsub.s32 3, %v3712
    %v3714 = vrot.slane %v3526, %v3713
    %v3715 = vlaneseq
    %v3716 = vshrl.u32 %v3715, 7
    %v3717 = vsub.s32 4, %v3716
    %v3718 = vrot.slane %v3526, %v3717
    %v3719 = vlaneseq
    %v3720 = vshrl.u32 %v3719, 7
    %v3721 = vsub.s32 5, %v3720
    %v3722 = vrot.slane %v3526, %v3721
    %v3723 = vlaneseq
    %v3724 = vshrl.u32 %v3723, 7
    %v3725 = vsub.s32 6, %v3724
    %v3726 = vrot.slane %v3526, %v3725
    %v3741 = vlaneseq
    %v3742 = vshrl.u32 %v3741, 7
    %v3743 = vsub.s32 0, %v3742
    %v3744 = vrot.slane %v3597, %v3743
    %v3745 = vlaneseq
    %v3746 = vshrl.u32 %v3745, 7
    %v3747 = vsub.s32 1, %v3746
    %v3748 = vrot.slane %v3597, %v3747
    %v3749 = vlaneseq
    %v3750 = vshrl.u32 %v3749, 7
    %v3751 = vsub.s32 2, %v3750
    %v3752 = vrot.slane %v3597, %v3751
    %v3753 = vlaneseq
    %v3754 = vshrl.u32 %v3753, 7
    %v3755 = vsub.s32 3, %v3754
    %v3756 = vrot.slane %v3597, %v3755
    %v3757 = vlaneseq
    %v3758 = vshrl.u32 %v3757, 7
    %v3759 = vsub.s32 4, %v3758
    %v3760 = vrot.slane %v3597, %v3759
    %v3761 = vlaneseq
    %v3762 = vshrl.u32 %v3761, 7
    %v3763 = vsub.s32 5, %v3762
    %v3764 = vrot.slane %v3597, %v3763
    %v3765 = vlaneseq
    %v3766 = vshrl.u32 %v3765, 7
    %v3767 = vsub.s32 6, %v3766
    %v3768 = vrot.slane %v3597, %v3767
    %v3769 = vlaneseq
    %v3770 = vshrl.u32 %v3769, 7
    %v3771 = vsub.s32 0, %v3770
    %v3772 = vrot.slane %v3598, %v3771
    %v3773 = vlaneseq
    %v3774 = vshrl.u32 %v3773, 7
    %v3775 = vsub.s32 1, %v3774
    %v3776 = vrot.slane %v3598, %v3775
    %v3777 = vlaneseq
    %v3778 = vshrl.u32 %v3777, 7
    %v3779 = vsub.s32 2, %v3778
    %v3780 = vrot.slane %v3598, %v3779
    %v3781 = vlaneseq
    %v3782 = vshrl.u32 %v3781, 7
    %v3783 = vsub.s32 3, %v3782
    %v3784 = vrot.slane %v3598, %v3783
    %v3785 = vlaneseq
    %v3786 = vshrl.u32 %v3785, 7
    %v3787 = vsub.s32 4, %v3786
    %v3788 = vrot.slane %v3598, %v3787
    %v3789 = vlaneseq
    %v3790 = vshrl.u32 %v3789, 7
    %v3791 = vsub.s32 5, %v3790
    %v3792 = vrot.slane %v3598, %v3791
    %v3793 = vlaneseq
    %v3794 = vshrl.u32 %v3793, 7
    %v3795 = vsub.s32 6, %v3794
    %v3796 = vrot.slane %v3598, %v3795
    %v3811 = vlaneseq
    %v3812 = vshrl.u32 %v3811, 7
    %v3813 = vsub.s32 0, %v3812
    %v3814 = vrot.slane %v3669, %v3813
    %v3815 = vlaneseq
    %v3816 = vshrl.u32 %v3815, 7
    %v3817 = vsub.s32 1, %v3816
    %v3818 = vrot.slane %v3669, %v3817
    %v3819 = vlaneseq
    %v3820 = vshrl.u32 %v3819, 7
    %v3821 = vsub.s32 2, %v3820
    %v3822 = vrot.slane %v3669, %v3821
    %v3823 = vlaneseq
    %v3824 = vshrl.u32 %v3823, 7
    %v3825 = vsub.s32 3, %v3824
    %v3826 = vrot.slane %v3669, %v3825
    %v3827 = vlaneseq
    %v3828 = vshrl.u32 %v3827, 7
    %v3829 = vsub.s32 4, %v3828
    %v3830 = vrot.slane %v3669, %v3829
    %v3831 = vlaneseq
    %v3832 = vshrl.u32 %v3831, 7
    %v3833 = vsub.s32 5, %v3832
    %v3834 = vrot.slane %v3669, %v3833
    %v3835 = vlaneseq
    %v3836 = vshrl.u32 %v3835, 7
    %v3837 = vsub.s32 6, %v3836
    %v3838 = vrot.slane %v3669, %v3837
    %v3839 = vlaneseq
    %v3840 = vshrl.u32 %v3839, 7
    %v3841 = vsub.s32 0, %v3840
    %v3842 = vrot.slane %v3670, %v3841
    %v3843 = vlaneseq
    %v3844 = vshrl.u32 %v3843, 7
    %v3845 = vsub.s32 1, %v3844
    %v3846 = vrot.slane %v3670, %v3845
    %v3847 = vlaneseq
    %v3848 = vshrl.u32 %v3847, 7
    %v3849 = vsub.s32 2, %v3848
    %v3850 = vrot.slane %v3670, %v3849
    %v3851 = vlaneseq
    %v3852 = vshrl.u32 %v3851, 7
    %v3853 = vsub.s32 3, %v3852
    %v3854 = vrot.slane %v3670, %v3853
    %v3855 = vlaneseq
    %v3856 = vshrl.u32 %v3855, 7
    %v3857 = vsub.s32 4, %v3856
    %v3858 = vrot.slane %v3670, %v3857
    %v3859 = vlaneseq
    %v3860 = vshrl.u32 %v3859, 7
    %v3861 = vsub.s32 5, %v3860
    %v3862 = vrot.slane %v3670, %v3861
    %v3863 = vlaneseq
    %v3864 = vshrl.u32 %v3863, 7
    %v3865 = vsub.s32 6, %v3864
    %v3866 = vrot.slane %v3670, %v3865
    %vm3881 = vcmask 1040384
    %v3882 = vsel %vm3881, %v3674, %v3744
    %v3883 = vsel %vm3881, %v3678, %v3748
    %v3884 = vsel %vm3881, %v3682, %v3752
    %v3885 = vsel %vm3881, %v3686, %v3756
    %v3886 = vsel %vm3881, %v3690, %v3760
    %v3887 = vsel %vm3881, %v3694, %v3764
    %v3888 = vsel %vm3881, %v3698, %v3768
    %v3889 = vsel %vm3881, %v3702, %v3772
    %v3890 = vsel %vm3881, %v3706, %v3776
    %v3891 = vsel %vm3881, %v3710, %v3780
    %v3892 = vsel %vm3881, %v3714, %v3784
    %v3893 = vsel %vm3881, %v3718, %v3788
    %v3894 = vsel %vm3881, %v3722, %v3792
    %v3895 = vsel %vm3881, %v3726, %v3796
    %v3896 = vsel %vm228, %v3882, %v3814
    %v3897 = vsel %vm228, %v3883, %v3818
    %v3898 = vsel %vm228, %v3884, %v3822
    %v3899 = vsel %vm228, %v3885, %v3826
    %v3900 = vsel %vm228, %v3886, %v3830
    %v3901 = vsel %vm228, %v3887, %v3834
    %v3902 = vsel %vm228, %v3888, %v3838
    %v3903 = vsel %vm228, %v3889, %v3842
    %v3904 = vsel %vm228, %v3890, %v3846
    %v3905 = vsel %vm228, %v3891, %v3850
    %v3906 = vsel %vm228, %v3892, %v3854
    %v3907 = vsel %vm228, %v3893, %v3858
    %v3908 = vsel %vm228, %v3894, %v3862
    %v3909 = vsel %vm228, %v3895, %v3866
    %v3922 = vcombine.low %v3896, %v3897
    %v3923 = vcombine.low %v3898, %v3899
    %v3924 = vcombine.low %v3900, %v3901
    %v3925 = vcombine.low %v3903, %v3904
    %v3926 = vcombine.low %v3905, %v3906
    %v3927 = vcombine.low %v3907, %v3908
    %3934 = vst [vmem:[%s6] sm:$0x77] %v3922
    %3935 = vst [vmem:[%s6 + $0x8] sm:$0x77] %v3923
    %3936 = vst [vmem:[%s6 + $0x10] sm:$0x77] %v3924
    %vm3937 = vcmask 75776
    %3938 = vst.msk [vmem:[%s6 + $0x18] sm:$0x7] %vm3937, %v3902
    %3939 = vst [vmem:[%s6 + $0x1c] sm:$0x77] %v3925
    %3940 = vst [vmem:[%s6 + $0x24] sm:$0x77] %v3926
    %3941 = vst [vmem:[%s6 + $0x2c] sm:$0x77] %v3927
    %3942 = vst.msk [vmem:[%s6 + $0x34] sm:$0x7] %vm3937, %v3909
    %v3945 = vunpack.c.l.s4 1966171168
    %v3946 = vunpack.c.0.s8 %v3945
    %v3947 = vlaneseq
    %v3948 = vshrl.u32 %v3947, 7
    %v3949 = vsub.s32 %v3946, %v3948
    %v3950 = vrot.slane %v1260, %v3949
    %v3951 = vcombine.high %v3950, %v3950
    %v3953 = vunpack.c.l.s4 1966171168
    %v3954 = vunpack.c.0.s8 %v3953
    %v3955 = vlaneseq
    %v3956 = vshrl.u32 %v3955, 7
    %v3957 = vsub.s32 %v3954, %v3956
    %v3958 = vrot.slane %v3950, %v3957
    %v3960 = vunpack.c.l.s4 1966171168
    %v3961 = vunpack.c.0.s8 %v3960
    %v3962 = vlaneseq
    %v3963 = vshrl.u32 %v3962, 7
    %v3964 = vsub.s32 %v3961, %v3963
    %v3965 = vrot.slane %v3951, %v3964
    %v3970 = vunpack.c.l.s4 1966171168
    %v3971 = vunpack.c.0.s8 %v3970
    %v3972 = vlaneseq
    %v3973 = vshrl.u32 %v3972, 7
    %v3974 = vsub.s32 %v3971, %v3973
    %v3975 = vrot.slane %v2356, %v3974
    %v3976 = vcombine.high %v3975, %v3975
    %v3978 = vunpack.c.l.s4 1966171168
    %v3979 = vunpack.c.0.s8 %v3978
    %v3980 = vlaneseq
    %v3981 = vshrl.u32 %v3980, 7
    %v3982 = vsub.s32 %v3979, %v3981
    %v3983 = vrot.slane %v3975, %v3982
    %v3985 = vunpack.c.l.s4 1966171168
    %v3986 = vunpack.c.0.s8 %v3985
    %v3987 = vlaneseq
    %v3988 = vshrl.u32 %v3987, 7
    %v3989 = vsub.s32 %v3986, %v3988
    %v3990 = vrot.slane %v3976, %v3989
    %v3993 = vunpack.c.l.s4 1966171168
    %v3994 = vunpack.c.0.s8 %v3993
    %v3995 = vlaneseq
    %v3996 = vshrl.u32 %v3995, 7
    %v3997 = vsub.s32 %v3994, %v3996
    %v3998 = vrot.slane %v3452, %v3997
    %v3999 = vcombine.high %v3998, %v3998
    %v4001 = vunpack.c.l.s4 1966171168
    %v4002 = vunpack.c.0.s8 %v4001
    %v4003 = vlaneseq
    %v4004 = vshrl.u32 %v4003, 7
    %v4005 = vsub.s32 %v4002, %v4004
    %v4006 = vrot.slane %v3998, %v4005
    %v4008 = vunpack.c.l.s4 1966171168
    %v4009 = vunpack.c.0.s8 %v4008
    %v4010 = vlaneseq
    %v4011 = vshrl.u32 %v4010, 7
    %v4012 = vsub.s32 %v4009, %v4011
    %v4013 = vrot.slane %v3999, %v4012
    %v4014 = vlaneseq
    %v4015 = vshrl.u32 %v4014, 7
    %v4016 = vsub.s32 0, %v4015
    %v4017 = vrot.slane %v3983, %v4016
    %v4018 = vlaneseq
    %v4019 = vshrl.u32 %v4018, 7
    %v4020 = vsub.s32 0, %v4019
    %v4021 = vrot.slane %v3990, %v4020
    %v4024 = vlaneseq
    %v4025 = vshrl.u32 %v4024, 7
    %v4026 = vsub.s32 0, %v4025
    %v4027 = vrot.slane %v4006, %v4026
    %v4028 = vlaneseq
    %v4029 = vshrl.u32 %v4028, 7
    %v4030 = vsub.s32 0, %v4029
    %v4031 = vrot.slane %v4013, %v4030
    %v4034 = vsel %vm3881, %v3958, %v4017
    %v4035 = vsel %vm3881, %v3965, %v4021
    %v4036 = vsel %vm228, %v4034, %v4027
    %v4037 = vsel %vm228, %v4035, %v4031
    %vm4038 = vcmask 124928
    %4039 = vst.msk [vmem:[%s7] sm:$0x7] %vm4038, %v4036
    %4040 = vst.msk [vmem:[%s7 + $0x4] sm:$0x7] %vm4038, %v4037
    // Predicated region
    $region30: #{_lambda_.2} parent=1 // pred_check
      _
    $region31: #{_lambda_.2} parent=1 // pred_check_branch
      %4042 = sbr.rel (0) target = $region33
    $region32: #{_lambda_.2} parent=1 // pred_region
      _
    $region33: #{_lambda_.2} parent=1 // pred_fallthru
      _
    // Predicated region
    $region34: #{_lambda_.2} parent=1 // pred_check
      _
    $region35: #{_lambda_.2} parent=1 // pred_check_branch
      %4044 = sbr.rel (0) target = $region37
    $region36: #{_lambda_.2} parent=1 // pred_region
      _
    $region37: #{_lambda_.2} parent=1 // pred_fallthru
      _
    // Predicated region
    $region38: #{_lambda_.2} parent=1 // pred_check
      _
    $region39: #{_lambda_.2} parent=1 // pred_check_branch
      %4046 = sbr.rel (0) target = $region41
    $region40: #{_lambda_.2} parent=1 // pred_region
      _
    $region41: #{_lambda_.2} parent=1 // pred_fallthru
      _
    // Predicated region
    $region42: #{_lambda_.2} parent=1 // pred_check
      _
    $region43: #{_lambda_.2} parent=1 // pred_check_branch
      %4048 = sbr.rel (0) target = $region45
    $region44: #{_lambda_.2} parent=1 // pred_region
      _
    $region45: #{_lambda_.2} parent=1 // pred_fallthru
      _
    %4049 = vsyncpa [#allocation3], 1

</llo_original>
